<compile_context>
chip_gen: v6e
topology: v6e:2x2x1
jax: 0.10.0
libtpu: 0.0.40
codegen_flags: <defaults>
</compile_context>

<pallas_src>
import functools

import jax
import jax.numpy as jnp
from jax import lax
from jax.experimental import pallas as pl
from jax.experimental.pallas import tpu as pltpu


def _round_up(x, m):
    return (x + m - 1) // m * m


def _pad_last(a, target):
    pad = target - a.shape[-1]
    if pad == 0:
        return a
    widths = [(0, 0)] * a.ndim
    widths[-1] = (0, pad)
    return jnp.pad(a, widths)


def _pad_last2(a, t0, t1):
    p0, p1 = t0 - a.shape[-2], t1 - a.shape[-1]
    if p0 == 0 and p1 == 0:
        return a
    widths = [(0, 0)] * a.ndim
    widths[-2] = (0, p0)
    widths[-1] = (0, p1)
    return jnp.pad(a, widths)


def _vmem_limit_bytes():
    """Generation-aware scoped VMEM limit."""
    try:
        kind = jax.devices()[0].device_kind.lower()
    except Exception:  # pragma: no cover - defensive
        kind = ""
    if "v7" in kind or "7x" in kind:
        return 48 * 1024 * 1024   # v7x: 64 MiB physical per TC -> leave headroom
    if "v5" in kind or "v6" in kind:
        return 96 * 1024 * 1024   # v5e/v6e: 128 MiB physical
    return 32 * 1024 * 1024       # conservative default


def _choose_rows_per_tile(h, w, cin_p, cmid_p, cout_p, vmem_limit, requested):
    """Largest divisor of H whose per-step working set fits the VMEM budget."""
    if requested is not None:
        assert h % requested == 0, "rows_per_tile must divide H"
        return requested
    weight_bytes = 2 * 2 * (cin_p * cmid_p + 9 * cmid_p * cmid_p
                            + cmid_p * cout_p + cin_p * cout_p)
    budget = int(vmem_limit * 0.6) - weight_bytes
    best = None
    for rt in range(1, h + 1):
        if h % rt:
            continue
        pr, qr = (rt + 2) * w, rt * w
        need = (2 * pr * cin_p * 2       # x tile (double-buffered, bf16)
                + 2 * qr * cout_p * 2    # out tile (double-buffered, bf16)
                + 3 * pr * cmid_p * 2    # h1 padded scratch (3 dx variants, bf16)
                + 2 * qr * cmid_p * 4    # conv2 acc / h2 working set (f32)
                + qr * cout_p * 4)       # conv3 / residual working set (f32)
        if need <= budget and qr <= 4096:
            best = rt
    return best if best is not None else 1


def bottleneck_kernel(x_ref, w1_ref, w2_ref, w3_ref, wd_ref,
                      s1_ref, b1_ref, s2_ref, b2_ref, s3_ref, b3_ref,
                      sd_ref, bd_ref, out_ref, h1pad_ref, *, w, rt):
    j = pl.program_id(1)                 # row-tile index within the image
    qr = rt * w                          # output rows in this tile (flattened)
    pr = (rt + 2) * w                    # rows incl. 1-row halo on each side
    bf16 = jnp.bfloat16
    cmid_p = h1pad_ref.shape[-1]

    # --- residual / downsample 1x1 + BN, written straight into out_ref so no
    #     extra f32 (qr, cout) buffer stays live across conv2/conv3. ---
    res = jnp.dot(x_ref[w:w + qr, :], wd_ref[...],
                  preferred_element_type=jnp.float32)
    out_ref[...] = (res * sd_ref[...] + bd_ref[...]).astype(out_ref.dtype)

    # --- conv1 (1x1, no bias) + bn1 + relu over the tile incl. halo rows.
    #     After this dot the x tile is dead. ---
    h1 = jnp.dot(x_ref[...], w1_ref[...], preferred_element_type=jnp.float32)
    h1 = jnp.maximum(h1 * s1_ref[...] + b1_ref[...], 0.0)

    # --- build the three column-shifted conv2 operands once: 2 f32 rolls
    #     (XLU) + 2 single-column masks total, then one bf16 cast each. ---
    cols = lax.broadcasted_iota(jnp.int32, (pr, 1), 0) % w
    not_first_col = cols != 0
    not_last_col = cols != (w - 1)
    h1pad_ref[1] = h1.astype(bf16)                                      # dx = 0
    h1pad_ref[0] = jnp.where(not_first_col,
                             pltpu.roll(h1, shift=1, axis=0),
                             0.0).astype(bf16)                          # dx = -1
    h1pad_ref[2] = jnp.where(not_last_col,
                             pltpu.roll(h1, shift=pr - 1, axis=0),
                             0.0).astype(bf16)                          # dx = +1

    # Zero the halo rows that fall outside the image (conv2's zero padding).
    @pl.when(j == 0)
    def _():
        for v in range(3):
            h1pad_ref[v, 0:w, :] = jnp.zeros((w, cmid_p), bf16)

    @pl.when(j == pl.num_programs(1) - 1)
    def _():
        for v in range(3):
            h1pad_ref[v, (rt + 1) * w:pr, :] = jnp.zeros((w, cmid_p), bf16)

    # --- conv2 (3x3, stride 1, pad 1): 9 matmuls over statically aligned row
    #     slices of the padded scratch; pure acc += dot chain. ---
    acc = None
    for ky in range(3):                  # dy = ky - 1
        row0 = ky * w
        for kx in range(3):              # dx = kx - 1
            tap = h1pad_ref[kx, row0:row0 + qr, :]
            d = jnp.dot(tap, w2_ref[ky, kx], preferred_element_type=jnp.float32)
            acc = d if acc is None else acc + d

    h2 = jnp.maximum(acc * s2_ref[...] + b2_ref[...], 0.0).astype(bf16)

    # --- conv3 (1x1) + bn3, residual add (read back from out_ref), relu ---
    h3 = jnp.dot(h2, w3_ref[...], preferred_element_type=jnp.float32)
    h3 = h3 * s3_ref[...] + b3_ref[...]
    out_ref[...] = jnp.maximum(h3 + out_ref[...].astype(jnp.float32),
                               0.0).astype(out_ref.dtype)


def bottleneck_forward(x_nchw, params, rows_per_tile=None):
    n, cin, h, w = x_nchw.shape
    cmid = params["w1"].shape[1]
    cout = params["w3"].shape[1]
    hw = h * w
    assert w % 8 == 0, "W must be a multiple of 8 (sublane tiling); %16 ideal for bf16"
    lane = 128
    cin_p = _round_up(cin, lane)
    cmid_p = _round_up(cmid, lane)
    cout_p = _round_up(cout, lane)

    vmem_limit = _vmem_limit_bytes()
    rt = _choose_rows_per_tile(h, w, cin_p, cmid_p, cout_p, vmem_limit,
                               rows_per_tile)
    n_rt = h // rt
    pr = (rt + 2) * w
    qr = rt * w

    # NCHW -> flattened NHWC rows, channel-padded to 128 lanes, bf16 for MXU.
    x_flat = jnp.transpose(x_nchw, (0, 2, 3, 1)).reshape(n, hw, cin)
    x_flat = _pad_last(x_flat, cin_p).astype(jnp.bfloat16)
    # 1-image-row zero halo top+bottom, then materialize per-tile blocks with
    # their halos so each grid step's input is a plain non-overlapping fetch.
    x_halo = jnp.pad(x_flat, ((0, 0), (w, w), (0, 0)))
    x_tiles = jnp.stack(
        [x_halo[:, j * qr:j * qr + pr, :] for j in range(n_rt)], axis=1)
    # -> (n, n_rt, (rt+2)*w, cin_p)

    w1 = _pad_last2(params["w1"], cin_p, cmid_p)
    w2 = _pad_last2(params["w2"], cmid_p, cmid_p)
    w3 = _pad_last2(params["w3"], cmid_p, cout_p)
    wd = _pad_last2(params["wd"], cin_p, cout_p)
    s1, b1 = _pad_last(params["s1"], cmid_p), _pad_last(params["b1"], cmid_p)
    s2, b2 = _pad_last(params["s2"], cmid_p), _pad_last(params["b2"], cmid_p)
    s3, b3 = _pad_last(params["s3"], cout_p), _pad_last(params["b3"], cout_p)
    sd, bd = _pad_last(params["sd"], cout_p), _pad_last(params["bd"], cout_p)

    flops = 2 * n * (n_rt * pr * cin_p * cmid_p
                     + hw * (9 * cmid_p * cmid_p + cmid_p * cout_p
                             + cin_p * cout_p))
    bytes_accessed = (x_tiles.size * 2
                      + (w1.size + w2.size + w3.size + wd.size) * 2
                      + (s1.size + b1.size + s2.size + b2.size
                         + s3.size + b3.size + sd.size + bd.size) * 4
                      + n * hw * cout_p * 2)

    out_flat = pl.pallas_call(
        functools.partial(bottleneck_kernel, w=w, rt=rt),
        out_shape=jax.ShapeDtypeStruct((n, hw, cout_p), jnp.bfloat16),
        grid=(n, n_rt),
        in_specs=[
            pl.BlockSpec((None, None, pr, cin_p), lambda i, j: (i, j, 0, 0)),   # x
            pl.BlockSpec((cin_p, cmid_p), lambda i, j: (0, 0)),                 # w1
            pl.BlockSpec((3, 3, cmid_p, cmid_p), lambda i, j: (0, 0, 0, 0)),    # w2
            pl.BlockSpec((cmid_p, cout_p), lambda i, j: (0, 0)),                # w3
            pl.BlockSpec((cin_p, cout_p), lambda i, j: (0, 0)),                 # wd
            pl.BlockSpec((1, cmid_p), lambda i, j: (0, 0)),                     # s1
            pl.BlockSpec((1, cmid_p), lambda i, j: (0, 0)),                     # b1
            pl.BlockSpec((1, cmid_p), lambda i, j: (0, 0)),                     # s2
            pl.BlockSpec((1, cmid_p), lambda i, j: (0, 0)),                     # b2
            pl.BlockSpec((1, cout_p), lambda i, j: (0, 0)),                     # s3
            pl.BlockSpec((1, cout_p), lambda i, j: (0, 0)),                     # b3
            pl.BlockSpec((1, cout_p), lambda i, j: (0, 0)),                     # sd
            pl.BlockSpec((1, cout_p), lambda i, j: (0, 0)),                     # bd
        ],
        out_specs=pl.BlockSpec((None, qr, cout_p), lambda i, j: (i, j, 0)),
        scratch_shapes=[pltpu.VMEM((3, pr, cmid_p), jnp.bfloat16)],
        compiler_params=pltpu.CompilerParams(
            dimension_semantics=("parallel", "parallel"),
            vmem_limit_bytes=vmem_limit),
        cost_estimate=pl.CostEstimate(flops=flops, transcendentals=0,
                                      bytes_accessed=bytes_accessed),
    )(x_tiles, w1, w2, w3, wd, s1, b1, s2, b2, s3, b3, sd, bd)

    out = out_flat[:, :, :cout].reshape(n, h, w, cout)
    return jnp.transpose(out, (0, 3, 1, 2))


def init_params(key, in_channel, out_channel):
    expansion = 4
    cout = out_channel * expansion
    keys = jax.random.split(key, 8)

    def bn_fold(k, c):
        k1, k2, k3, k4 = jax.random.split(k, 4)
        gamma = 0.5 + jax.random.uniform(k1, (c,), jnp.float32)
        beta = 0.1 * jax.random.normal(k2, (c,), jnp.float32)
        mean = 0.1 * jax.random.normal(k3, (c,), jnp.float32)
        var = 0.5 + jax.random.uniform(k4, (c,), jnp.float32)
        scale = gamma * lax.rsqrt(var + 1e-5)
        shift = beta - mean * scale
        return scale.reshape(1, c), shift.reshape(1, c)

    # PyTorch (O, I, kh, kw) layout, converted to matmul layouts for the kernel.
    w1_t = 0.1 * jax.random.normal(keys[0], (out_channel, in_channel, 1, 1), jnp.float32)
    w2_t = 0.1 * jax.random.normal(keys[1], (out_channel, in_channel, 3, 3), jnp.float32)
    w3_t = 0.1 * jax.random.normal(keys[2], (cout, out_channel, 1, 1), jnp.float32)
    wd_t = 0.1 * jax.random.normal(keys[3], (cout, in_channel, 1, 1), jnp.float32)

    s1, b1 = bn_fold(keys[4], out_channel)
    s2, b2 = bn_fold(keys[5], out_channel)
    s3, b3 = bn_fold(keys[6], cout)
    sd, bd = bn_fold(keys[7], cout)

    bf = jnp.bfloat16
    return dict(
        w1=jnp.transpose(w1_t[:, :, 0, 0], (1, 0)).astype(bf),   # (Cin, Cmid)
        w2=jnp.transpose(w2_t, (2, 3, 1, 0)).astype(bf),         # (3,3,Cin,Cmid) HWIO
        w3=jnp.transpose(w3_t[:, :, 0, 0], (1, 0)).astype(bf),   # (Cmid, Cout)
        wd=jnp.transpose(wd_t[:, :, 0, 0], (1, 0)).astype(bf),   # (Cin, Cout)
        s1=s1, b1=b1, s2=s2, b2=b2, s3=s3, b3=b3, sd=sd, bd=bd,
    )


def reference_forward(x_nchw, params):
    """Pure-JAX reference (XLA conv/einsum) with the same bf16 MXU inputs."""
    f32 = jnp.float32
    x = jnp.transpose(x_nchw, (0, 2, 3, 1)).astype(jnp.bfloat16)  # NHWC

    def bn(y, s, b):
        return y * s.reshape(1, 1, 1, -1) + b.reshape(1, 1, 1, -1)

    h1 = jnp.einsum("nhwc,co->nhwo", x, params["w1"], preferred_element_type=f32)
    h1 = jax.nn.relu(bn(h1, params["s1"], params["b1"])).astype(jnp.bfloat16)
    h2 = lax.conv_general_dilated(
        h1, params["w2"], window_strides=(1, 1), padding=((1, 1), (1, 1)),
        dimension_numbers=("NHWC", "HWIO", "NHWC"), preferred_element_type=f32)
    h2 = jax.nn.relu(bn(h2, params["s2"], params["b2"])).astype(jnp.bfloat16)
    h3 = bn(jnp.einsum("nhwc,co->nhwo", h2, params["w3"], preferred_element_type=f32),
            params["s3"], params["b3"])
    res = bn(jnp.einsum("nhwc,co->nhwo", x, params["wd"], preferred_element_type=f32),
             params["sd"], params["bd"])
    out = jax.nn.relu(h3 + res)
    return jnp.transpose(out, (0, 3, 1, 2))


if __name__ == "__main__":
    in_channel = out_channel = 4          # conv2 forces in_channel == out_channel
    n, hh, ww = 2, 16, 16
    key = jax.random.PRNGKey(0)
    kx, kp = jax.random.split(key)
    x = jax.random.normal(kx, (n, in_channel, hh, ww), jnp.float32)  # NCHW like PyTorch
    params = init_params(kp, in_channel, out_channel)

    ref = reference_forward(x, params)

    # Tiled run (2 row-tiles per image -> exercises the halo / boundary path).
    out_tiled = jax.block_until_ready(bottleneck_forward(x, params, rows_per_tile=8))
    # Auto-sized run (whole image per grid step at this small size).
    out_auto = jax.block_until_ready(bottleneck_forward(x, params))

    assert out_tiled.shape == (n, out_channel * 4, hh, ww), out_tiled.shape
    for out in (out_tiled, out_auto):
        err = float(jnp.max(jnp.abs(out.astype(jnp.float32) - ref)))
        assert jnp.allclose(out.astype(jnp.float32), ref, atol=2e-2, rtol=2e-2), \
            f"max abs err {err}"
    print("KERNEL_OK")
</pallas_src>

<mosaic_0001>
module attributes {stable_mosaic.version = 11 : i64} {
  func.func @bottleneck_kernel(%arg0: i32, %arg1: i32, %arg2: memref<1x1x160x128xbf16, #tpu.memory_space<vmem>>, %arg3: memref<128x128xbf16, #tpu.memory_space<vmem>>, %arg4: memref<3x3x128x128xbf16, #tpu.memory_space<vmem>>, %arg5: memref<128x128xbf16, #tpu.memory_space<vmem>>, %arg6: memref<128x128xbf16, #tpu.memory_space<vmem>>, %arg7: memref<1x128xf32, #tpu.memory_space<vmem>>, %arg8: memref<1x128xf32, #tpu.memory_space<vmem>>, %arg9: memref<1x128xf32, #tpu.memory_space<vmem>>, %arg10: memref<1x128xf32, #tpu.memory_space<vmem>>, %arg11: memref<1x128xf32, #tpu.memory_space<vmem>>, %arg12: memref<1x128xf32, #tpu.memory_space<vmem>>, %arg13: memref<1x128xf32, #tpu.memory_space<vmem>>, %arg14: memref<1x128xf32, #tpu.memory_space<vmem>>, %arg15: memref<1x128x128xbf16, #tpu.memory_space<vmem>>, %arg16: memref<3x160x128xbf16, #tpu.memory_space<vmem>>) attributes {dimension_semantics = [#tpu.dimension_semantics<parallel>, #tpu.dimension_semantics<parallel>], iteration_bounds = array<i64: 2, 2>, scalar_prefetch = 0 : i64, scratch_operands = 1 : i64, tpu.core_type = #tpu.core_type<tc>, window_params = [{transform_indices = @transform_0, window_bounds = array<i64: 1, 1, 160, 128>}, {pipeline_mode = #tpu.pipeline_mode<synchronous>, transform_indices = @transform_1, window_bounds = array<i64: 128, 128>}, {pipeline_mode = #tpu.pipeline_mode<synchronous>, transform_indices = @transform_2, window_bounds = array<i64: 3, 3, 128, 128>}, {pipeline_mode = #tpu.pipeline_mode<synchronous>, transform_indices = @transform_3, window_bounds = array<i64: 128, 128>}, {pipeline_mode = #tpu.pipeline_mode<synchronous>, transform_indices = @transform_4, window_bounds = array<i64: 128, 128>}, {pipeline_mode = #tpu.pipeline_mode<synchronous>, transform_indices = @transform_5, window_bounds = array<i64: 1, 128>}, {pipeline_mode = #tpu.pipeline_mode<synchronous>, transform_indices = @transform_6, window_bounds = array<i64: 1, 128>}, {pipeline_mode = #tpu.pipeline_mode<synchronous>, transform_indices = @transform_7, window_bounds = array<i64: 1, 128>}, {pipeline_mode = #tpu.pipeline_mode<synchronous>, transform_indices = @transform_8, window_bounds = array<i64: 1, 128>}, {pipeline_mode = #tpu.pipeline_mode<synchronous>, transform_indices = @transform_9, window_bounds = array<i64: 1, 128>}, {pipeline_mode = #tpu.pipeline_mode<synchronous>, transform_indices = @transform_10, window_bounds = array<i64: 1, 128>}, {pipeline_mode = #tpu.pipeline_mode<synchronous>, transform_indices = @transform_11, window_bounds = array<i64: 1, 128>}, {pipeline_mode = #tpu.pipeline_mode<synchronous>, transform_indices = @transform_12, window_bounds = array<i64: 1, 128>}, {transform_indices = @transform_13, window_bounds = array<i64: 1, 128, 128>}]} {
    %c0 = arith.constant 0 : index
    %c0_0 = arith.constant 0 : index
    %c16 = arith.constant 16 : index
    %c0_1 = arith.constant 0 : index
    %0 = vector.load %arg2[%c0, %c0_0, %c16, %c0_1] : memref<1x1x160x128xbf16, #tpu.memory_space<vmem>>, vector<1x1x128x128xbf16>
    %1 = vector.shape_cast %0 : vector<1x1x128x128xbf16> to vector<128x128xbf16>
    %c0_2 = arith.constant 0 : index
    %c0_3 = arith.constant 0 : index
    %2 = vector.load %arg6[%c0_2, %c0_3] : memref<128x128xbf16, #tpu.memory_space<vmem>>, vector<128x128xbf16>
    %cst = arith.constant dense<0.000000e+00> : vector<128x128xf32>
    %3 = tpu.matmul %1, %2, %cst {dimension_numbers = #tpu.dot_dimension_numbers<[1], [0], [0], [1], [0, 0, 1, 1], [], []>} : vector<128x128xbf16>, vector<128x128xbf16>, vector<128x128xf32> -> vector<128x128xf32>
    %c0_4 = arith.constant 0 : index
    %c0_5 = arith.constant 0 : index
    %4 = vector.load %arg13[%c0_4, %c0_5] : memref<1x128xf32, #tpu.memory_space<vmem>>, vector<1x128xf32>
    %5 = vector.broadcast %4 : vector<1x128xf32> to vector<128x128xf32>
    %6 = arith.mulf %3, %5 : vector<128x128xf32>
    %c0_6 = arith.constant 0 : index
    %c0_7 = arith.constant 0 : index
    %7 = vector.load %arg14[%c0_6, %c0_7] : memref<1x128xf32, #tpu.memory_space<vmem>>, vector<1x128xf32>
    %8 = vector.broadcast %7 : vector<1x128xf32> to vector<128x128xf32>
    %9 = arith.addf %6, %8 : vector<128x128xf32>
    %10 = arith.truncf %9 : vector<128x128xf32> to vector<128x128xbf16>
    %c0_8 = arith.constant 0 : index
    %c0_9 = arith.constant 0 : index
    %c0_10 = arith.constant 0 : index
    %11 = vector.load %arg15[%c0_8, %c0_9, %c0_10] : memref<1x128x128xbf16, #tpu.memory_space<vmem>>, vector<1x128x128xbf16>
    %12 = vector.shape_cast %11 : vector<1x128x128xbf16> to vector<128x128xbf16>
    %13 = vector.shape_cast %10 : vector<128x128xbf16> to vector<1x128x128xbf16>
    tpu.vector_store %arg15[%c0_8, %c0_9, %c0_10], %13 {strides = array<i32>} : memref<1x128x128xbf16, #tpu.memory_space<vmem>>, vector<1x128x128xbf16>,
    %c0_11 = arith.constant 0 : index
    %c0_12 = arith.constant 0 : index
    %c0_13 = arith.constant 0 : index
    %c0_14 = arith.constant 0 : index
    %14 = vector.load %arg2[%c0_11, %c0_12, %c0_13, %c0_14] : memref<1x1x160x128xbf16, #tpu.memory_space<vmem>>, vector<1x1x160x128xbf16>
    %15 = vector.shape_cast %14 : vector<1x1x160x128xbf16> to vector<160x128xbf16>
    %c0_15 = arith.constant 0 : index
    %c0_16 = arith.constant 0 : index
    %16 = vector.load %arg3[%c0_15, %c0_16] : memref<128x128xbf16, #tpu.memory_space<vmem>>, vector<128x128xbf16>
    %cst_17 = arith.constant dense<0.000000e+00> : vector<160x128xf32>
    %17 = tpu.matmul %15, %16, %cst_17 {dimension_numbers = #tpu.dot_dimension_numbers<[1], [0], [0], [1], [0, 0, 1, 1], [], []>} : vector<160x128xbf16>, vector<128x128xbf16>, vector<160x128xf32> -> vector<160x128xf32>
    %c0_18 = arith.constant 0 : index
    %c0_19 = arith.constant 0 : index
    %18 = vector.load %arg7[%c0_18, %c0_19] : memref<1x128xf32, #tpu.memory_space<vmem>>, vector<1x128xf32>
    %19 = vector.broadcast %18 : vector<1x128xf32> to vector<160x128xf32>
    %20 = arith.mulf %17, %19 : vector<160x128xf32>
    %c0_20 = arith.constant 0 : index
    %c0_21 = arith.constant 0 : index
    %21 = vector.load %arg8[%c0_20, %c0_21] : memref<1x128xf32, #tpu.memory_space<vmem>>, vector<1x128xf32>
    %22 = vector.broadcast %21 : vector<1x128xf32> to vector<160x128xf32>
    %23 = arith.addf %20, %22 : vector<160x128xf32>
    %cst_22 = arith.constant 0.000000e+00 : f32
    %24 = vector.broadcast %cst_22 : f32 to vector<160x128xf32>
    %25 = arith.maximumf %23, %24 : vector<160x128xf32>
    %26 = tpu.iota {dimensions = array<i32: 0>} : vector<160x1xi32>
    %c16_i32 = arith.constant 16 : i32
    %c0_i32 = arith.constant 0 : i32
    %27 = arith.cmpi eq, %c16_i32, %c0_i32 : i32
    %c1_i32 = arith.constant 1 : i32
    %28 = arith.select %27, %c1_i32, %c16_i32 : i32
    %29 = vector.broadcast %28 : i32 to vector<160x1xi32>
    %30 = arith.remsi %26, %29 : vector<160x1xi32>
    %c0_i32_23 = arith.constant 0 : i32
    %31 = vector.broadcast %c0_i32_23 : i32 to vector<160x1xi32>
    %32 = arith.cmpi ne, %30, %31 : vector<160x1xi32>
    %c0_i32_24 = arith.constant 0 : i32
    %33 = vector.broadcast %c0_i32_24 : i32 to vector<160x1xi32>
    %34 = arith.cmpi slt, %30, %33 : vector<160x1xi32>
    %c0_i32_25 = arith.constant 0 : i32
    %35 = arith.cmpi slt, %28, %c0_i32_25 : i32
    %36 = vector.broadcast %35 : i1 to vector<160x1xi1>
    %37 = vector.broadcast %36 : vector<160x1xi1> to vector<160x1xi1>
    %38 = arith.xori %34, %37 : vector<160x1xi1>
    %39 = arith.andi %38, %32 : vector<160x1xi1>
    %40 = vector.broadcast %28 : i32 to vector<160x1xi32>
    %41 = arith.addi %30, %40 : vector<160x1xi32>
    %42 = arith.select %39, %41, %30 : vector<160x1xi1>, vector<160x1xi32>
    %c0_i32_26 = arith.constant 0 : i32
    %43 = vector.broadcast %c0_i32_26 : i32 to vector<160x1xi32>
    %44 = arith.cmpi ne, %42, %43 : vector<160x1xi32>
    %c15_i32 = arith.constant 15 : i32
    %45 = vector.broadcast %c15_i32 : i32 to vector<160x1xi32>
    %46 = arith.cmpi ne, %42, %45 : vector<160x1xi32>
    %47 = arith.truncf %25 : vector<160x128xf32> to vector<160x128xbf16>
    %c1 = arith.constant 1 : index
    %c0_27 = arith.constant 0 : index
    %c0_28 = arith.constant 0 : index
    %48 = vector.load %arg16[%c1, %c0_27, %c0_28] : memref<3x160x128xbf16, #tpu.memory_space<vmem>>, vector<1x160x128xbf16>
    %49 = vector.shape_cast %48 : vector<1x160x128xbf16> to vector<160x128xbf16>
    %50 = vector.shape_cast %47 : vector<160x128xbf16> to vector<1x160x128xbf16>
    tpu.vector_store %arg16[%c1, %c0_27, %c0_28], %50 {strides = array<i32>} : memref<3x160x128xbf16, #tpu.memory_space<vmem>>, vector<1x160x128xbf16>,
    %c1_i32_29 = arith.constant 1 : i32
    %51 = tpu.dynamic_rotate %25 by %c1_i32_29 dim 0 : vector<160x128xf32>, i32 -> vector<160x128xf32>
    %cst_30 = arith.constant 0.000000e+00 : f32
    %52 = vector.shape_cast %44 : vector<160x1xi1> to vector<160x1xi1>
    %53 = vector.broadcast %52 : vector<160x1xi1> to vector<160x128xi1>
    %54 = vector.broadcast %cst_30 : f32 to vector<160x128xf32>
    %55 = arith.select %53, %51, %54 : vector<160x128xi1>, vector<160x128xf32>
    %56 = arith.truncf %55 : vector<160x128xf32> to vector<160x128xbf16>
    %c0_31 = arith.constant 0 : index
    %c0_32 = arith.constant 0 : index
    %c0_33 = arith.constant 0 : index
    %57 = vector.load %arg16[%c0_31, %c0_32, %c0_33] : memref<3x160x128xbf16, #tpu.memory_space<vmem>>, vector<1x160x128xbf16>
    %58 = vector.shape_cast %57 : vector<1x160x128xbf16> to vector<160x128xbf16>
    %59 = vector.shape_cast %56 : vector<160x128xbf16> to vector<1x160x128xbf16>
    tpu.vector_store %arg16[%c0_31, %c0_32, %c0_33], %59 {strides = array<i32>} : memref<3x160x128xbf16, #tpu.memory_space<vmem>>, vector<1x160x128xbf16>,
    %c159_i32 = arith.constant 159 : i32
    %60 = tpu.dynamic_rotate %25 by %c159_i32 dim 0 : vector<160x128xf32>, i32 -> vector<160x128xf32>
    %cst_34 = arith.constant 0.000000e+00 : f32
    %61 = vector.shape_cast %46 : vector<160x1xi1> to vector<160x1xi1>
    %62 = vector.broadcast %61 : vector<160x1xi1> to vector<160x128xi1>
    %63 = vector.broadcast %cst_34 : f32 to vector<160x128xf32>
    %64 = arith.select %62, %60, %63 : vector<160x128xi1>, vector<160x128xf32>
    %65 = arith.truncf %64 : vector<160x128xf32> to vector<160x128xbf16>
    %c2 = arith.constant 2 : index
    %c0_35 = arith.constant 0 : index
    %c0_36 = arith.constant 0 : index
    %66 = vector.load %arg16[%c2, %c0_35, %c0_36] : memref<3x160x128xbf16, #tpu.memory_space<vmem>>, vector<1x160x128xbf16>
    %67 = vector.shape_cast %66 : vector<1x160x128xbf16> to vector<160x128xbf16>
    %68 = vector.shape_cast %65 : vector<160x128xbf16> to vector<1x160x128xbf16>
    tpu.vector_store %arg16[%c2, %c0_35, %c0_36], %68 {strides = array<i32>} : memref<3x160x128xbf16, #tpu.memory_space<vmem>>, vector<1x160x128xbf16>,
    %c0_i32_37 = arith.constant 0 : i32
    %69 = arith.cmpi eq, %arg1, %c0_i32_37 : i32
    %70 = arith.extui %69 : i1 to i32
    %c0_i32_38 = arith.constant 0 : i32
    %71 = arith.cmpi ne, %70, %c0_i32_38 : i32
    scf.if %71 {
      %cst_131 = arith.constant 0.000000e+00 : bf16
      %155 = vector.broadcast %cst_131 : bf16 to vector<16x128xbf16>
      %c0_132 = arith.constant 0 : index
      %c0_133 = arith.constant 0 : index
      %c0_134 = arith.constant 0 : index
      %156 = vector.load %arg16[%c0_132, %c0_133, %c0_134] : memref<3x160x128xbf16, #tpu.memory_space<vmem>>, vector<1x16x128xbf16>
      %157 = vector.shape_cast %156 : vector<1x16x128xbf16> to vector<16x128xbf16>
      %158 = vector.shape_cast %155 : vector<16x128xbf16> to vector<1x16x128xbf16>
      tpu.vector_store %arg16[%c0_132, %c0_133, %c0_134], %158 {strides = array<i32>} : memref<3x160x128xbf16, #tpu.memory_space<vmem>>, vector<1x16x128xbf16>,
      %cst_135 = arith.constant 0.000000e+00 : bf16
      %159 = vector.broadcast %cst_135 : bf16 to vector<16x128xbf16>
      %c1_136 = arith.constant 1 : index
      %c0_137 = arith.constant 0 : index
      %c0_138 = arith.constant 0 : index
      %160 = vector.load %arg16[%c1_136, %c0_137, %c0_138] : memref<3x160x128xbf16, #tpu.memory_space<vmem>>, vector<1x16x128xbf16>
      %161 = vector.shape_cast %160 : vector<1x16x128xbf16> to vector<16x128xbf16>
      %162 = vector.shape_cast %159 : vector<16x128xbf16> to vector<1x16x128xbf16>
      tpu.vector_store %arg16[%c1_136, %c0_137, %c0_138], %162 {strides = array<i32>} : memref<3x160x128xbf16, #tpu.memory_space<vmem>>, vector<1x16x128xbf16>,
      %cst_139 = arith.constant 0.000000e+00 : bf16
      %163 = vector.broadcast %cst_139 : bf16 to vector<16x128xbf16>
      %c2_140 = arith.constant 2 : index
      %c0_141 = arith.constant 0 : index
      %c0_142 = arith.constant 0 : index
      %164 = vector.load %arg16[%c2_140, %c0_141, %c0_142] : memref<3x160x128xbf16, #tpu.memory_space<vmem>>, vector<1x16x128xbf16>
      %165 = vector.shape_cast %164 : vector<1x16x128xbf16> to vector<16x128xbf16>
      %166 = vector.shape_cast %163 : vector<16x128xbf16> to vector<1x16x128xbf16>
      tpu.vector_store %arg16[%c2_140, %c0_141, %c0_142], %166 {strides = array<i32>} : memref<3x160x128xbf16, #tpu.memory_space<vmem>>, vector<1x16x128xbf16>,
    } else {
    }
    %c1_i32_39 = arith.constant 1 : i32
    %72 = arith.cmpi eq, %arg1, %c1_i32_39 : i32
    %73 = arith.extui %72 : i1 to i32
    %c0_i32_40 = arith.constant 0 : i32
    %74 = arith.cmpi ne, %73, %c0_i32_40 : i32
    scf.if %74 {
      %cst_131 = arith.constant 0.000000e+00 : bf16
      %155 = vector.broadcast %cst_131 : bf16 to vector<16x128xbf16>
      %c0_132 = arith.constant 0 : index
      %c144 = arith.constant 144 : index
      %c0_133 = arith.constant 0 : index
      %156 = vector.load %arg16[%c0_132, %c144, %c0_133] : memref<3x160x128xbf16, #tpu.memory_space<vmem>>, vector<1x16x128xbf16>
      %157 = vector.shape_cast %156 : vector<1x16x128xbf16> to vector<16x128xbf16>
      %158 = vector.shape_cast %155 : vector<16x128xbf16> to vector<1x16x128xbf16>
      tpu.vector_store %arg16[%c0_132, %c144, %c0_133], %158 {strides = array<i32>} : memref<3x160x128xbf16, #tpu.memory_space<vmem>>, vector<1x16x128xbf16>,
      %cst_134 = arith.constant 0.000000e+00 : bf16
      %159 = vector.broadcast %cst_134 : bf16 to vector<16x128xbf16>
      %c1_135 = arith.constant 1 : index
      %c144_136 = arith.constant 144 : index
      %c0_137 = arith.constant 0 : index
      %160 = vector.load %arg16[%c1_135, %c144_136, %c0_137] : memref<3x160x128xbf16, #tpu.memory_space<vmem>>, vector<1x16x128xbf16>
      %161 = vector.shape_cast %160 : vector<1x16x128xbf16> to vector<16x128xbf16>
      %162 = vector.shape_cast %159 : vector<16x128xbf16> to vector<1x16x128xbf16>
      tpu.vector_store %arg16[%c1_135, %c144_136, %c0_137], %162 {strides = array<i32>} : memref<3x160x128xbf16, #tpu.memory_space<vmem>>, vector<1x16x128xbf16>,
      %cst_138 = arith.constant 0.000000e+00 : bf16
      %163 = vector.broadcast %cst_138 : bf16 to vector<16x128xbf16>
      %c2_139 = arith.constant 2 : index
      %c144_140 = arith.constant 144 : index
      %c0_141 = arith.constant 0 : index
      %164 = vector.load %arg16[%c2_139, %c144_140, %c0_141] : memref<3x160x128xbf16, #tpu.memory_space<vmem>>, vector<1x16x128xbf16>
      %165 = vector.shape_cast %164 : vector<1x16x128xbf16> to vector<16x128xbf16>
      %166 = vector.shape_cast %163 : vector<16x128xbf16> to vector<1x16x128xbf16>
      tpu.vector_store %arg16[%c2_139, %c144_140, %c0_141], %166 {strides = array<i32>} : memref<3x160x128xbf16, #tpu.memory_space<vmem>>, vector<1x16x128xbf16>,
    } else {
    }
    %c0_41 = arith.constant 0 : index
    %c0_42 = arith.constant 0 : index
    %c0_43 = arith.constant 0 : index
    %75 = vector.load %arg16[%c0_41, %c0_42, %c0_43] : memref<3x160x128xbf16, #tpu.memory_space<vmem>>, vector<1x128x128xbf16>
    %76 = vector.shape_cast %75 : vector<1x128x128xbf16> to vector<128x128xbf16>
    %c0_44 = arith.constant 0 : index
    %c0_45 = arith.constant 0 : index
    %c0_46 = arith.constant 0 : index
    %c0_47 = arith.constant 0 : index
    %77 = vector.load %arg4[%c0_44, %c0_45, %c0_46, %c0_47] : memref<3x3x128x128xbf16, #tpu.memory_space<vmem>>, vector<1x1x128x128xbf16>
    %78 = vector.shape_cast %77 : vector<1x1x128x128xbf16> to vector<128x128xbf16>
    %cst_48 = arith.constant dense<0.000000e+00> : vector<128x128xf32>
    %79 = tpu.matmul %76, %78, %cst_48 {dimension_numbers = #tpu.dot_dimension_numbers<[1], [0], [0], [1], [0, 0, 1, 1], [], []>} : vector<128x128xbf16>, vector<128x128xbf16>, vector<128x128xf32> -> vector<128x128xf32>
    %c1_49 = arith.constant 1 : index
    %c0_50 = arith.constant 0 : index
    %c0_51 = arith.constant 0 : index
    %80 = vector.load %arg16[%c1_49, %c0_50, %c0_51] : memref<3x160x128xbf16, #tpu.memory_space<vmem>>, vector<1x128x128xbf16>
    %81 = vector.shape_cast %80 : vector<1x128x128xbf16> to vector<128x128xbf16>
    %c0_52 = arith.constant 0 : index
    %c1_53 = arith.constant 1 : index
    %c0_54 = arith.constant 0 : index
    %c0_55 = arith.constant 0 : index
    %82 = vector.load %arg4[%c0_52, %c1_53, %c0_54, %c0_55] : memref<3x3x128x128xbf16, #tpu.memory_space<vmem>>, vector<1x1x128x128xbf16>
    %83 = vector.shape_cast %82 : vector<1x1x128x128xbf16> to vector<128x128xbf16>
    %cst_56 = arith.constant dense<0.000000e+00> : vector<128x128xf32>
    %84 = tpu.matmul %81, %83, %cst_56 {dimension_numbers = #tpu.dot_dimension_numbers<[1], [0], [0], [1], [0, 0, 1, 1], [], []>} : vector<128x128xbf16>, vector<128x128xbf16>, vector<128x128xf32> -> vector<128x128xf32>
    %85 = arith.addf %79, %84 : vector<128x128xf32>
    %c2_57 = arith.constant 2 : index
    %c0_58 = arith.constant 0 : index
    %c0_59 = arith.constant 0 : index
    %86 = vector.load %arg16[%c2_57, %c0_58, %c0_59] : memref<3x160x128xbf16, #tpu.memory_space<vmem>>, vector<1x128x128xbf16>
    %87 = vector.shape_cast %86 : vector<1x128x128xbf16> to vector<128x128xbf16>
    %c0_60 = arith.constant 0 : index
    %c2_61 = arith.constant 2 : index
    %c0_62 = arith.constant 0 : index
    %c0_63 = arith.constant 0 : index
    %88 = vector.load %arg4[%c0_60, %c2_61, %c0_62, %c0_63] : memref<3x3x128x128xbf16, #tpu.memory_space<vmem>>, vector<1x1x128x128xbf16>
    %89 = vector.shape_cast %88 : vector<1x1x128x128xbf16> to vector<128x128xbf16>
    %cst_64 = arith.constant dense<0.000000e+00> : vector<128x128xf32>
    %90 = tpu.matmul %87, %89, %cst_64 {dimension_numbers = #tpu.dot_dimension_numbers<[1], [0], [0], [1], [0, 0, 1, 1], [], []>} : vector<128x128xbf16>, vector<128x128xbf16>, vector<128x128xf32> -> vector<128x128xf32>
    %91 = arith.addf %85, %90 : vector<128x128xf32>
    %c0_65 = arith.constant 0 : index
    %c16_66 = arith.constant 16 : index
    %c0_67 = arith.constant 0 : index
    %92 = vector.load %arg16[%c0_65, %c16_66, %c0_67] : memref<3x160x128xbf16, #tpu.memory_space<vmem>>, vector<1x128x128xbf16>
    %93 = vector.shape_cast %92 : vector<1x128x128xbf16> to vector<128x128xbf16>
    %c1_68 = arith.constant 1 : index
    %c0_69 = arith.constant 0 : index
    %c0_70 = arith.constant 0 : index
    %c0_71 = arith.constant 0 : index
    %94 = vector.load %arg4[%c1_68, %c0_69, %c0_70, %c0_71] : memref<3x3x128x128xbf16, #tpu.memory_space<vmem>>, vector<1x1x128x128xbf16>
    %95 = vector.shape_cast %94 : vector<1x1x128x128xbf16> to vector<128x128xbf16>
    %cst_72 = arith.constant dense<0.000000e+00> : vector<128x128xf32>
    %96 = tpu.matmul %93, %95, %cst_72 {dimension_numbers = #tpu.dot_dimension_numbers<[1], [0], [0], [1], [0, 0, 1, 1], [], []>} : vector<128x128xbf16>, vector<128x128xbf16>, vector<128x128xf32> -> vector<128x128xf32>
    %97 = arith.addf %91, %96 : vector<128x128xf32>
    %c1_73 = arith.constant 1 : index
    %c16_74 = arith.constant 16 : index
    %c0_75 = arith.constant 0 : index
    %98 = vector.load %arg16[%c1_73, %c16_74, %c0_75] : memref<3x160x128xbf16, #tpu.memory_space<vmem>>, vector<1x128x128xbf16>
    %99 = vector.shape_cast %98 : vector<1x128x128xbf16> to vector<128x128xbf16>
    %c1_76 = arith.constant 1 : index
    %c1_77 = arith.constant 1 : index
    %c0_78 = arith.constant 0 : index
    %c0_79 = arith.constant 0 : index
    %100 = vector.load %arg4[%c1_76, %c1_77, %c0_78, %c0_79] : memref<3x3x128x128xbf16, #tpu.memory_space<vmem>>, vector<1x1x128x128xbf16>
    %101 = vector.shape_cast %100 : vector<1x1x128x128xbf16> to vector<128x128xbf16>
    %cst_80 = arith.constant dense<0.000000e+00> : vector<128x128xf32>
    %102 = tpu.matmul %99, %101, %cst_80 {dimension_numbers = #tpu.dot_dimension_numbers<[1], [0], [0], [1], [0, 0, 1, 1], [], []>} : vector<128x128xbf16>, vector<128x128xbf16>, vector<128x128xf32> -> vector<128x128xf32>
    %103 = arith.addf %97, %102 : vector<128x128xf32>
    %c2_81 = arith.constant 2 : index
    %c16_82 = arith.constant 16 : index
    %c0_83 = arith.constant 0 : index
    %104 = vector.load %arg16[%c2_81, %c16_82, %c0_83] : memref<3x160x128xbf16, #tpu.memory_space<vmem>>, vector<1x128x128xbf16>
    %105 = vector.shape_cast %104 : vector<1x128x128xbf16> to vector<128x128xbf16>
    %c1_84 = arith.constant 1 : index
    %c2_85 = arith.constant 2 : index
    %c0_86 = arith.constant 0 : index
    %c0_87 = arith.constant 0 : index
    %106 = vector.load %arg4[%c1_84, %c2_85, %c0_86, %c0_87] : memref<3x3x128x128xbf16, #tpu.memory_space<vmem>>, vector<1x1x128x128xbf16>
    %107 = vector.shape_cast %106 : vector<1x1x128x128xbf16> to vector<128x128xbf16>
    %cst_88 = arith.constant dense<0.000000e+00> : vector<128x128xf32>
    %108 = tpu.matmul %105, %107, %cst_88 {dimension_numbers = #tpu.dot_dimension_numbers<[1], [0], [0], [1], [0, 0, 1, 1], [], []>} : vector<128x128xbf16>, vector<128x128xbf16>, vector<128x128xf32> -> vector<128x128xf32>
    %109 = arith.addf %103, %108 : vector<128x128xf32>
    %c0_89 = arith.constant 0 : index
    %c32 = arith.constant 32 : index
    %c0_90 = arith.constant 0 : index
    %110 = vector.load %arg16[%c0_89, %c32, %c0_90] : memref<3x160x128xbf16, #tpu.memory_space<vmem>>, vector<1x128x128xbf16>
    %111 = vector.shape_cast %110 : vector<1x128x128xbf16> to vector<128x128xbf16>
    %c2_91 = arith.constant 2 : index
    %c0_92 = arith.constant 0 : index
    %c0_93 = arith.constant 0 : index
    %c0_94 = arith.constant 0 : index
    %112 = vector.load %arg4[%c2_91, %c0_92, %c0_93, %c0_94] : memref<3x3x128x128xbf16, #tpu.memory_space<vmem>>, vector<1x1x128x128xbf16>
    %113 = vector.shape_cast %112 : vector<1x1x128x128xbf16> to vector<128x128xbf16>
    %cst_95 = arith.constant dense<0.000000e+00> : vector<128x128xf32>
    %114 = tpu.matmul %111, %113, %cst_95 {dimension_numbers = #tpu.dot_dimension_numbers<[1], [0], [0], [1], [0, 0, 1, 1], [], []>} : vector<128x128xbf16>, vector<128x128xbf16>, vector<128x128xf32> -> vector<128x128xf32>
    %115 = arith.addf %109, %114 : vector<128x128xf32>
    %c1_96 = arith.constant 1 : index
    %c32_97 = arith.constant 32 : index
    %c0_98 = arith.constant 0 : index
    %116 = vector.load %arg16[%c1_96, %c32_97, %c0_98] : memref<3x160x128xbf16, #tpu.memory_space<vmem>>, vector<1x128x128xbf16>
    %117 = vector.shape_cast %116 : vector<1x128x128xbf16> to vector<128x128xbf16>
    %c2_99 = arith.constant 2 : index
    %c1_100 = arith.constant 1 : index
    %c0_101 = arith.constant 0 : index
    %c0_102 = arith.constant 0 : index
    %118 = vector.load %arg4[%c2_99, %c1_100, %c0_101, %c0_102] : memref<3x3x128x128xbf16, #tpu.memory_space<vmem>>, vector<1x1x128x128xbf16>
    %119 = vector.shape_cast %118 : vector<1x1x128x128xbf16> to vector<128x128xbf16>
    %cst_103 = arith.constant dense<0.000000e+00> : vector<128x128xf32>
    %120 = tpu.matmul %117, %119, %cst_103 {dimension_numbers = #tpu.dot_dimension_numbers<[1], [0], [0], [1], [0, 0, 1, 1], [], []>} : vector<128x128xbf16>, vector<128x128xbf16>, vector<128x128xf32> -> vector<128x128xf32>
    %121 = arith.addf %115, %120 : vector<128x128xf32>
    %c2_104 = arith.constant 2 : index
    %c32_105 = arith.constant 32 : index
    %c0_106 = arith.constant 0 : index
    %122 = vector.load %arg16[%c2_104, %c32_105, %c0_106] : memref<3x160x128xbf16, #tpu.memory_space<vmem>>, vector<1x128x128xbf16>
    %123 = vector.shape_cast %122 : vector<1x128x128xbf16> to vector<128x128xbf16>
    %c2_107 = arith.constant 2 : index
    %c2_108 = arith.constant 2 : index
    %c0_109 = arith.constant 0 : index
    %c0_110 = arith.constant 0 : index
    %124 = vector.load %arg4[%c2_107, %c2_108, %c0_109, %c0_110] : memref<3x3x128x128xbf16, #tpu.memory_space<vmem>>, vector<1x1x128x128xbf16>
    %125 = vector.shape_cast %124 : vector<1x1x128x128xbf16> to vector<128x128xbf16>
    %cst_111 = arith.constant dense<0.000000e+00> : vector<128x128xf32>
    %126 = tpu.matmul %123, %125, %cst_111 {dimension_numbers = #tpu.dot_dimension_numbers<[1], [0], [0], [1], [0, 0, 1, 1], [], []>} : vector<128x128xbf16>, vector<128x128xbf16>, vector<128x128xf32> -> vector<128x128xf32>
    %127 = arith.addf %121, %126 : vector<128x128xf32>
    %c0_112 = arith.constant 0 : index
    %c0_113 = arith.constant 0 : index
    %128 = vector.load %arg9[%c0_112, %c0_113] : memref<1x128xf32, #tpu.memory_space<vmem>>, vector<1x128xf32>
    %129 = vector.broadcast %128 : vector<1x128xf32> to vector<128x128xf32>
    %130 = arith.mulf %127, %129 : vector<128x128xf32>
    %c0_114 = arith.constant 0 : index
    %c0_115 = arith.constant 0 : index
    %131 = vector.load %arg10[%c0_114, %c0_115] : memref<1x128xf32, #tpu.memory_space<vmem>>, vector<1x128xf32>
    %132 = vector.broadcast %131 : vector<1x128xf32> to vector<128x128xf32>
    %133 = arith.addf %130, %132 : vector<128x128xf32>
    %cst_116 = arith.constant 0.000000e+00 : f32
    %134 = vector.broadcast %cst_116 : f32 to vector<128x128xf32>
    %135 = arith.maximumf %133, %134 : vector<128x128xf32>
    %136 = arith.truncf %135 : vector<128x128xf32> to vector<128x128xbf16>
    %c0_117 = arith.constant 0 : index
    %c0_118 = arith.constant 0 : index
    %137 = vector.load %arg5[%c0_117, %c0_118] : memref<128x128xbf16, #tpu.memory_space<vmem>>, vector<128x128xbf16>
    %cst_119 = arith.constant dense<0.000000e+00> : vector<128x128xf32>
    %138 = tpu.matmul %136, %137, %cst_119 {dimension_numbers = #tpu.dot_dimension_numbers<[1], [0], [0], [1], [0, 0, 1, 1], [], []>} : vector<128x128xbf16>, vector<128x128xbf16>, vector<128x128xf32> -> vector<128x128xf32>
    %c0_120 = arith.constant 0 : index
    %c0_121 = arith.constant 0 : index
    %139 = vector.load %arg11[%c0_120, %c0_121] : memref<1x128xf32, #tpu.memory_space<vmem>>, vector<1x128xf32>
    %140 = vector.broadcast %139 : vector<1x128xf32> to vector<128x128xf32>
    %141 = arith.mulf %138, %140 : vector<128x128xf32>
    %c0_122 = arith.constant 0 : index
    %c0_123 = arith.constant 0 : index
    %142 = vector.load %arg12[%c0_122, %c0_123] : memref<1x128xf32, #tpu.memory_space<vmem>>, vector<1x128xf32>
    %143 = vector.broadcast %142 : vector<1x128xf32> to vector<128x128xf32>
    %144 = arith.addf %141, %143 : vector<128x128xf32>
    %c0_124 = arith.constant 0 : index
    %c0_125 = arith.constant 0 : index
    %c0_126 = arith.constant 0 : index
    %145 = vector.load %arg15[%c0_124, %c0_125, %c0_126] : memref<1x128x128xbf16, #tpu.memory_space<vmem>>, vector<1x128x128xbf16>
    %146 = vector.shape_cast %145 : vector<1x128x128xbf16> to vector<128x128xbf16>
    %147 = arith.extf %146 : vector<128x128xbf16> to vector<128x128xf32>
    %148 = arith.addf %144, %147 : vector<128x128xf32>
    %cst_127 = arith.constant 0.000000e+00 : f32
    %149 = vector.broadcast %cst_127 : f32 to vector<128x128xf32>
    %150 = arith.maximumf %148, %149 : vector<128x128xf32>
    %151 = arith.truncf %150 : vector<128x128xf32> to vector<128x128xbf16>
    %c0_128 = arith.constant 0 : index
    %c0_129 = arith.constant 0 : index
    %c0_130 = arith.constant 0 : index
    %152 = vector.load %arg15[%c0_128, %c0_129, %c0_130] : memref<1x128x128xbf16, #tpu.memory_space<vmem>>, vector<1x128x128xbf16>
    %153 = vector.shape_cast %152 : vector<1x128x128xbf16> to vector<128x128xbf16>
    %154 = vector.shape_cast %151 : vector<128x128xbf16> to vector<1x128x128xbf16>
    tpu.vector_store %arg15[%c0_128, %c0_129, %c0_130], %154 {strides = array<i32>} : memref<1x128x128xbf16, #tpu.memory_space<vmem>>, vector<1x128x128xbf16>,
    return
  }
  func.func @transform_0(%arg0: i32, %arg1: i32) -> (i32, i32, i32, i32) {
    %c0_i32 = arith.constant 0 : i32
    %c0_i32_0 = arith.constant 0 : i32
    %c0_i32_1 = arith.constant 0 : i32
    return %arg0, %arg1, %c0_i32, %c0_i32_0 : i32, i32, i32, i32
  }
  func.func @transform_1(%arg0: i32, %arg1: i32) -> (i32, i32) {
    %c0_i32 = arith.constant 0 : i32
    %c0_i32_0 = arith.constant 0 : i32
    %c0_i32_1 = arith.constant 0 : i32
    return %c0_i32, %c0_i32_0 : i32, i32
  }
  func.func @transform_2(%arg0: i32, %arg1: i32) -> (i32, i32, i32, i32) {
    %c0_i32 = arith.constant 0 : i32
    %c0_i32_0 = arith.constant 0 : i32
    %c0_i32_1 = arith.constant 0 : i32
    %c0_i32_2 = arith.constant 0 : i32
    %c0_i32_3 = arith.constant 0 : i32
    return %c0_i32, %c0_i32_0, %c0_i32_1, %c0_i32_2 : i32, i32, i32, i32
  }
  func.func @transform_3(%arg0: i32, %arg1: i32) -> (i32, i32) {
    %c0_i32 = arith.constant 0 : i32
    %c0_i32_0 = arith.constant 0 : i32
    %c0_i32_1 = arith.constant 0 : i32
    return %c0_i32, %c0_i32_0 : i32, i32
  }
  func.func @transform_4(%arg0: i32, %arg1: i32) -> (i32, i32) {
    %c0_i32 = arith.constant 0 : i32
    %c0_i32_0 = arith.constant 0 : i32
    %c0_i32_1 = arith.constant 0 : i32
    return %c0_i32, %c0_i32_0 : i32, i32
  }
  func.func @transform_5(%arg0: i32, %arg1: i32) -> (i32, i32) {
    %c0_i32 = arith.constant 0 : i32
    %c0_i32_0 = arith.constant 0 : i32
    %c0_i32_1 = arith.constant 0 : i32
    return %c0_i32, %c0_i32_0 : i32, i32
  }
  func.func @transform_6(%arg0: i32, %arg1: i32) -> (i32, i32) {
    %c0_i32 = arith.constant 0 : i32
    %c0_i32_0 = arith.constant 0 : i32
    %c0_i32_1 = arith.constant 0 : i32
    return %c0_i32, %c0_i32_0 : i32, i32
  }
  func.func @transform_7(%arg0: i32, %arg1: i32) -> (i32, i32) {
    %c0_i32 = arith.constant 0 : i32
    %c0_i32_0 = arith.constant 0 : i32
    %c0_i32_1 = arith.constant 0 : i32
    return %c0_i32, %c0_i32_0 : i32, i32
  }
  func.func @transform_8(%arg0: i32, %arg1: i32) -> (i32, i32) {
    %c0_i32 = arith.constant 0 : i32
    %c0_i32_0 = arith.constant 0 : i32
    %c0_i32_1 = arith.constant 0 : i32
    return %c0_i32, %c0_i32_0 : i32, i32
  }
  func.func @transform_9(%arg0: i32, %arg1: i32) -> (i32, i32) {
    %c0_i32 = arith.constant 0 : i32
    %c0_i32_0 = arith.constant 0 : i32
    %c0_i32_1 = arith.constant 0 : i32
    return %c0_i32, %c0_i32_0 : i32, i32
  }
  func.func @transform_10(%arg0: i32, %arg1: i32) -> (i32, i32) {
    %c0_i32 = arith.constant 0 : i32
    %c0_i32_0 = arith.constant 0 : i32
    %c0_i32_1 = arith.constant 0 : i32
    return %c0_i32, %c0_i32_0 : i32, i32
  }
  func.func @transform_11(%arg0: i32, %arg1: i32) -> (i32, i32) {
    %c0_i32 = arith.constant 0 : i32
    %c0_i32_0 = arith.constant 0 : i32
    %c0_i32_1 = arith.constant 0 : i32
    return %c0_i32, %c0_i32_0 : i32, i32
  }
  func.func @transform_12(%arg0: i32, %arg1: i32) -> (i32, i32) {
    %c0_i32 = arith.constant 0 : i32
    %c0_i32_0 = arith.constant 0 : i32
    %c0_i32_1 = arith.constant 0 : i32
    return %c0_i32, %c0_i32_0 : i32, i32
  }
  func.func @transform_13(%arg0: i32, %arg1: i32) -> (i32, i32, i32) {
    %c0_i32 = arith.constant 0 : i32
    %c0_i32_0 = arith.constant 0 : i32
    return %arg0, %arg1, %c0_i32 : i32, i32, i32
  }
}

</mosaic_0001>

<llo_original>
// kernel: tpu_custom_call.1
$region0: #{tpu_custom_call.1}
  #allocation0 [shape = 'u32[]', space=smem, size = 0x4, offset = 0x4, fixed_abs, tag = 'smem constant byte address 0x4 - core index']
  #allocation1 [shape = 'u32[144,128]{1,0:T(1,128)}', space=vmem, size = 0x12000, scoped, tag = 'internal scratch']
  #allocation2 [shape = 'bf16[3,160,128]{2,1,0:T(8,128)(2,1)}', space=vmem, size = 0x1e000, scoped, tag = 'scratch operand']
  %s0 = inlined_call_operand.hbm [shape: bf16[2,2,160,128], index: 0, kind: input, shape index: {}]
  %s1 = inlined_call_operand.hbm [shape: bf16[128,128], index: 1, kind: input, shape index: {}]
  %s2 = inlined_call_operand.hbm [shape: bf16[3,3,128,128], index: 2, kind: input, shape index: {}]
  %s3 = inlined_call_operand.hbm [shape: bf16[128,128], index: 3, kind: input, shape index: {}]
  %s4 = inlined_call_operand.hbm [shape: bf16[128,128], index: 4, kind: input, shape index: {}]
  %s5 = inlined_call_operand.vmem [shape: f32[1,128], index: 5, kind: input, shape index: {}]
  %s6 = inlined_call_operand.vmem [shape: f32[1,128], index: 6, kind: input, shape index: {}]
  %s7 = inlined_call_operand.vmem [shape: f32[1,128], index: 7, kind: input, shape index: {}]
  %s8 = inlined_call_operand.vmem [shape: f32[1,128], index: 8, kind: input, shape index: {}]
  %s9 = inlined_call_operand.vmem [shape: f32[1,128], index: 9, kind: input, shape index: {}]
  %s10 = inlined_call_operand.vmem [shape: f32[1,128], index: 10, kind: input, shape index: {}]
  %s11 = inlined_call_operand.vmem [shape: f32[1,128], index: 11, kind: input, shape index: {}]
  %s12 = inlined_call_operand.vmem [shape: f32[1,128], index: 12, kind: input, shape index: {}]
  %s13 = inlined_call_operand.hbm [shape: bf16[2,256,128], index: 13, kind: output, shape index: {}]
  %s14 = sld [smem:[#allocation0]]
  $region113: #{tpu_custom_call.1} parent=0
    _
  %s16 = ssub.s32 1, %s14
  %s17 = scalar_select 0, %s16, %s14
  $region1: #{tpu_custom_call.1} parent=0
    #allocation3 [shape = 'u8[81920]{0}', space=vmem, size = 0x14000, scoped, tag = 'input window, operand 0']
    #allocation4 [shape = 's32[2]{0}', space=sflag, size = 0x8, scoped, tag = 'scoped memory for tpu_custom_call.1']
    #allocation5 [shape = 's32[2]{0}', space=sflag, size = 0x8, scoped, tag = 'scoped memory for tpu_custom_call.1']
    #allocation6 [shape = 'u8[32768]{0}', space=vmem, size = 0x8000, scoped, tag = 'input window, operand 1, single buffered']
    #allocation7 [shape = 's32[1]{0}', space=sflag, size = 0x4, scoped, tag = 'scoped memory for tpu_custom_call.1']
    #allocation8 [shape = 'u8[294912]{0}', space=vmem, size = 0x48000, scoped, tag = 'input window, operand 2, single buffered']
    #allocation9 [shape = 'u8[32768]{0}', space=vmem, size = 0x8000, scoped, tag = 'input window, operand 3, single buffered']
    #allocation10 [shape = 's32[1]{0}', space=sflag, size = 0x4, scoped, tag = 'scoped memory for tpu_custom_call.1']
    #allocation11 [shape = 'u8[32768]{0}', space=vmem, size = 0x8000, scoped, tag = 'input window, operand 4, single buffered']
    #allocation12 [shape = 'u8[65536]{0}', space=vmem, size = 0x10000, scoped, tag = 'output window, operand 0']
    %18 = vsyncpa [#allocation4], 0
    %s19 = scalar_lea.sflag [#allocation4], 1
    %20 = vsyncpa %s19, 0
    %21 = vsyncpa [#allocation7], 0
    %22 = vsyncpa [#allocation10], 0
    %23 = vsyncpa [#allocation5], 0
    %s24 = scalar_lea.sflag [#allocation5], 1
    %25 = vsyncpa %s24, 0
    loop: start=0, step=1, limit=6
    $region2: #{tpu_custom_call.1} parent=1 // loop_pre_header
      _
    $region3: #{tpu_custom_call.1} parent=1 // loop_header
      %s27 = sphi 0, %s31
      %p28 = scmp.ge.s32.totalorder %s27, 6
      %s34 = sphi 0, %s46
      %s35 = sphi 0, %s42
      %s36 = sphi 0, %s34
      %s37 = sphi 0, %s35
      %s38 = sphi 0, %s36
      %s39 = sphi 0, %s37
      %s51 = sphi 0, %s53
      %s54 = sphi 0, %s51
      %s55 = sphi 0, %s54
      %s71 = sphi 0, %s55
      %s75 = sphi 0, %s75
      %s77 = sphi 0, %s75
      %s78 = sphi 0, %s77
      %s92 = sphi 0, %s78
      %s96 = sphi 0, %s96
      %s98 = sphi 0, %s96
      %s99 = sphi 0, %s98
      %s113 = sphi 0, %s99
      %s117 = sphi 0, %s117
      %s119 = sphi 0, %s117
      %s120 = sphi 0, %s119
      %s134 = sphi 0, %s120
      %s138 = sphi 0, %s138
      %s140 = sphi 0, %s138
      %s141 = sphi 0, %s140
      %s155 = sphi 0, %s141
      %s159 = sphi 0, %s159
      %s161 = sphi 0, %s159
      %s162 = sphi 0, %s161
      %s176 = sphi 0, %s162
      %s180 = sphi 0, %s180
      %s182 = sphi 0, %s180
      %s183 = sphi 0, %s182
      %s197 = sphi 0, %s183
      %s201 = sphi 0, %s201
      %s203 = sphi 0, %s201
      %s204 = sphi 0, %s203
      %s218 = sphi 0, %s204
      %s222 = sphi 0, %s222
      %s224 = sphi 0, %s222
      %s225 = sphi 0, %s224
      %s239 = sphi 0, %s225
      %s243 = sphi 0, %s243
      %s245 = sphi 0, %s243
      %s246 = sphi 0, %s245
      %s260 = sphi 0, %s246
      %s264 = sphi 0, %s264
      %s266 = sphi 0, %s264
      %s267 = sphi 0, %s266
      %s281 = sphi 0, %s267
      %s285 = sphi 0, %s285
      %s287 = sphi 0, %s285
      %s288 = sphi 0, %s287
      %s302 = sphi 0, %s288
      %s306 = sphi 0, %s306
      %s308 = sphi 0, %s306
      %s309 = sphi 0, %s308
      %s323 = sphi 0, %s309
      %s331 = sphi 0, %s333
      %s334 = sphi 0, %s331
      %s335 = sphi 0, %s334
      %s351 = sphi 0, %s335
    $region4: #{tpu_custom_call.1} parent=1 // loop_header_branch
      %30 = sbr.rel (%p28) target = $region8
    $region5: #{tpu_custom_call.1} parent=1 // loop_body
      %s32 = ssub.s32 %s27, 1
      %s33 = ssub.s32 %s27, 2
      %s40 = sadd.s32 1, %s35
      %p41 = scmp.ge.s32.totalorder %s40, 2
      %s42 = scalar_select %p41, 0, %s40
      %s43 = sadd.s32 1, %s34
      %s44 = scalar_select %p41, %s43, %s34
      %p45 = scmp.ge.s32.totalorder %s44, 2
      %s46 = scalar_select %p45, 0, %s44
      %s47 = ssub.s32 %s34, %s46
      %s48 = ssub.s32 %s35, %s42
      %s49 = sor.u32 %s47, %s48
      %p50 = scmp.eq.s32.totalorder %s49, 0
      %s52 = sadd.s32 %s51, 1
      %s53 = scalar_select %p50, %s51, %s52
      %p56 = pneg %p50
      %p57 = scmp.eq.s32.totalorder %s27, 3
      %p58 = por %p56, %p57
      %p59 = scmp.ne.s32.totalorder %s51, %s54
      %p60 = scmp.eq.s32.totalorder %s27, 0
      %p61 = por %p59, %p60
      %p62 = scmp.ne.s32.totalorder %s51, %s54
      %p63 = scmp.eq.s32.totalorder %s32, 3
      %p64 = por %p62, %p63
      %p65 = scmp.ne.s32.totalorder %s54, %s55
      %p66 = scmp.eq.s32.totalorder %s32, 0
      %p67 = por %p65, %p66
      %p68 = scmp.ne.s32.totalorder %s54, %s55
      %p69 = scmp.eq.s32.totalorder %s33, 3
      %p70 = por %p68, %p69
      %p72 = scmp.ne.s32.totalorder %s55, %s71
      %p73 = scmp.eq.s32.totalorder %s33, 0
      %p74 = por %p72, %p73
      %s76 = sadd.s32 %s75, 1
      %p79 = scmp.eq.s32.totalorder %s27, 3
      %p80 = scmp.ne.s32.totalorder %s75, %s77
      %p81 = scmp.eq.s32.totalorder %s27, 0
      %p82 = por %p80, %p81
      %p83 = scmp.ne.s32.totalorder %s75, %s77
      %p84 = scmp.eq.s32.totalorder %s32, 3
      %p85 = por %p83, %p84
      %p86 = scmp.ne.s32.totalorder %s77, %s78
      %p87 = scmp.eq.s32.totalorder %s32, 0
      %p88 = por %p86, %p87
      %p89 = scmp.ne.s32.totalorder %s77, %s78
      %p90 = scmp.eq.s32.totalorder %s33, 3
      %p91 = por %p89, %p90
      %p93 = scmp.ne.s32.totalorder %s78, %s92
      %p94 = scmp.eq.s32.totalorder %s33, 0
      %p95 = por %p93, %p94
      %s97 = sadd.s32 %s96, 1
      %p100 = scmp.eq.s32.totalorder %s27, 3
      %p101 = scmp.ne.s32.totalorder %s96, %s98
      %p102 = scmp.eq.s32.totalorder %s27, 0
      %p103 = por %p101, %p102
      %p104 = scmp.ne.s32.totalorder %s96, %s98
      %p105 = scmp.eq.s32.totalorder %s32, 3
      %p106 = por %p104, %p105
      %p107 = scmp.ne.s32.totalorder %s98, %s99
      %p108 = scmp.eq.s32.totalorder %s32, 0
      %p109 = por %p107, %p108
      %p110 = scmp.ne.s32.totalorder %s98, %s99
      %p111 = scmp.eq.s32.totalorder %s33, 3
      %p112 = por %p110, %p111
      %p114 = scmp.ne.s32.totalorder %s99, %s113
      %p115 = scmp.eq.s32.totalorder %s33, 0
      %p116 = por %p114, %p115
      %s118 = sadd.s32 %s117, 1
      %p121 = scmp.eq.s32.totalorder %s27, 3
      %p122 = scmp.ne.s32.totalorder %s117, %s119
      %p123 = scmp.eq.s32.totalorder %s27, 0
      %p124 = por %p122, %p123
      %p125 = scmp.ne.s32.totalorder %s117, %s119
      %p126 = scmp.eq.s32.totalorder %s32, 3
      %p127 = por %p125, %p126
      %p128 = scmp.ne.s32.totalorder %s119, %s120
      %p129 = scmp.eq.s32.totalorder %s32, 0
      %p130 = por %p128, %p129
      %p131 = scmp.ne.s32.totalorder %s119, %s120
      %p132 = scmp.eq.s32.totalorder %s33, 3
      %p133 = por %p131, %p132
      %p135 = scmp.ne.s32.totalorder %s120, %s134
      %p136 = scmp.eq.s32.totalorder %s33, 0
      %p137 = por %p135, %p136
      %s139 = sadd.s32 %s138, 1
      %p142 = scmp.eq.s32.totalorder %s27, 3
      %p143 = scmp.ne.s32.totalorder %s138, %s140
      %p144 = scmp.eq.s32.totalorder %s27, 0
      %p145 = por %p143, %p144
      %p146 = scmp.ne.s32.totalorder %s138, %s140
      %p147 = scmp.eq.s32.totalorder %s32, 3
      %p148 = por %p146, %p147
      %p149 = scmp.ne.s32.totalorder %s140, %s141
      %p150 = scmp.eq.s32.totalorder %s32, 0
      %p151 = por %p149, %p150
      %p152 = scmp.ne.s32.totalorder %s140, %s141
      %p153 = scmp.eq.s32.totalorder %s33, 3
      %p154 = por %p152, %p153
      %p156 = scmp.ne.s32.totalorder %s141, %s155
      %p157 = scmp.eq.s32.totalorder %s33, 0
      %p158 = por %p156, %p157
      %s160 = sadd.s32 %s159, 1
      %p163 = scmp.eq.s32.totalorder %s27, 3
      %p164 = scmp.ne.s32.totalorder %s159, %s161
      %p165 = scmp.eq.s32.totalorder %s27, 0
      %p166 = por %p164, %p165
      %p167 = scmp.ne.s32.totalorder %s159, %s161
      %p168 = scmp.eq.s32.totalorder %s32, 3
      %p169 = por %p167, %p168
      %p170 = scmp.ne.s32.totalorder %s161, %s162
      %p171 = scmp.eq.s32.totalorder %s32, 0
      %p172 = por %p170, %p171
      %p173 = scmp.ne.s32.totalorder %s161, %s162
      %p174 = scmp.eq.s32.totalorder %s33, 3
      %p175 = por %p173, %p174
      %p177 = scmp.ne.s32.totalorder %s162, %s176
      %p178 = scmp.eq.s32.totalorder %s33, 0
      %p179 = por %p177, %p178
      %s181 = sadd.s32 %s180, 1
      %p184 = scmp.eq.s32.totalorder %s27, 3
      %p185 = scmp.ne.s32.totalorder %s180, %s182
      %p186 = scmp.eq.s32.totalorder %s27, 0
      %p187 = por %p185, %p186
      %p188 = scmp.ne.s32.totalorder %s180, %s182
      %p189 = scmp.eq.s32.totalorder %s32, 3
      %p190 = por %p188, %p189
      %p191 = scmp.ne.s32.totalorder %s182, %s183
      %p192 = scmp.eq.s32.totalorder %s32, 0
      %p193 = por %p191, %p192
      %p194 = scmp.ne.s32.totalorder %s182, %s183
      %p195 = scmp.eq.s32.totalorder %s33, 3
      %p196 = por %p194, %p195
      %p198 = scmp.ne.s32.totalorder %s183, %s197
      %p199 = scmp.eq.s32.totalorder %s33, 0
      %p200 = por %p198, %p199
      %s202 = sadd.s32 %s201, 1
      %p205 = scmp.eq.s32.totalorder %s27, 3
      %p206 = scmp.ne.s32.totalorder %s201, %s203
      %p207 = scmp.eq.s32.totalorder %s27, 0
      %p208 = por %p206, %p207
      %p209 = scmp.ne.s32.totalorder %s201, %s203
      %p210 = scmp.eq.s32.totalorder %s32, 3
      %p211 = por %p209, %p210
      %p212 = scmp.ne.s32.totalorder %s203, %s204
      %p213 = scmp.eq.s32.totalorder %s32, 0
      %p214 = por %p212, %p213
      %p215 = scmp.ne.s32.totalorder %s203, %s204
      %p216 = scmp.eq.s32.totalorder %s33, 3
      %p217 = por %p215, %p216
      %p219 = scmp.ne.s32.totalorder %s204, %s218
      %p220 = scmp.eq.s32.totalorder %s33, 0
      %p221 = por %p219, %p220
      %s223 = sadd.s32 %s222, 1
      %p226 = scmp.eq.s32.totalorder %s27, 3
      %p227 = scmp.ne.s32.totalorder %s222, %s224
      %p228 = scmp.eq.s32.totalorder %s27, 0
      %p229 = por %p227, %p228
      %p230 = scmp.ne.s32.totalorder %s222, %s224
      %p231 = scmp.eq.s32.totalorder %s32, 3
      %p232 = por %p230, %p231
      %p233 = scmp.ne.s32.totalorder %s224, %s225
      %p234 = scmp.eq.s32.totalorder %s32, 0
      %p235 = por %p233, %p234
      %p236 = scmp.ne.s32.totalorder %s224, %s225
      %p237 = scmp.eq.s32.totalorder %s33, 3
      %p238 = por %p236, %p237
      %p240 = scmp.ne.s32.totalorder %s225, %s239
      %p241 = scmp.eq.s32.totalorder %s33, 0
      %p242 = por %p240, %p241
      %s244 = sadd.s32 %s243, 1
      %p247 = scmp.eq.s32.totalorder %s27, 3
      %p248 = scmp.ne.s32.totalorder %s243, %s245
      %p249 = scmp.eq.s32.totalorder %s27, 0
      %p250 = por %p248, %p249
      %p251 = scmp.ne.s32.totalorder %s243, %s245
      %p252 = scmp.eq.s32.totalorder %s32, 3
      %p253 = por %p251, %p252
      %p254 = scmp.ne.s32.totalorder %s245, %s246
      %p255 = scmp.eq.s32.totalorder %s32, 0
      %p256 = por %p254, %p255
      %p257 = scmp.ne.s32.totalorder %s245, %s246
      %p258 = scmp.eq.s32.totalorder %s33, 3
      %p259 = por %p257, %p258
      %p261 = scmp.ne.s32.totalorder %s246, %s260
      %p262 = scmp.eq.s32.totalorder %s33, 0
      %p263 = por %p261, %p262
      %s265 = sadd.s32 %s264, 1
      %p268 = scmp.eq.s32.totalorder %s27, 3
      %p269 = scmp.ne.s32.totalorder %s264, %s266
      %p270 = scmp.eq.s32.totalorder %s27, 0
      %p271 = por %p269, %p270
      %p272 = scmp.ne.s32.totalorder %s264, %s266
      %p273 = scmp.eq.s32.totalorder %s32, 3
      %p274 = por %p272, %p273
      %p275 = scmp.ne.s32.totalorder %s266, %s267
      %p276 = scmp.eq.s32.totalorder %s32, 0
      %p277 = por %p275, %p276
      %p278 = scmp.ne.s32.totalorder %s266, %s267
      %p279 = scmp.eq.s32.totalorder %s33, 3
      %p280 = por %p278, %p279
      %p282 = scmp.ne.s32.totalorder %s267, %s281
      %p283 = scmp.eq.s32.totalorder %s33, 0
      %p284 = por %p282, %p283
      %s286 = sadd.s32 %s285, 1
      %p289 = scmp.eq.s32.totalorder %s27, 3
      %p290 = scmp.ne.s32.totalorder %s285, %s287
      %p291 = scmp.eq.s32.totalorder %s27, 0
      %p292 = por %p290, %p291
      %p293 = scmp.ne.s32.totalorder %s285, %s287
      %p294 = scmp.eq.s32.totalorder %s32, 3
      %p295 = por %p293, %p294
      %p296 = scmp.ne.s32.totalorder %s287, %s288
      %p297 = scmp.eq.s32.totalorder %s32, 0
      %p298 = por %p296, %p297
      %p299 = scmp.ne.s32.totalorder %s287, %s288
      %p300 = scmp.eq.s32.totalorder %s33, 3
      %p301 = por %p299, %p300
      %p303 = scmp.ne.s32.totalorder %s288, %s302
      %p304 = scmp.eq.s32.totalorder %s33, 0
      %p305 = por %p303, %p304
      %s307 = sadd.s32 %s306, 1
      %p310 = scmp.eq.s32.totalorder %s27, 3
      %p311 = scmp.ne.s32.totalorder %s306, %s308
      %p312 = scmp.eq.s32.totalorder %s27, 0
      %p313 = por %p311, %p312
      %p314 = scmp.ne.s32.totalorder %s306, %s308
      %p315 = scmp.eq.s32.totalorder %s32, 3
      %p316 = por %p314, %p315
      %p317 = scmp.ne.s32.totalorder %s308, %s309
      %p318 = scmp.eq.s32.totalorder %s32, 0
      %p319 = por %p317, %p318
      %p320 = scmp.ne.s32.totalorder %s308, %s309
      %p321 = scmp.eq.s32.totalorder %s33, 3
      %p322 = por %p320, %p321
      %p324 = scmp.ne.s32.totalorder %s309, %s323
      %p325 = scmp.eq.s32.totalorder %s33, 0
      %p326 = por %p324, %p325
      %s327 = ssub.s32 %s34, %s46
      %s328 = ssub.s32 %s35, %s42
      %s329 = sor.u32 %s327, %s328
      %p330 = scmp.eq.s32.totalorder %s329, 0
      %s332 = sadd.s32 %s331, 1
      %s333 = scalar_select %p330, %s331, %s332
      %p336 = pneg %p330
      %p337 = scmp.eq.s32.totalorder %s27, 3
      %p338 = por %p336, %p337
      %p339 = scmp.ne.s32.totalorder %s331, %s334
      %p340 = scmp.eq.s32.totalorder %s27, 0
      %p341 = por %p339, %p340
      %p342 = scmp.ne.s32.totalorder %s331, %s334
      %p343 = scmp.eq.s32.totalorder %s32, 3
      %p344 = por %p342, %p343
      %p345 = scmp.ne.s32.totalorder %s334, %s335
      %p346 = scmp.eq.s32.totalorder %s32, 0
      %p347 = por %p345, %p346
      %p348 = scmp.ne.s32.totalorder %s334, %s335
      %p349 = scmp.eq.s32.totalorder %s33, 3
      %p350 = por %p348, %p349
      %p352 = scmp.ne.s32.totalorder %s335, %s351
      %p353 = scmp.eq.s32.totalorder %s33, 0
      %p354 = por %p352, %p353
      %p355 = scmp.le.s32.totalorder 1, %s27
      %p356 = scmp.lt.s32.totalorder %s27, 5
      %p357 = pnand %p355, %p356
      %p358 = pneg %p357
      // Predicated region
      $region9: #{tpu_custom_call.1} parent=5 // pred_check
        _
      $region10: #{tpu_custom_call.1} parent=5 // pred_check_branch
        %360 = sbr.rel (%p357) target = $region12
      $region11: #{tpu_custom_call.1} parent=5 // pred_region
        %s361 = ssub.s32 %s27, 1
        // Predicated region
        $region13: #{tpu_custom_call.1} parent=11 // pred_check
          %p362 = pneg %p88
        $region14: #{tpu_custom_call.1} parent=11 // pred_check_branch
          %364 = sbr.rel (%p362) target = $region16
        $region15: #{tpu_custom_call.1} parent=11 // pred_region
          %s366 = ssub.s32 1024, 1024
          %367 = vsyncadd [#allocation7], %s366
          %s368 = sshll.u32 [#allocation6], 4
          %s369 = int_to_ptr.vmem [resolvable:$true] %s368
          %374 = dma.hbm_to_vmem [thread:$0]  %s1, 1024, %s369, [#allocation7], 64, 64, 4
        $region16: #{tpu_custom_call.1} parent=11 // pred_fallthru
          _
        // Predicated region
        $region17: #{tpu_custom_call.1} parent=11 // pred_check
          %p375 = pneg %p109
        $region18: #{tpu_custom_call.1} parent=11 // pred_check_branch
          %377 = sbr.rel (%p375) target = $region20
        $region19: #{tpu_custom_call.1} parent=11 // pred_region
          %s379 = ssub.s32 9216, 9216
          %380 = vsyncadd [#allocation7], %s379
          %s381 = sshll.u32 [#allocation8], 4
          %s382 = int_to_ptr.vmem [resolvable:$true] %s381
          %387 = dma.hbm_to_vmem [thread:$0]  %s2, 9216, %s382, [#allocation7], 64, 64, 4
        $region20: #{tpu_custom_call.1} parent=11 // pred_fallthru
          _
        // Predicated region
        $region21: #{tpu_custom_call.1} parent=11 // pred_check
          %p388 = pneg %p130
        $region22: #{tpu_custom_call.1} parent=11 // pred_check_branch
          %390 = sbr.rel (%p388) target = $region24
        $region23: #{tpu_custom_call.1} parent=11 // pred_region
          %s392 = ssub.s32 1024, 1024
          %393 = vsyncadd [#allocation10], %s392
          %s394 = sshll.u32 [#allocation9], 4
          %s395 = int_to_ptr.vmem [resolvable:$true] %s394
          %400 = dma.hbm_to_vmem [thread:$0]  %s3, 1024, %s395, [#allocation10], 64, 64, 4
        $region24: #{tpu_custom_call.1} parent=11 // pred_fallthru
          _
        // Predicated region
        $region25: #{tpu_custom_call.1} parent=11 // pred_check
          %p401 = pneg %p151
        $region26: #{tpu_custom_call.1} parent=11 // pred_check_branch
          %403 = sbr.rel (%p401) target = $region28
        $region27: #{tpu_custom_call.1} parent=11 // pred_region
          %s405 = ssub.s32 1024, 1024
          %406 = vsyncadd [#allocation10], %s405
          %s407 = sshll.u32 [#allocation11], 4
          %s408 = int_to_ptr.vmem [resolvable:$true] %s407
          %413 = dma.hbm_to_vmem [thread:$0]  %s4, 1024, %s408, [#allocation10], 64, 64, 4
        $region28: #{tpu_custom_call.1} parent=11 // pred_fallthru
          _
        // Predicated region
        $region29: #{tpu_custom_call.1} parent=11 // pred_check
          %p414 = pneg %p172
        $region30: #{tpu_custom_call.1} parent=11 // pred_check_branch
          %416 = sbr.rel (%p414) target = $region32
        $region31: #{tpu_custom_call.1} parent=11 // pred_region
          _
        $region32: #{tpu_custom_call.1} parent=11 // pred_fallthru
          _
        // Predicated region
        $region33: #{tpu_custom_call.1} parent=11 // pred_check
          %p417 = pneg %p193
        $region34: #{tpu_custom_call.1} parent=11 // pred_check_branch
          %419 = sbr.rel (%p417) target = $region36
        $region35: #{tpu_custom_call.1} parent=11 // pred_region
          _
        $region36: #{tpu_custom_call.1} parent=11 // pred_fallthru
          _
        // Predicated region
        $region37: #{tpu_custom_call.1} parent=11 // pred_check
          %p420 = pneg %p214
        $region38: #{tpu_custom_call.1} parent=11 // pred_check_branch
          %422 = sbr.rel (%p420) target = $region40
        $region39: #{tpu_custom_call.1} parent=11 // pred_region
          _
        $region40: #{tpu_custom_call.1} parent=11 // pred_fallthru
          _
        // Predicated region
        $region41: #{tpu_custom_call.1} parent=11 // pred_check
          %p423 = pneg %p235
        $region42: #{tpu_custom_call.1} parent=11 // pred_check_branch
          %425 = sbr.rel (%p423) target = $region44
        $region43: #{tpu_custom_call.1} parent=11 // pred_region
          _
        $region44: #{tpu_custom_call.1} parent=11 // pred_fallthru
          _
        // Predicated region
        $region45: #{tpu_custom_call.1} parent=11 // pred_check
          %p426 = pneg %p256
        $region46: #{tpu_custom_call.1} parent=11 // pred_check_branch
          %428 = sbr.rel (%p426) target = $region48
        $region47: #{tpu_custom_call.1} parent=11 // pred_region
          _
        $region48: #{tpu_custom_call.1} parent=11 // pred_fallthru
          _
        // Predicated region
        $region49: #{tpu_custom_call.1} parent=11 // pred_check
          %p429 = pneg %p277
        $region50: #{tpu_custom_call.1} parent=11 // pred_check_branch
          %431 = sbr.rel (%p429) target = $region52
        $region51: #{tpu_custom_call.1} parent=11 // pred_region
          _
        $region52: #{tpu_custom_call.1} parent=11 // pred_fallthru
          _
        // Predicated region
        $region53: #{tpu_custom_call.1} parent=11 // pred_check
          %p432 = pneg %p298
        $region54: #{tpu_custom_call.1} parent=11 // pred_check_branch
          %434 = sbr.rel (%p432) target = $region56
        $region55: #{tpu_custom_call.1} parent=11 // pred_region
          _
        $region56: #{tpu_custom_call.1} parent=11 // pred_fallthru
          _
        // Predicated region
        $region57: #{tpu_custom_call.1} parent=11 // pred_check
          %p435 = pneg %p319
        $region58: #{tpu_custom_call.1} parent=11 // pred_check_branch
          %437 = sbr.rel (%p435) target = $region60
        $region59: #{tpu_custom_call.1} parent=11 // pred_region
          _
        $region60: #{tpu_custom_call.1} parent=11 // pred_fallthru
          _
      $region12: #{tpu_custom_call.1} parent=5 // pred_fallthru
        _
      %p438 = scmp.lt.s32.totalorder %s27, 4
      // Predicated region
      $region61: #{tpu_custom_call.1} parent=5 // pred_check
        %p439 = pneg %p438
      $region62: #{tpu_custom_call.1} parent=5 // pred_check_branch
        %441 = sbr.rel (%p439) target = $region64
      $region63: #{tpu_custom_call.1} parent=5 // pred_region
        // Predicated region
        $region65: #{tpu_custom_call.1} parent=63 // pred_check
          %p442 = pneg %p61
        $region66: #{tpu_custom_call.1} parent=63 // pred_check_branch
          %444 = sbr.rel (%p442) target = $region68
        $region67: #{tpu_custom_call.1} parent=63 // pred_region
          %s445 = sand.u32 %s51, 1
          %s446 = scalar_lea.sflag [#allocation4], %s445
          %s447 = sand.u32 %s51, 1
          %s448 = smul.addr %s447, 80
          %s449 = scalar_lea.vmem [#allocation3], %s448
          %s451 = ssub.s32 1280, 1280
          %452 = vsyncadd %s446, %s451
          %s453 = smul.addr %s35, 20
          %s454 = smul.addr %s34, 40
          %s455 = sadd.s32 %s453, %s454
          %s456 = smul.addr %s455, 64
          %s457 = scalar_lea.hbm %s0, %s456
          %s458 = sshll.u32 %s449, 4
          %s459 = int_to_ptr.vmem [resolvable:$true] %s458
          %464 = dma.hbm_to_vmem [thread:$0]  %s457, 1280, %s459, %s446, 64, 64, 4
        $region68: #{tpu_custom_call.1} parent=63 // pred_fallthru
          _
      $region64: #{tpu_custom_call.1} parent=5 // pred_fallthru
        _
      %p465 = scmp.le.s32.totalorder 1, %s27
      %p466 = scmp.lt.s32.totalorder %s27, 5
      %p467 = pnand %p465, %p466
      %p468 = pneg %p467
      // Predicated region
      $region69: #{tpu_custom_call.1} parent=5 // pred_check
        _
      $region70: #{tpu_custom_call.1} parent=5 // pred_check_branch
        %470 = sbr.rel (%p467) target = $region72
      $region71: #{tpu_custom_call.1} parent=5 // pred_region
        %s471 = ssub.s32 %s27, 1
        %s472 = sand.u32 %s54, 1
        %s473 = scalar_lea.sflag [#allocation4], %s472
        %s474 = sand.u32 %s54, 1
        %s475 = smul.addr %s474, 80
        %s476 = scalar_lea.vmem [#allocation3], %s475
        // Predicated region
        $region73: #{tpu_custom_call.1} parent=71 // pred_check
          %p477 = pneg %p67
        $region74: #{tpu_custom_call.1} parent=71 // pred_check_branch
          %479 = sbr.rel (%p477) target = $region76
        $region75: #{tpu_custom_call.1} parent=71 // pred_region
          %480 = dma.done %s473, 1280
        $region76: #{tpu_custom_call.1} parent=71 // pred_fallthru
          _
        // Predicated region
        $region77: #{tpu_custom_call.1} parent=71 // pred_check
          %p481 = pneg %p88
        $region78: #{tpu_custom_call.1} parent=71 // pred_check_branch
          %483 = sbr.rel (%p481) target = $region80
        $region79: #{tpu_custom_call.1} parent=71 // pred_region
          %484 = dma.done [#allocation7], 1024
        $region80: #{tpu_custom_call.1} parent=71 // pred_fallthru
          _
        // Predicated region
        $region81: #{tpu_custom_call.1} parent=71 // pred_check
          %p485 = pneg %p109
        $region82: #{tpu_custom_call.1} parent=71 // pred_check_branch
          %487 = sbr.rel (%p485) target = $region84
        $region83: #{tpu_custom_call.1} parent=71 // pred_region
          %488 = dma.done [#allocation7], 9216
        $region84: #{tpu_custom_call.1} parent=71 // pred_fallthru
          _
        // Predicated region
        $region85: #{tpu_custom_call.1} parent=71 // pred_check
          %p489 = pneg %p130
        $region86: #{tpu_custom_call.1} parent=71 // pred_check_branch
          %491 = sbr.rel (%p489) target = $region88
        $region87: #{tpu_custom_call.1} parent=71 // pred_region
          %492 = dma.done [#allocation10], 1024
        $region88: #{tpu_custom_call.1} parent=71 // pred_fallthru
          _
        // Predicated region
        $region89: #{tpu_custom_call.1} parent=71 // pred_check
          %p493 = pneg %p151
        $region90: #{tpu_custom_call.1} parent=71 // pred_check_branch
          %495 = sbr.rel (%p493) target = $region92
        $region91: #{tpu_custom_call.1} parent=71 // pred_region
          %496 = dma.done [#allocation10], 1024
        $region92: #{tpu_custom_call.1} parent=71 // pred_fallthru
          _
        %s497 = sand.u32 %s54, 1
        %s498 = scalar_lea.sflag [#allocation4], %s497
        %s499 = sand.u32 %s54, 1
        %s500 = smul.addr %s499, 80
        %s501 = scalar_lea.vmem [#allocation3], %s500
        %p502 = pneg %p67
        %p503 = pneg %p64
        %p504 = pneg %p88
        %p505 = pneg %p85
        %p506 = pneg %p109
        %p507 = pneg %p106
        %p508 = pneg %p130
        %p509 = pneg %p127
        %p510 = pneg %p151
        %p511 = pneg %p148
        %p512 = pneg %p172
        %p513 = pneg %p169
        %p514 = pneg %p193
        %p515 = pneg %p190
        %p516 = pneg %p214
        %p517 = pneg %p211
        %p518 = pneg %p235
        %p519 = pneg %p232
        %p520 = pneg %p256
        %p521 = pneg %p253
        %p522 = pneg %p277
        %p523 = pneg %p274
        %p524 = pneg %p298
        %p525 = pneg %p295
        %p526 = pneg %p319
        %p527 = pneg %p316
        %p528 = pneg %p347
        %p529 = pneg %p344
        %s530 = sand.u32 %s334, 1
        %s531 = scalar_lea.sflag [#allocation5], %s530
        %s532 = sand.u32 %s334, 1
        %s533 = smul.addr %s532, 64
        %s534 = scalar_lea.vmem [#allocation12], %s533
        %s535 = smul.u32 16, %s37
        %v537 = vld [vmem:[%s476 + $0x8] sm:$0xf]
        %v538 = vld [vmem:[%s476 + $0xc] sm:$0xf]
        %v539 = vld [vmem:[%s476 + $0x10] sm:$0xf]
        %v540 = vld [vmem:[%s476 + $0x14] sm:$0xf]
        %v541 = vld [vmem:[%s476 + $0x18] sm:$0xf]
        %v542 = vld [vmem:[%s476 + $0x1c] sm:$0xf]
        %v543 = vld [vmem:[%s476 + $0x20] sm:$0xf]
        %v544 = vld [vmem:[%s476 + $0x24] sm:$0xf]
        %v545 = vld [vmem:[%s476 + $0x28] sm:$0xf]
        %v546 = vld [vmem:[%s476 + $0x2c] sm:$0xf]
        %v547 = vld [vmem:[%s476 + $0x30] sm:$0xf]
        %v548 = vld [vmem:[%s476 + $0x34] sm:$0xf]
        %v549 = vld [vmem:[%s476 + $0x38] sm:$0xf]
        %v550 = vld [vmem:[%s476 + $0x3c] sm:$0xf]
        %v551 = vld [vmem:[%s476 + $0x40] sm:$0xf]
        %v552 = vld [vmem:[%s476 + $0x44] sm:$0xf]
        %v553 = vld [vmem:[#allocation11] sm:$0xf]
        %v554 = vld [vmem:[#allocation11 + $0x4] sm:$0xf]
        %v555 = vld [vmem:[#allocation11 + $0x8] sm:$0xf]
        %v556 = vld [vmem:[#allocation11 + $0xc] sm:$0xf]
        %v557 = vld [vmem:[#allocation11 + $0x10] sm:$0xf]
        %v558 = vld [vmem:[#allocation11 + $0x14] sm:$0xf]
        %v559 = vld [vmem:[#allocation11 + $0x18] sm:$0xf]
        %v560 = vld [vmem:[#allocation11 + $0x1c] sm:$0xf]
        %v561 = vld [vmem:[#allocation11 + $0x20] sm:$0xf]
        %v562 = vld [vmem:[#allocation11 + $0x24] sm:$0xf]
        %v563 = vld [vmem:[#allocation11 + $0x28] sm:$0xf]
        %v564 = vld [vmem:[#allocation11 + $0x2c] sm:$0xf]
        %v565 = vld [vmem:[#allocation11 + $0x30] sm:$0xf]
        %v566 = vld [vmem:[#allocation11 + $0x34] sm:$0xf]
        %v567 = vld [vmem:[#allocation11 + $0x38] sm:$0xf]
        %v568 = vld [vmem:[#allocation11 + $0x3c] sm:$0xf]
        %v585 = vunpack.c.l.b16 %v537
        %v586 = vunpack.c.l.b16 %v538
        %v587 = vunpack.c.l.b16 %v539
        %v588 = vunpack.c.l.b16 %v540
        %v589 = vunpack.c.l.b16 %v541
        %v590 = vunpack.c.l.b16 %v542
        %v591 = vunpack.c.l.b16 %v543
        %v592 = vunpack.c.l.b16 %v544
        %v593 = vunpack.c.l.b16 %v545
        %v594 = vunpack.c.l.b16 %v546
        %v595 = vunpack.c.l.b16 %v547
        %v596 = vunpack.c.l.b16 %v548
        %v597 = vunpack.c.l.b16 %v549
        %v598 = vunpack.c.l.b16 %v550
        %v599 = vunpack.c.l.b16 %v551
        %v600 = vunpack.c.l.b16 %v552
        %v601 = vpack.c.b16 %v586, %v585
        %v602 = vpack.c.b16 %v588, %v587
        %v603 = vpack.c.b16 %v590, %v589
        %v604 = vpack.c.b16 %v592, %v591
        %v605 = vpack.c.b16 %v594, %v593
        %v606 = vpack.c.b16 %v596, %v595
        %v607 = vpack.c.b16 %v598, %v597
        %v608 = vpack.c.b16 %v600, %v599
        %v633 = vunpack.c.l.b16 %v553
        %v634 = vunpack.c.l.b16 %v554
        %v635 = vunpack.c.l.b16 %v555
        %v636 = vunpack.c.l.b16 %v556
        %v637 = vunpack.c.l.b16 %v557
        %v638 = vunpack.c.l.b16 %v558
        %v639 = vunpack.c.l.b16 %v559
        %v640 = vunpack.c.l.b16 %v560
        %v641 = vunpack.c.l.b16 %v561
        %v642 = vunpack.c.l.b16 %v562
        %v643 = vunpack.c.l.b16 %v563
        %v644 = vunpack.c.l.b16 %v564
        %v645 = vunpack.c.l.b16 %v565
        %v646 = vunpack.c.l.b16 %v566
        %v647 = vunpack.c.l.b16 %v567
        %v648 = vunpack.c.l.b16 %v568
        %v649 = vpack.c.b16 %v634, %v633
        %v650 = vpack.c.b16 %v636, %v635
        %v651 = vpack.c.b16 %v638, %v637
        %v652 = vpack.c.b16 %v640, %v639
        %v653 = vpack.c.b16 %v642, %v641
        %v654 = vpack.c.b16 %v644, %v643
        %v655 = vpack.c.b16 %v646, %v645
        %v656 = vpack.c.b16 %v648, %v647
        %665 = vmatprep.subr.bf16.mxu0 0
        %666 = vmatpush1.bf16.msra.mxu0 %v656
        %667 = vmatprep.subr.bf16.mxu0 0
        %668 = vmatpush1.bf16.msra.mxu0 %v655
        %669 = vmatprep.subr.bf16.mxu0 0
        %670 = vmatpush1.bf16.msra.mxu0 %v654
        %671 = vmatprep.subr.bf16.mxu0 0
        %672 = vmatpush1.bf16.msra.mxu0 %v653
        %673 = vmatprep.subr.bf16.mxu0 0
        %674 = vmatpush1.bf16.msra.mxu0 %v652
        %675 = vmatprep.subr.bf16.mxu0 0
        %676 = vmatpush1.bf16.msra.mxu0 %v651
        %677 = vmatprep.subr.bf16.mxu0 0
        %678 = vmatpush1.bf16.msra.mxu0 %v650
        %679 = vmatprep.subr.bf16.mxu0 0
        %680 = vmatpush1.bf16.msra.mxu0 %v649
        %681 = vmatprep.subr.bf16.mxu0 0
        %682 = vmatpush2.bf16.msra.mxu0 0
        %683 = vmatprep.subr.bf16.mxu0 0
        %684 = vmatpush2.bf16.msra.mxu0 0
        %685 = vmatprep.subr.bf16.mxu0 0
        %686 = vmatpush2.bf16.msra.mxu0 0
        %687 = vmatprep.subr.bf16.mxu0 0
        %688 = vmatpush2.bf16.msra.mxu0 0
        %689 = vmatprep.subr.bf16.mxu0 0
        %690 = vmatpush2.bf16.msra.mxu0 0
        %691 = vmatprep.subr.bf16.mxu0 0
        %692 = vmatpush2.bf16.msra.mxu0 0
        %693 = vmatprep.subr.bf16.mxu0 0
        %694 = vmatpush2.bf16.msra.mxu0 0
        %695 = vmatprep.subr.bf16.mxu0 0
        %696 = vmatpush2.bf16.msra.mxu0 0
        %697 = vmatprep.mubr.bf16.mxu0 0
        %698 = vmatmul.mubr.bf16.gmra.mxu0 %v601
        %v699 = vpop.f32.mrf.mxu0
        %v700 = vadd.f32 0.0, %v699
        %v701 = vpop.f32.mrf.mxu0
        %v702 = vpop.f32.mrf.mxu0
        %v703 = vadd.f32 0.0, %v702
        %v704 = vpop.f32.mrf.mxu0
        %705 = vmatprep.mubr.bf16.mxu0 0
        %706 = vmatmul.mubr.bf16.gmra.mxu0 %v602
        %v707 = vpop.f32.mrf.mxu0
        %v708 = vadd.f32 0.0, %v707
        %v709 = vpop.f32.mrf.mxu0
        %v710 = vpop.f32.mrf.mxu0
        %v711 = vadd.f32 0.0, %v710
        %v712 = vpop.f32.mrf.mxu0
        %713 = vmatprep.mubr.bf16.mxu0 0
        %714 = vmatmul.mubr.bf16.gmra.mxu0 %v603
        %v715 = vpop.f32.mrf.mxu0
        %v716 = vadd.f32 0.0, %v715
        %v717 = vpop.f32.mrf.mxu0
        %v718 = vpop.f32.mrf.mxu0
        %v719 = vadd.f32 0.0, %v718
        %v720 = vpop.f32.mrf.mxu0
        %721 = vmatprep.mubr.bf16.mxu0 0
        %722 = vmatmul.mubr.bf16.gmra.mxu0 %v604
        %v723 = vpop.f32.mrf.mxu0
        %v724 = vadd.f32 0.0, %v723
        %v725 = vpop.f32.mrf.mxu0
        %v726 = vpop.f32.mrf.mxu0
        %v727 = vadd.f32 0.0, %v726
        %v728 = vpop.f32.mrf.mxu0
        %729 = vmatprep.mubr.bf16.mxu0 0
        %730 = vmatmul.mubr.bf16.gmra.mxu0 %v605
        %v731 = vpop.f32.mrf.mxu0
        %v732 = vadd.f32 0.0, %v731
        %v733 = vpop.f32.mrf.mxu0
        %v734 = vpop.f32.mrf.mxu0
        %v735 = vadd.f32 0.0, %v734
        %v736 = vpop.f32.mrf.mxu0
        %737 = vmatprep.mubr.bf16.mxu0 0
        %738 = vmatmul.mubr.bf16.gmra.mxu0 %v606
        %v739 = vpop.f32.mrf.mxu0
        %v740 = vadd.f32 0.0, %v739
        %v741 = vpop.f32.mrf.mxu0
        %v742 = vpop.f32.mrf.mxu0
        %v743 = vadd.f32 0.0, %v742
        %v744 = vpop.f32.mrf.mxu0
        %745 = vmatprep.mubr.bf16.mxu0 0
        %746 = vmatmul.mubr.bf16.gmra.mxu0 %v607
        %v747 = vpop.f32.mrf.mxu0
        %v748 = vadd.f32 0.0, %v747
        %v749 = vpop.f32.mrf.mxu0
        %v750 = vpop.f32.mrf.mxu0
        %v751 = vadd.f32 0.0, %v750
        %v752 = vpop.f32.mrf.mxu0
        %753 = vmatprep.mubr.bf16.mxu0 0
        %754 = vmatmul.mubr.bf16.gmra.mxu0 %v608
        %v755 = vpop.f32.mrf.mxu0
        %v756 = vadd.f32 0.0, %v755
        %v757 = vpop.f32.mrf.mxu0
        %v758 = vpop.f32.mrf.mxu0
        %v759 = vadd.f32 0.0, %v758
        %v760 = vpop.f32.mrf.mxu0
        %761 = vdwg.mxu0
        %v762 = vld [vmem:[%s11] sm:$0x1]
        %v764 = vlaneseq
        %v765 = vshrl.u32 %v764, 7
        %v766 = vsub.s32 0, %v765
        %v767 = vrot.slane %v762, %v766
        %v769 = vmul.f32 %v700, %v767
        %v770 = vmul.f32 %v703, %v767
        %v771 = vmul.f32 %v708, %v767
        %v772 = vmul.f32 %v711, %v767
        %v773 = vmul.f32 %v716, %v767
        %v774 = vmul.f32 %v719, %v767
        %v775 = vmul.f32 %v724, %v767
        %v776 = vmul.f32 %v727, %v767
        %v777 = vmul.f32 %v732, %v767
        %v778 = vmul.f32 %v735, %v767
        %v779 = vmul.f32 %v740, %v767
        %v780 = vmul.f32 %v743, %v767
        %v781 = vmul.f32 %v748, %v767
        %v782 = vmul.f32 %v751, %v767
        %v783 = vmul.f32 %v756, %v767
        %v784 = vmul.f32 %v759, %v767
        %v785 = vld [vmem:[%s12] sm:$0x1]
        %v787 = vlaneseq
        %v788 = vshrl.u32 %v787, 7
        %v789 = vsub.s32 0, %v788
        %v790 = vrot.slane %v785, %v789
        %v792 = vadd.f32 %v769, %v790
        %v793 = vadd.f32 %v770, %v790
        %v794 = vadd.f32 %v771, %v790
        %v795 = vadd.f32 %v772, %v790
        %v796 = vadd.f32 %v773, %v790
        %v797 = vadd.f32 %v774, %v790
        %v798 = vadd.f32 %v775, %v790
        %v799 = vadd.f32 %v776, %v790
        %v800 = vadd.f32 %v777, %v790
        %v801 = vadd.f32 %v778, %v790
        %v802 = vadd.f32 %v779, %v790
        %v803 = vadd.f32 %v780, %v790
        %v804 = vadd.f32 %v781, %v790
        %v805 = vadd.f32 %v782, %v790
        %v806 = vadd.f32 %v783, %v790
        %v807 = vadd.f32 %v784, %v790
        %v808 = vpack.c.bf16 %v793, %v792
        %v809 = vpack.c.bf16 %v795, %v794
        %v810 = vpack.c.bf16 %v797, %v796
        %v811 = vpack.c.bf16 %v799, %v798
        %v812 = vpack.c.bf16 %v801, %v800
        %v813 = vpack.c.bf16 %v803, %v802
        %v814 = vpack.c.bf16 %v805, %v804
        %v815 = vpack.c.bf16 %v807, %v806
        %v824 = vunpack.c.l.b16 %v808
        %v825 = vunpack.c.h.b16 %v808
        %v826 = vunpack.c.l.b16 %v809
        %v827 = vunpack.c.h.b16 %v809
        %v828 = vunpack.c.l.b16 %v810
        %v829 = vunpack.c.h.b16 %v810
        %v830 = vunpack.c.l.b16 %v811
        %v831 = vunpack.c.h.b16 %v811
        %v832 = vunpack.c.l.b16 %v812
        %v833 = vunpack.c.h.b16 %v812
        %v834 = vunpack.c.l.b16 %v813
        %v835 = vunpack.c.h.b16 %v813
        %v836 = vunpack.c.l.b16 %v814
        %v837 = vunpack.c.h.b16 %v814
        %v838 = vunpack.c.l.b16 %v815
        %v839 = vunpack.c.h.b16 %v815
        %v840 = vpack.c.b16 %v824, %v824
        %v841 = vpack.c.b16 %v825, %v825
        %v842 = vpack.c.b16 %v826, %v826
        %v843 = vpack.c.b16 %v827, %v827
        %v844 = vpack.c.b16 %v828, %v828
        %v845 = vpack.c.b16 %v829, %v829
        %v846 = vpack.c.b16 %v830, %v830
        %v847 = vpack.c.b16 %v831, %v831
        %v848 = vpack.c.b16 %v832, %v832
        %v849 = vpack.c.b16 %v833, %v833
        %v850 = vpack.c.b16 %v834, %v834
        %v851 = vpack.c.b16 %v835, %v835
        %v852 = vpack.c.b16 %v836, %v836
        %v853 = vpack.c.b16 %v837, %v837
        %v854 = vpack.c.b16 %v838, %v838
        %v855 = vpack.c.b16 %v839, %v839
        %872 = vst [vmem:[%s534] sm:$0xf] %v840
        %873 = vst [vmem:[%s534 + $0x4] sm:$0xf] %v841
        %874 = vst [vmem:[%s534 + $0x8] sm:$0xf] %v842
        %875 = vst [vmem:[%s534 + $0xc] sm:$0xf] %v843
        %876 = vst [vmem:[%s534 + $0x10] sm:$0xf] %v844
        %877 = vst [vmem:[%s534 + $0x14] sm:$0xf] %v845
        %878 = vst [vmem:[%s534 + $0x18] sm:$0xf] %v846
        %879 = vst [vmem:[%s534 + $0x1c] sm:$0xf] %v847
        %880 = vst [vmem:[%s534 + $0x20] sm:$0xf] %v848
        %881 = vst [vmem:[%s534 + $0x24] sm:$0xf] %v849
        %882 = vst [vmem:[%s534 + $0x28] sm:$0xf] %v850
        %883 = vst [vmem:[%s534 + $0x2c] sm:$0xf] %v851
        %884 = vst [vmem:[%s534 + $0x30] sm:$0xf] %v852
        %885 = vst [vmem:[%s534 + $0x34] sm:$0xf] %v853
        %886 = vst [vmem:[%s534 + $0x38] sm:$0xf] %v854
        %887 = vst [vmem:[%s534 + $0x3c] sm:$0xf] %v855
        %v888 = vld [vmem:[%s476] sm:$0xf]
        %v889 = vld [vmem:[%s476 + $0x4] sm:$0xf]
        %v890 = vld [vmem:[%s476 + $0x8] sm:$0xf]
        %v891 = vld [vmem:[%s476 + $0xc] sm:$0xf]
        %v892 = vld [vmem:[%s476 + $0x10] sm:$0xf]
        %v893 = vld [vmem:[%s476 + $0x14] sm:$0xf]
        %v894 = vld [vmem:[%s476 + $0x18] sm:$0xf]
        %v895 = vld [vmem:[%s476 + $0x1c] sm:$0xf]
        %v896 = vld [vmem:[%s476 + $0x20] sm:$0xf]
        %v897 = vld [vmem:[%s476 + $0x24] sm:$0xf]
        %v898 = vld [vmem:[%s476 + $0x28] sm:$0xf]
        %v899 = vld [vmem:[%s476 + $0x2c] sm:$0xf]
        %v900 = vld [vmem:[%s476 + $0x30] sm:$0xf]
        %v901 = vld [vmem:[%s476 + $0x34] sm:$0xf]
        %v902 = vld [vmem:[%s476 + $0x38] sm:$0xf]
        %v903 = vld [vmem:[%s476 + $0x3c] sm:$0xf]
        %v904 = vld [vmem:[%s476 + $0x40] sm:$0xf]
        %v905 = vld [vmem:[%s476 + $0x44] sm:$0xf]
        %v906 = vld [vmem:[%s476 + $0x48] sm:$0xf]
        %v907 = vld [vmem:[%s476 + $0x4c] sm:$0xf]
        %v908 = vld [vmem:[#allocation6] sm:$0xf]
        %v909 = vld [vmem:[#allocation6 + $0x4] sm:$0xf]
        %v910 = vld [vmem:[#allocation6 + $0x8] sm:$0xf]
        %v911 = vld [vmem:[#allocation6 + $0xc] sm:$0xf]
        %v912 = vld [vmem:[#allocation6 + $0x10] sm:$0xf]
        %v913 = vld [vmem:[#allocation6 + $0x14] sm:$0xf]
        %v914 = vld [vmem:[#allocation6 + $0x18] sm:$0xf]
        %v915 = vld [vmem:[#allocation6 + $0x1c] sm:$0xf]
        %v916 = vld [vmem:[#allocation6 + $0x20] sm:$0xf]
        %v917 = vld [vmem:[#allocation6 + $0x24] sm:$0xf]
        %v918 = vld [vmem:[#allocation6 + $0x28] sm:$0xf]
        %v919 = vld [vmem:[#allocation6 + $0x2c] sm:$0xf]
        %v920 = vld [vmem:[#allocation6 + $0x30] sm:$0xf]
        %v921 = vld [vmem:[#allocation6 + $0x34] sm:$0xf]
        %v922 = vld [vmem:[#allocation6 + $0x38] sm:$0xf]
        %v923 = vld [vmem:[#allocation6 + $0x3c] sm:$0xf]
        %v944 = vunpack.c.l.b16 %v888
        %v945 = vunpack.c.l.b16 %v889
        %v946 = vunpack.c.l.b16 %v890
        %v947 = vunpack.c.l.b16 %v891
        %v948 = vunpack.c.l.b16 %v892
        %v949 = vunpack.c.l.b16 %v893
        %v950 = vunpack.c.l.b16 %v894
        %v951 = vunpack.c.l.b16 %v895
        %v952 = vunpack.c.l.b16 %v896
        %v953 = vunpack.c.l.b16 %v897
        %v954 = vunpack.c.l.b16 %v898
        %v955 = vunpack.c.l.b16 %v899
        %v956 = vunpack.c.l.b16 %v900
        %v957 = vunpack.c.l.b16 %v901
        %v958 = vunpack.c.l.b16 %v902
        %v959 = vunpack.c.l.b16 %v903
        %v960 = vunpack.c.l.b16 %v904
        %v961 = vunpack.c.l.b16 %v905
        %v962 = vunpack.c.l.b16 %v906
        %v963 = vunpack.c.l.b16 %v907
        %v964 = vpack.c.b16 %v945, %v944
        %v965 = vpack.c.b16 %v947, %v946
        %v966 = vpack.c.b16 %v949, %v948
        %v967 = vpack.c.b16 %v951, %v950
        %v968 = vpack.c.b16 %v953, %v952
        %v969 = vpack.c.b16 %v955, %v954
        %v970 = vpack.c.b16 %v957, %v956
        %v971 = vpack.c.b16 %v959, %v958
        %v972 = vpack.c.b16 %v961, %v960
        %v973 = vpack.c.b16 %v963, %v962
        %v1000 = vunpack.c.l.b16 %v908
        %v1001 = vunpack.c.l.b16 %v909
        %v1002 = vunpack.c.l.b16 %v910
        %v1003 = vunpack.c.l.b16 %v911
        %v1004 = vunpack.c.l.b16 %v912
        %v1005 = vunpack.c.l.b16 %v913
        %v1006 = vunpack.c.l.b16 %v914
        %v1007 = vunpack.c.l.b16 %v915
        %v1008 = vunpack.c.l.b16 %v916
        %v1009 = vunpack.c.l.b16 %v917
        %v1010 = vunpack.c.l.b16 %v918
        %v1011 = vunpack.c.l.b16 %v919
        %v1012 = vunpack.c.l.b16 %v920
        %v1013 = vunpack.c.l.b16 %v921
        %v1014 = vunpack.c.l.b16 %v922
        %v1015 = vunpack.c.l.b16 %v923
        %v1016 = vpack.c.b16 %v1001, %v1000
        %v1017 = vpack.c.b16 %v1003, %v1002
        %v1018 = vpack.c.b16 %v1005, %v1004
        %v1019 = vpack.c.b16 %v1007, %v1006
        %v1020 = vpack.c.b16 %v1009, %v1008
        %v1021 = vpack.c.b16 %v1011, %v1010
        %v1022 = vpack.c.b16 %v1013, %v1012
        %v1023 = vpack.c.b16 %v1015, %v1014
        %1032 = vmatprep.subr.bf16.mxu0 0
        %1033 = vmatpush1.bf16.msra.mxu0 %v1023
        %1034 = vmatprep.subr.bf16.mxu0 0
        %1035 = vmatpush1.bf16.msra.mxu0 %v1022
        %1036 = vmatprep.subr.bf16.mxu0 0
        %1037 = vmatpush1.bf16.msra.mxu0 %v1021
        %1038 = vmatprep.subr.bf16.mxu0 0
        %1039 = vmatpush1.bf16.msra.mxu0 %v1020
        %1040 = vmatprep.subr.bf16.mxu0 0
        %1041 = vmatpush1.bf16.msra.mxu0 %v1019
        %1042 = vmatprep.subr.bf16.mxu0 0
        %1043 = vmatpush1.bf16.msra.mxu0 %v1018
        %1044 = vmatprep.subr.bf16.mxu0 0
        %1045 = vmatpush1.bf16.msra.mxu0 %v1017
        %1046 = vmatprep.subr.bf16.mxu0 0
        %1047 = vmatpush1.bf16.msra.mxu0 %v1016
        %1048 = vmatprep.subr.bf16.mxu0 0
        %1049 = vmatpush2.bf16.msra.mxu0 0
        %1050 = vmatprep.subr.bf16.mxu0 0
        %1051 = vmatpush2.bf16.msra.mxu0 0
        %1052 = vmatprep.subr.bf16.mxu0 0
        %1053 = vmatpush2.bf16.msra.mxu0 0
        %1054 = vmatprep.subr.bf16.mxu0 0
        %1055 = vmatpush2.bf16.msra.mxu0 0
        %1056 = vmatprep.subr.bf16.mxu0 0
        %1057 = vmatpush2.bf16.msra.mxu0 0
        %1058 = vmatprep.subr.bf16.mxu0 0
        %1059 = vmatpush2.bf16.msra.mxu0 0
        %1060 = vmatprep.subr.bf16.mxu0 0
        %1061 = vmatpush2.bf16.msra.mxu0 0
        %1062 = vmatprep.subr.bf16.mxu0 0
        %1063 = vmatpush2.bf16.msra.mxu0 0
        %1064 = vmatprep.mubr.bf16.mxu0 0
        %1065 = vmatmul.mubr.bf16.gmra.mxu0 %v964
        %v1066 = vpop.f32.mrf.mxu0
        %v1067 = vadd.f32 0.0, %v1066
        %v1068 = vpop.f32.mrf.mxu0
        %v1069 = vpop.f32.mrf.mxu0
        %v1070 = vadd.f32 0.0, %v1069
        %v1071 = vpop.f32.mrf.mxu0
        %1072 = vmatprep.mubr.bf16.mxu0 0
        %1073 = vmatmul.mubr.bf16.gmra.mxu0 %v965
        %v1074 = vpop.f32.mrf.mxu0
        %v1075 = vadd.f32 0.0, %v1074
        %v1076 = vpop.f32.mrf.mxu0
        %v1077 = vpop.f32.mrf.mxu0
        %v1078 = vadd.f32 0.0, %v1077
        %v1079 = vpop.f32.mrf.mxu0
        %1080 = vmatprep.mubr.bf16.mxu0 0
        %1081 = vmatmul.mubr.bf16.gmra.mxu0 %v966
        %v1082 = vpop.f32.mrf.mxu0
        %v1083 = vadd.f32 0.0, %v1082
        %v1084 = vpop.f32.mrf.mxu0
        %v1085 = vpop.f32.mrf.mxu0
        %v1086 = vadd.f32 0.0, %v1085
        %v1087 = vpop.f32.mrf.mxu0
        %1088 = vmatprep.mubr.bf16.mxu0 0
        %1089 = vmatmul.mubr.bf16.gmra.mxu0 %v967
        %v1090 = vpop.f32.mrf.mxu0
        %v1091 = vadd.f32 0.0, %v1090
        %v1092 = vpop.f32.mrf.mxu0
        %v1093 = vpop.f32.mrf.mxu0
        %v1094 = vadd.f32 0.0, %v1093
        %v1095 = vpop.f32.mrf.mxu0
        %1096 = vmatprep.mubr.bf16.mxu0 0
        %1097 = vmatmul.mubr.bf16.gmra.mxu0 %v968
        %v1098 = vpop.f32.mrf.mxu0
        %v1099 = vadd.f32 0.0, %v1098
        %v1100 = vpop.f32.mrf.mxu0
        %v1101 = vpop.f32.mrf.mxu0
        %v1102 = vadd.f32 0.0, %v1101
        %v1103 = vpop.f32.mrf.mxu0
        %1104 = vmatprep.mubr.bf16.mxu0 0
        %1105 = vmatmul.mubr.bf16.gmra.mxu0 %v969
        %v1106 = vpop.f32.mrf.mxu0
        %v1107 = vadd.f32 0.0, %v1106
        %v1108 = vpop.f32.mrf.mxu0
        %v1109 = vpop.f32.mrf.mxu0
        %v1110 = vadd.f32 0.0, %v1109
        %v1111 = vpop.f32.mrf.mxu0
        %1112 = vmatprep.mubr.bf16.mxu0 0
        %1113 = vmatmul.mubr.bf16.gmra.mxu0 %v970
        %v1114 = vpop.f32.mrf.mxu0
        %v1115 = vadd.f32 0.0, %v1114
        %v1116 = vpop.f32.mrf.mxu0
        %v1117 = vpop.f32.mrf.mxu0
        %v1118 = vadd.f32 0.0, %v1117
        %v1119 = vpop.f32.mrf.mxu0
        %1120 = vmatprep.mubr.bf16.mxu0 0
        %1121 = vmatmul.mubr.bf16.gmra.mxu0 %v971
        %v1122 = vpop.f32.mrf.mxu0
        %v1123 = vadd.f32 0.0, %v1122
        %v1124 = vpop.f32.mrf.mxu0
        %v1125 = vpop.f32.mrf.mxu0
        %v1126 = vadd.f32 0.0, %v1125
        %v1127 = vpop.f32.mrf.mxu0
        %1128 = vmatprep.mubr.bf16.mxu0 0
        %1129 = vmatmul.mubr.bf16.gmra.mxu0 %v972
        %v1130 = vpop.f32.mrf.mxu0
        %v1131 = vadd.f32 0.0, %v1130
        %v1132 = vpop.f32.mrf.mxu0
        %v1133 = vpop.f32.mrf.mxu0
        %v1134 = vadd.f32 0.0, %v1133
        %v1135 = vpop.f32.mrf.mxu0
        %1136 = vmatprep.mubr.bf16.mxu0 0
        %1137 = vmatmul.mubr.bf16.gmra.mxu0 %v973
        %v1138 = vpop.f32.mrf.mxu0
        %v1139 = vadd.f32 0.0, %v1138
        %v1140 = vpop.f32.mrf.mxu0
        %v1141 = vpop.f32.mrf.mxu0
        %v1142 = vadd.f32 0.0, %v1141
        %v1143 = vpop.f32.mrf.mxu0
        %1144 = vdwg.mxu0
        %v1145 = vld [vmem:[%s5] sm:$0x1]
        %v1147 = vlaneseq
        %v1148 = vshrl.u32 %v1147, 7
        %v1149 = vsub.s32 0, %v1148
        %v1150 = vrot.slane %v1145, %v1149
        %v1152 = vmul.f32 %v1067, %v1150
        %v1153 = vmul.f32 %v1070, %v1150
        %v1154 = vmul.f32 %v1075, %v1150
        %v1155 = vmul.f32 %v1078, %v1150
        %v1156 = vmul.f32 %v1083, %v1150
        %v1157 = vmul.f32 %v1086, %v1150
        %v1158 = vmul.f32 %v1091, %v1150
        %v1159 = vmul.f32 %v1094, %v1150
        %v1160 = vmul.f32 %v1099, %v1150
        %v1161 = vmul.f32 %v1102, %v1150
        %v1162 = vmul.f32 %v1107, %v1150
        %v1163 = vmul.f32 %v1110, %v1150
        %v1164 = vmul.f32 %v1115, %v1150
        %v1165 = vmul.f32 %v1118, %v1150
        %v1166 = vmul.f32 %v1123, %v1150
        %v1167 = vmul.f32 %v1126, %v1150
        %v1168 = vmul.f32 %v1131, %v1150
        %v1169 = vmul.f32 %v1134, %v1150
        %v1170 = vmul.f32 %v1139, %v1150
        %v1171 = vmul.f32 %v1142, %v1150
        %v1172 = vld [vmem:[%s6] sm:$0x1]
        %v1174 = vlaneseq
        %v1175 = vshrl.u32 %v1174, 7
        %v1176 = vsub.s32 0, %v1175
        %v1177 = vrot.slane %v1172, %v1176
        %v1179 = vadd.f32 %v1152, %v1177
        %v1180 = vadd.f32 %v1153, %v1177
        %v1181 = vadd.f32 %v1154, %v1177
        %v1182 = vadd.f32 %v1155, %v1177
        %v1183 = vadd.f32 %v1156, %v1177
        %v1184 = vadd.f32 %v1157, %v1177
        %v1185 = vadd.f32 %v1158, %v1177
        %v1186 = vadd.f32 %v1159, %v1177
        %v1187 = vadd.f32 %v1160, %v1177
        %v1188 = vadd.f32 %v1161, %v1177
        %v1189 = vadd.f32 %v1162, %v1177
        %v1190 = vadd.f32 %v1163, %v1177
        %v1191 = vadd.f32 %v1164, %v1177
        %v1192 = vadd.f32 %v1165, %v1177
        %v1193 = vadd.f32 %v1166, %v1177
        %v1194 = vadd.f32 %v1167, %v1177
        %v1195 = vadd.f32 %v1168, %v1177
        %v1196 = vadd.f32 %v1169, %v1177
        %v1197 = vadd.f32 %v1170, %v1177
        %v1198 = vadd.f32 %v1171, %v1177
        %v1199 = vmax.f32 %v1179, 0.0
        %v1200 = vmax.f32 %v1180, 0.0
        %v1201 = vmax.f32 %v1181, 0.0
        %v1202 = vmax.f32 %v1182, 0.0
        %v1203 = vmax.f32 %v1183, 0.0
        %v1204 = vmax.f32 %v1184, 0.0
        %v1205 = vmax.f32 %v1185, 0.0
        %v1206 = vmax.f32 %v1186, 0.0
        %v1207 = vmax.f32 %v1187, 0.0
        %v1208 = vmax.f32 %v1188, 0.0
        %v1209 = vmax.f32 %v1189, 0.0
        %v1210 = vmax.f32 %v1190, 0.0
        %v1211 = vmax.f32 %v1191, 0.0
        %v1212 = vmax.f32 %v1192, 0.0
        %v1213 = vmax.f32 %v1193, 0.0
        %v1214 = vmax.f32 %v1194, 0.0
        %v1215 = vmax.f32 %v1195, 0.0
        %v1216 = vmax.f32 %v1196, 0.0
        %v1217 = vmax.f32 %v1197, 0.0
        %v1218 = vmax.f32 %v1198, 0.0
        %v1219 = vlaneseq
        %v1220 = vshrl.u32 %v1219, 7
        %v1221 = vadd.s32 %v1220, 8
        %v1222 = vadd.s32 %v1220, 16
        %v1223 = vadd.s32 %v1220, 24
        %v1224 = vadd.s32 %v1220, 32
        %v1225 = vadd.s32 %v1220, 40
        %v1226 = vadd.s32 %v1220, 48
        %v1227 = vadd.s32 %v1220, 56
        %v1228 = vadd.s32 %v1220, 64
        %v1229 = vadd.s32 %v1220, 72
        %v1230 = vadd.s32 %v1220, 80
        %v1231 = vadd.s32 %v1220, 88
        %v1232 = vadd.s32 %v1220, 96
        %v1233 = vadd.s32 %v1220, 104
        %v1234 = vadd.s32 %v1220, 112
        %v1235 = vadd.s32 %v1220, 120
        %v1236 = vadd.s32 %v1220, 128
        %v1237 = vadd.s32 %v1220, 136
        %v1238 = vadd.s32 %v1220, 144
        %v1239 = vadd.s32 %v1220, 152
        %vm1240 = vcmp.lt.s32.totalorder %v1220, 0
        %v1241 = vsub.s32 0, %v1220
        %v1242 = vsel %vm1240, %v1241, %v1220
        %v1243 = vshrl.u32 %v1242, 4
        %v1244 = vand.u32 %v1242, 15
        %v1245 = vsub.s32 0, %v1244
        %v1246 = vsel %vm1240, %v1245, %v1244
        %vm1247 = vcmp.lt.s32.totalorder %v1221, 0
        %v1248 = vsub.s32 0, %v1221
        %v1249 = vsel %vm1247, %v1248, %v1221
        %v1250 = vshrl.u32 %v1249, 4
        %v1251 = vand.u32 %v1249, 15
        %v1252 = vsub.s32 0, %v1251
        %v1253 = vsel %vm1247, %v1252, %v1251
        %vm1254 = vcmp.lt.s32.totalorder %v1222, 0
        %v1255 = vsub.s32 0, %v1222
        %v1256 = vsel %vm1254, %v1255, %v1222
        %v1257 = vshrl.u32 %v1256, 4
        %v1258 = vand.u32 %v1256, 15
        %v1259 = vsub.s32 0, %v1258
        %v1260 = vsel %vm1254, %v1259, %v1258
        %vm1261 = vcmp.lt.s32.totalorder %v1223, 0
        %v1262 = vsub.s32 0, %v1223
        %v1263 = vsel %vm1261, %v1262, %v1223
        %v1264 = vshrl.u32 %v1263, 4
        %v1265 = vand.u32 %v1263, 15
        %v1266 = vsub.s32 0, %v1265
        %v1267 = vsel %vm1261, %v1266, %v1265
        %vm1268 = vcmp.lt.s32.totalorder %v1224, 0
        %v1269 = vsub.s32 0, %v1224
        %v1270 = vsel %vm1268, %v1269, %v1224
        %v1271 = vshrl.u32 %v1270, 4
        %v1272 = vand.u32 %v1270, 15
        %v1273 = vsub.s32 0, %v1272
        %v1274 = vsel %vm1268, %v1273, %v1272
        %vm1275 = vcmp.lt.s32.totalorder %v1225, 0
        %v1276 = vsub.s32 0, %v1225
        %v1277 = vsel %vm1275, %v1276, %v1225
        %v1278 = vshrl.u32 %v1277, 4
        %v1279 = vand.u32 %v1277, 15
        %v1280 = vsub.s32 0, %v1279
        %v1281 = vsel %vm1275, %v1280, %v1279
        %vm1282 = vcmp.lt.s32.totalorder %v1226, 0
        %v1283 = vsub.s32 0, %v1226
        %v1284 = vsel %vm1282, %v1283, %v1226
        %v1285 = vshrl.u32 %v1284, 4
        %v1286 = vand.u32 %v1284, 15
        %v1287 = vsub.s32 0, %v1286
        %v1288 = vsel %vm1282, %v1287, %v1286
        %vm1289 = vcmp.lt.s32.totalorder %v1227, 0
        %v1290 = vsub.s32 0, %v1227
        %v1291 = vsel %vm1289, %v1290, %v1227
        %v1292 = vshrl.u32 %v1291, 4
        %v1293 = vand.u32 %v1291, 15
        %v1294 = vsub.s32 0, %v1293
        %v1295 = vsel %vm1289, %v1294, %v1293
        %vm1296 = vcmp.lt.s32.totalorder %v1228, 0
        %v1297 = vsub.s32 0, %v1228
        %v1298 = vsel %vm1296, %v1297, %v1228
        %v1299 = vshrl.u32 %v1298, 4
        %v1300 = vand.u32 %v1298, 15
        %v1301 = vsub.s32 0, %v1300
        %v1302 = vsel %vm1296, %v1301, %v1300
        %vm1303 = vcmp.lt.s32.totalorder %v1229, 0
        %v1304 = vsub.s32 0, %v1229
        %v1305 = vsel %vm1303, %v1304, %v1229
        %v1306 = vshrl.u32 %v1305, 4
        %v1307 = vand.u32 %v1305, 15
        %v1308 = vsub.s32 0, %v1307
        %v1309 = vsel %vm1303, %v1308, %v1307
        %vm1310 = vcmp.lt.s32.totalorder %v1230, 0
        %v1311 = vsub.s32 0, %v1230
        %v1312 = vsel %vm1310, %v1311, %v1230
        %v1313 = vshrl.u32 %v1312, 4
        %v1314 = vand.u32 %v1312, 15
        %v1315 = vsub.s32 0, %v1314
        %v1316 = vsel %vm1310, %v1315, %v1314
        %vm1317 = vcmp.lt.s32.totalorder %v1231, 0
        %v1318 = vsub.s32 0, %v1231
        %v1319 = vsel %vm1317, %v1318, %v1231
        %v1320 = vshrl.u32 %v1319, 4
        %v1321 = vand.u32 %v1319, 15
        %v1322 = vsub.s32 0, %v1321
        %v1323 = vsel %vm1317, %v1322, %v1321
        %vm1324 = vcmp.lt.s32.totalorder %v1232, 0
        %v1325 = vsub.s32 0, %v1232
        %v1326 = vsel %vm1324, %v1325, %v1232
        %v1327 = vshrl.u32 %v1326, 4
        %v1328 = vand.u32 %v1326, 15
        %v1329 = vsub.s32 0, %v1328
        %v1330 = vsel %vm1324, %v1329, %v1328
        %vm1331 = vcmp.lt.s32.totalorder %v1233, 0
        %v1332 = vsub.s32 0, %v1233
        %v1333 = vsel %vm1331, %v1332, %v1233
        %v1334 = vshrl.u32 %v1333, 4
        %v1335 = vand.u32 %v1333, 15
        %v1336 = vsub.s32 0, %v1335
        %v1337 = vsel %vm1331, %v1336, %v1335
        %vm1338 = vcmp.lt.s32.totalorder %v1234, 0
        %v1339 = vsub.s32 0, %v1234
        %v1340 = vsel %vm1338, %v1339, %v1234
        %v1341 = vshrl.u32 %v1340, 4
        %v1342 = vand.u32 %v1340, 15
        %v1343 = vsub.s32 0, %v1342
        %v1344 = vsel %vm1338, %v1343, %v1342
        %vm1345 = vcmp.lt.s32.totalorder %v1235, 0
        %v1346 = vsub.s32 0, %v1235
        %v1347 = vsel %vm1345, %v1346, %v1235
        %v1348 = vshrl.u32 %v1347, 4
        %v1349 = vand.u32 %v1347, 15
        %v1350 = vsub.s32 0, %v1349
        %v1351 = vsel %vm1345, %v1350, %v1349
        %vm1352 = vcmp.lt.s32.totalorder %v1236, 0
        %v1353 = vsub.s32 0, %v1236
        %v1354 = vsel %vm1352, %v1353, %v1236
        %v1355 = vshrl.u32 %v1354, 4
        %v1356 = vand.u32 %v1354, 15
        %v1357 = vsub.s32 0, %v1356
        %v1358 = vsel %vm1352, %v1357, %v1356
        %vm1359 = vcmp.lt.s32.totalorder %v1237, 0
        %v1360 = vsub.s32 0, %v1237
        %v1361 = vsel %vm1359, %v1360, %v1237
        %v1362 = vshrl.u32 %v1361, 4
        %v1363 = vand.u32 %v1361, 15
        %v1364 = vsub.s32 0, %v1363
        %v1365 = vsel %vm1359, %v1364, %v1363
        %vm1366 = vcmp.lt.s32.totalorder %v1238, 0
        %v1367 = vsub.s32 0, %v1238
        %v1368 = vsel %vm1366, %v1367, %v1238
        %v1369 = vshrl.u32 %v1368, 4
        %v1370 = vand.u32 %v1368, 15
        %v1371 = vsub.s32 0, %v1370
        %v1372 = vsel %vm1366, %v1371, %v1370
        %vm1373 = vcmp.lt.s32.totalorder %v1239, 0
        %v1374 = vsub.s32 0, %v1239
        %v1375 = vsel %vm1373, %v1374, %v1239
        %v1376 = vshrl.u32 %v1375, 4
        %v1377 = vand.u32 %v1375, 15
        %v1378 = vsub.s32 0, %v1377
        %v1379 = vsel %vm1373, %v1378, %v1377
        %vm1380 = vcmp.ne.s32.totalorder %v1246, 0
        %vm1381 = vcmp.ne.s32.totalorder %v1253, 0
        %vm1382 = vcmp.ne.s32.totalorder %v1260, 0
        %vm1383 = vcmp.ne.s32.totalorder %v1267, 0
        %vm1384 = vcmp.ne.s32.totalorder %v1274, 0
        %vm1385 = vcmp.ne.s32.totalorder %v1281, 0
        %vm1386 = vcmp.ne.s32.totalorder %v1288, 0
        %vm1387 = vcmp.ne.s32.totalorder %v1295, 0
        %vm1388 = vcmp.ne.s32.totalorder %v1302, 0
        %vm1389 = vcmp.ne.s32.totalorder %v1309, 0
        %vm1390 = vcmp.ne.s32.totalorder %v1316, 0
        %vm1391 = vcmp.ne.s32.totalorder %v1323, 0
        %vm1392 = vcmp.ne.s32.totalorder %v1330, 0
        %vm1393 = vcmp.ne.s32.totalorder %v1337, 0
        %vm1394 = vcmp.ne.s32.totalorder %v1344, 0
        %vm1395 = vcmp.ne.s32.totalorder %v1351, 0
        %vm1396 = vcmp.ne.s32.totalorder %v1358, 0
        %vm1397 = vcmp.ne.s32.totalorder %v1365, 0
        %vm1398 = vcmp.ne.s32.totalorder %v1372, 0
        %vm1399 = vcmp.ne.s32.totalorder %v1379, 0
        %vm1400 = vcmp.lt.s32.totalorder %v1246, 0
        %vm1401 = vcmp.lt.s32.totalorder %v1253, 0
        %vm1402 = vcmp.lt.s32.totalorder %v1260, 0
        %vm1403 = vcmp.lt.s32.totalorder %v1267, 0
        %vm1404 = vcmp.lt.s32.totalorder %v1274, 0
        %vm1405 = vcmp.lt.s32.totalorder %v1281, 0
        %vm1406 = vcmp.lt.s32.totalorder %v1288, 0
        %vm1407 = vcmp.lt.s32.totalorder %v1295, 0
        %vm1408 = vcmp.lt.s32.totalorder %v1302, 0
        %vm1409 = vcmp.lt.s32.totalorder %v1309, 0
        %vm1410 = vcmp.lt.s32.totalorder %v1316, 0
        %vm1411 = vcmp.lt.s32.totalorder %v1323, 0
        %vm1412 = vcmp.lt.s32.totalorder %v1330, 0
        %vm1413 = vcmp.lt.s32.totalorder %v1337, 0
        %vm1414 = vcmp.lt.s32.totalorder %v1344, 0
        %vm1415 = vcmp.lt.s32.totalorder %v1351, 0
        %vm1416 = vcmp.lt.s32.totalorder %v1358, 0
        %vm1417 = vcmp.lt.s32.totalorder %v1365, 0
        %vm1418 = vcmp.lt.s32.totalorder %v1372, 0
        %vm1419 = vcmp.lt.s32.totalorder %v1379, 0
        %vm1420 = vmand %vm1400, %vm1380
        %vm1421 = vmand %vm1401, %vm1381
        %vm1422 = vmand %vm1402, %vm1382
        %vm1423 = vmand %vm1403, %vm1383
        %vm1424 = vmand %vm1404, %vm1384
        %vm1425 = vmand %vm1405, %vm1385
        %vm1426 = vmand %vm1406, %vm1386
        %vm1427 = vmand %vm1407, %vm1387
        %vm1428 = vmand %vm1408, %vm1388
        %vm1429 = vmand %vm1409, %vm1389
        %vm1430 = vmand %vm1410, %vm1390
        %vm1431 = vmand %vm1411, %vm1391
        %vm1432 = vmand %vm1412, %vm1392
        %vm1433 = vmand %vm1413, %vm1393
        %vm1434 = vmand %vm1414, %vm1394
        %vm1435 = vmand %vm1415, %vm1395
        %vm1436 = vmand %vm1416, %vm1396
        %vm1437 = vmand %vm1417, %vm1397
        %vm1438 = vmand %vm1418, %vm1398
        %vm1439 = vmand %vm1419, %vm1399
        %v1440 = vadd.s32 %v1246, 16
        %v1441 = vadd.s32 %v1253, 16
        %v1442 = vadd.s32 %v1260, 16
        %v1443 = vadd.s32 %v1267, 16
        %v1444 = vadd.s32 %v1274, 16
        %v1445 = vadd.s32 %v1281, 16
        %v1446 = vadd.s32 %v1288, 16
        %v1447 = vadd.s32 %v1295, 16
        %v1448 = vadd.s32 %v1302, 16
        %v1449 = vadd.s32 %v1309, 16
        %v1450 = vadd.s32 %v1316, 16
        %v1451 = vadd.s32 %v1323, 16
        %v1452 = vadd.s32 %v1330, 16
        %v1453 = vadd.s32 %v1337, 16
        %v1454 = vadd.s32 %v1344, 16
        %v1455 = vadd.s32 %v1351, 16
        %v1456 = vadd.s32 %v1358, 16
        %v1457 = vadd.s32 %v1365, 16
        %v1458 = vadd.s32 %v1372, 16
        %v1459 = vadd.s32 %v1379, 16
        %v1460 = vsel %vm1420, %v1440, %v1246
        %v1461 = vsel %vm1421, %v1441, %v1253
        %v1462 = vsel %vm1422, %v1442, %v1260
        %v1463 = vsel %vm1423, %v1443, %v1267
        %v1464 = vsel %vm1424, %v1444, %v1274
        %v1465 = vsel %vm1425, %v1445, %v1281
        %v1466 = vsel %vm1426, %v1446, %v1288
        %v1467 = vsel %vm1427, %v1447, %v1295
        %v1468 = vsel %vm1428, %v1448, %v1302
        %v1469 = vsel %vm1429, %v1449, %v1309
        %v1470 = vsel %vm1430, %v1450, %v1316
        %v1471 = vsel %vm1431, %v1451, %v1323
        %v1472 = vsel %vm1432, %v1452, %v1330
        %v1473 = vsel %vm1433, %v1453, %v1337
        %v1474 = vsel %vm1434, %v1454, %v1344
        %v1475 = vsel %vm1435, %v1455, %v1351
        %v1476 = vsel %vm1436, %v1456, %v1358
        %v1477 = vsel %vm1437, %v1457, %v1365
        %v1478 = vsel %vm1438, %v1458, %v1372
        %v1479 = vsel %vm1439, %v1459, %v1379
        %vm1480 = vcmp.ne.s32.totalorder %v1460, 0
        %vm1481 = vcmp.ne.s32.totalorder %v1461, 0
        %vm1482 = vcmp.ne.s32.totalorder %v1462, 0
        %vm1483 = vcmp.ne.s32.totalorder %v1463, 0
        %vm1484 = vcmp.ne.s32.totalorder %v1464, 0
        %vm1485 = vcmp.ne.s32.totalorder %v1465, 0
        %vm1486 = vcmp.ne.s32.totalorder %v1466, 0
        %vm1487 = vcmp.ne.s32.totalorder %v1467, 0
        %vm1488 = vcmp.ne.s32.totalorder %v1468, 0
        %vm1489 = vcmp.ne.s32.totalorder %v1469, 0
        %vm1490 = vcmp.ne.s32.totalorder %v1470, 0
        %vm1491 = vcmp.ne.s32.totalorder %v1471, 0
        %vm1492 = vcmp.ne.s32.totalorder %v1472, 0
        %vm1493 = vcmp.ne.s32.totalorder %v1473, 0
        %vm1494 = vcmp.ne.s32.totalorder %v1474, 0
        %vm1495 = vcmp.ne.s32.totalorder %v1475, 0
        %vm1496 = vcmp.ne.s32.totalorder %v1476, 0
        %vm1497 = vcmp.ne.s32.totalorder %v1477, 0
        %vm1498 = vcmp.ne.s32.totalorder %v1478, 0
        %vm1499 = vcmp.ne.s32.totalorder %v1479, 0
        %vm1500 = vcmp.ne.s32.totalorder %v1460, 15
        %vm1501 = vcmp.ne.s32.totalorder %v1461, 15
        %vm1502 = vcmp.ne.s32.totalorder %v1462, 15
        %vm1503 = vcmp.ne.s32.totalorder %v1463, 15
        %vm1504 = vcmp.ne.s32.totalorder %v1464, 15
        %vm1505 = vcmp.ne.s32.totalorder %v1465, 15
        %vm1506 = vcmp.ne.s32.totalorder %v1466, 15
        %vm1507 = vcmp.ne.s32.totalorder %v1467, 15
        %vm1508 = vcmp.ne.s32.totalorder %v1468, 15
        %vm1509 = vcmp.ne.s32.totalorder %v1469, 15
        %vm1510 = vcmp.ne.s32.totalorder %v1470, 15
        %vm1511 = vcmp.ne.s32.totalorder %v1471, 15
        %vm1512 = vcmp.ne.s32.totalorder %v1472, 15
        %vm1513 = vcmp.ne.s32.totalorder %v1473, 15
        %vm1514 = vcmp.ne.s32.totalorder %v1474, 15
        %vm1515 = vcmp.ne.s32.totalorder %v1475, 15
        %vm1516 = vcmp.ne.s32.totalorder %v1476, 15
        %vm1517 = vcmp.ne.s32.totalorder %v1477, 15
        %vm1518 = vcmp.ne.s32.totalorder %v1478, 15
        %vm1519 = vcmp.ne.s32.totalorder %v1479, 15
        %v1520 = vpack.c.bf16 %v1200, %v1199
        %v1521 = vpack.c.bf16 %v1202, %v1201
        %v1522 = vpack.c.bf16 %v1204, %v1203
        %v1523 = vpack.c.bf16 %v1206, %v1205
        %v1524 = vpack.c.bf16 %v1208, %v1207
        %v1525 = vpack.c.bf16 %v1210, %v1209
        %v1526 = vpack.c.bf16 %v1212, %v1211
        %v1527 = vpack.c.bf16 %v1214, %v1213
        %v1528 = vpack.c.bf16 %v1216, %v1215
        %v1529 = vpack.c.bf16 %v1218, %v1217
        %v1540 = vunpack.c.l.b16 %v1520
        %v1541 = vunpack.c.h.b16 %v1520
        %v1542 = vunpack.c.l.b16 %v1521
        %v1543 = vunpack.c.h.b16 %v1521
        %v1544 = vunpack.c.l.b16 %v1522
        %v1545 = vunpack.c.h.b16 %v1522
        %v1546 = vunpack.c.l.b16 %v1523
        %v1547 = vunpack.c.h.b16 %v1523
        %v1548 = vunpack.c.l.b16 %v1524
        %v1549 = vunpack.c.h.b16 %v1524
        %v1550 = vunpack.c.l.b16 %v1525
        %v1551 = vunpack.c.h.b16 %v1525
        %v1552 = vunpack.c.l.b16 %v1526
        %v1553 = vunpack.c.h.b16 %v1526
        %v1554 = vunpack.c.l.b16 %v1527
        %v1555 = vunpack.c.h.b16 %v1527
        %v1556 = vunpack.c.l.b16 %v1528
        %v1557 = vunpack.c.h.b16 %v1528
        %v1558 = vunpack.c.l.b16 %v1529
        %v1559 = vunpack.c.h.b16 %v1529
        %v1560 = vpack.c.b16 %v1540, %v1540
        %v1561 = vpack.c.b16 %v1541, %v1541
        %v1562 = vpack.c.b16 %v1542, %v1542
        %v1563 = vpack.c.b16 %v1543, %v1543
        %v1564 = vpack.c.b16 %v1544, %v1544
        %v1565 = vpack.c.b16 %v1545, %v1545
        %v1566 = vpack.c.b16 %v1546, %v1546
        %v1567 = vpack.c.b16 %v1547, %v1547
        %v1568 = vpack.c.b16 %v1548, %v1548
        %v1569 = vpack.c.b16 %v1549, %v1549
        %v1570 = vpack.c.b16 %v1550, %v1550
        %v1571 = vpack.c.b16 %v1551, %v1551
        %v1572 = vpack.c.b16 %v1552, %v1552
        %v1573 = vpack.c.b16 %v1553, %v1553
        %v1574 = vpack.c.b16 %v1554, %v1554
        %v1575 = vpack.c.b16 %v1555, %v1555
        %v1576 = vpack.c.b16 %v1556, %v1556
        %v1577 = vpack.c.b16 %v1557, %v1557
        %v1578 = vpack.c.b16 %v1558, %v1558
        %v1579 = vpack.c.b16 %v1559, %v1559
        %s1600 = scalar_lea.vmem [#allocation2], 80
        %1601 = vst [vmem:[%s1600] sm:$0xf] %v1560
        %1602 = vst [vmem:[%s1600 + $0x4] sm:$0xf] %v1561
        %1603 = vst [vmem:[%s1600 + $0x8] sm:$0xf] %v1562
        %1604 = vst [vmem:[%s1600 + $0xc] sm:$0xf] %v1563
        %1605 = vst [vmem:[%s1600 + $0x10] sm:$0xf] %v1564
        %1606 = vst [vmem:[%s1600 + $0x14] sm:$0xf] %v1565
        %1607 = vst [vmem:[%s1600 + $0x18] sm:$0xf] %v1566
        %1608 = vst [vmem:[%s1600 + $0x1c] sm:$0xf] %v1567
        %1609 = vst [vmem:[%s1600 + $0x20] sm:$0xf] %v1568
        %1610 = vst [vmem:[%s1600 + $0x24] sm:$0xf] %v1569
        %1611 = vst [vmem:[%s1600 + $0x28] sm:$0xf] %v1570
        %1612 = vst [vmem:[%s1600 + $0x2c] sm:$0xf] %v1571
        %1613 = vst [vmem:[%s1600 + $0x30] sm:$0xf] %v1572
        %1614 = vst [vmem:[%s1600 + $0x34] sm:$0xf] %v1573
        %1615 = vst [vmem:[%s1600 + $0x38] sm:$0xf] %v1574
        %1616 = vst [vmem:[%s1600 + $0x3c] sm:$0xf] %v1575
        %1617 = vst [vmem:[%s1600 + $0x40] sm:$0xf] %v1576
        %1618 = vst [vmem:[%s1600 + $0x44] sm:$0xf] %v1577
        %1619 = vst [vmem:[%s1600 + $0x48] sm:$0xf] %v1578
        %1620 = vst [vmem:[%s1600 + $0x4c] sm:$0xf] %v1579
        %v1621 = vrot.slane %v1199, 7
        %v1622 = vrot.slane %v1200, 7
        %v1623 = vrot.slane %v1201, 7
        %v1624 = vrot.slane %v1202, 7
        %v1625 = vrot.slane %v1203, 7
        %v1626 = vrot.slane %v1204, 7
        %v1627 = vrot.slane %v1205, 7
        %v1628 = vrot.slane %v1206, 7
        %v1629 = vrot.slane %v1207, 7
        %v1630 = vrot.slane %v1208, 7
        %v1631 = vrot.slane %v1209, 7
        %v1632 = vrot.slane %v1210, 7
        %v1633 = vrot.slane %v1211, 7
        %v1634 = vrot.slane %v1212, 7
        %v1635 = vrot.slane %v1213, 7
        %v1636 = vrot.slane %v1214, 7
        %v1637 = vrot.slane %v1215, 7
        %v1638 = vrot.slane %v1216, 7
        %v1639 = vrot.slane %v1217, 7
        %v1640 = vrot.slane %v1218, 7
        %vm1641 = vcmp.lt.s32.totalorder %v1220, 1
        %v1642 = vsel %vm1641, %v1639, %v1640
        %v1643 = vsel %vm1641, %v1638, %v1639
        %v1644 = vsel %vm1641, %v1637, %v1638
        %v1645 = vsel %vm1641, %v1636, %v1637
        %v1646 = vsel %vm1641, %v1635, %v1636
        %v1647 = vsel %vm1641, %v1634, %v1635
        %v1648 = vsel %vm1641, %v1633, %v1634
        %v1649 = vsel %vm1641, %v1632, %v1633
        %v1650 = vsel %vm1641, %v1631, %v1632
        %v1651 = vsel %vm1641, %v1630, %v1631
        %v1652 = vsel %vm1641, %v1629, %v1630
        %v1653 = vsel %vm1641, %v1628, %v1629
        %v1654 = vsel %vm1641, %v1627, %v1628
        %v1655 = vsel %vm1641, %v1626, %v1627
        %v1656 = vsel %vm1641, %v1625, %v1626
        %v1657 = vsel %vm1641, %v1624, %v1625
        %v1658 = vsel %vm1641, %v1623, %v1624
        %v1659 = vsel %vm1641, %v1622, %v1623
        %v1660 = vsel %vm1641, %v1621, %v1622
        %v1661 = vsel %vm1641, %v1640, %v1621
        %v1662 = vsel %vm1480, 1, 0
        %v1663 = vsel %vm1481, 1, 0
        %v1664 = vsel %vm1482, 1, 0
        %v1665 = vsel %vm1483, 1, 0
        %v1666 = vsel %vm1484, 1, 0
        %v1667 = vsel %vm1485, 1, 0
        %v1668 = vsel %vm1486, 1, 0
        %v1669 = vsel %vm1487, 1, 0
        %v1670 = vsel %vm1488, 1, 0
        %v1671 = vsel %vm1489, 1, 0
        %v1672 = vsel %vm1490, 1, 0
        %v1673 = vsel %vm1491, 1, 0
        %v1674 = vsel %vm1492, 1, 0
        %v1675 = vsel %vm1493, 1, 0
        %v1676 = vsel %vm1494, 1, 0
        %v1677 = vsel %vm1495, 1, 0
        %v1678 = vsel %vm1496, 1, 0
        %v1679 = vsel %vm1497, 1, 0
        %v1680 = vsel %vm1498, 1, 0
        %v1681 = vsel %vm1499, 1, 0
        %vm1682 = vcmp.eq.s32.totalorder %v1662, 1
        %vm1683 = vcmp.eq.s32.totalorder %v1663, 1
        %vm1684 = vcmp.eq.s32.totalorder %v1664, 1
        %vm1685 = vcmp.eq.s32.totalorder %v1665, 1
        %vm1686 = vcmp.eq.s32.totalorder %v1666, 1
        %vm1687 = vcmp.eq.s32.totalorder %v1667, 1
        %vm1688 = vcmp.eq.s32.totalorder %v1668, 1
        %vm1689 = vcmp.eq.s32.totalorder %v1669, 1
        %vm1690 = vcmp.eq.s32.totalorder %v1670, 1
        %vm1691 = vcmp.eq.s32.totalorder %v1671, 1
        %vm1692 = vcmp.eq.s32.totalorder %v1672, 1
        %vm1693 = vcmp.eq.s32.totalorder %v1673, 1
        %vm1694 = vcmp.eq.s32.totalorder %v1674, 1
        %vm1695 = vcmp.eq.s32.totalorder %v1675, 1
        %vm1696 = vcmp.eq.s32.totalorder %v1676, 1
        %vm1697 = vcmp.eq.s32.totalorder %v1677, 1
        %vm1698 = vcmp.eq.s32.totalorder %v1678, 1
        %vm1699 = vcmp.eq.s32.totalorder %v1679, 1
        %vm1700 = vcmp.eq.s32.totalorder %v1680, 1
        %vm1701 = vcmp.eq.s32.totalorder %v1681, 1
        %v1702 = vsel %vm1682, %v1661, 0.0
        %v1703 = vsel %vm1683, %v1660, 0.0
        %v1704 = vsel %vm1684, %v1659, 0.0
        %v1705 = vsel %vm1685, %v1658, 0.0
        %v1706 = vsel %vm1686, %v1657, 0.0
        %v1707 = vsel %vm1687, %v1656, 0.0
        %v1708 = vsel %vm1688, %v1655, 0.0
        %v1709 = vsel %vm1689, %v1654, 0.0
        %v1710 = vsel %vm1690, %v1653, 0.0
        %v1711 = vsel %vm1691, %v1652, 0.0
        %v1712 = vsel %vm1692, %v1651, 0.0
        %v1713 = vsel %vm1693, %v1650, 0.0
        %v1714 = vsel %vm1694, %v1649, 0.0
        %v1715 = vsel %vm1695, %v1648, 0.0
        %v1716 = vsel %vm1696, %v1647, 0.0
        %v1717 = vsel %vm1697, %v1646, 0.0
        %v1718 = vsel %vm1698, %v1645, 0.0
        %v1719 = vsel %vm1699, %v1644, 0.0
        %v1720 = vsel %vm1700, %v1643, 0.0
        %v1721 = vsel %vm1701, %v1642, 0.0
        %v1722 = vpack.c.bf16 %v1703, %v1702
        %v1723 = vpack.c.bf16 %v1705, %v1704
        %v1724 = vpack.c.bf16 %v1707, %v1706
        %v1725 = vpack.c.bf16 %v1709, %v1708
        %v1726 = vpack.c.bf16 %v1711, %v1710
        %v1727 = vpack.c.bf16 %v1713, %v1712
        %v1728 = vpack.c.bf16 %v1715, %v1714
        %v1729 = vpack.c.bf16 %v1717, %v1716
        %v1730 = vpack.c.bf16 %v1719, %v1718
        %v1731 = vpack.c.bf16 %v1721, %v1720
        %v1742 = vunpack.c.l.b16 %v1722
        %v1743 = vunpack.c.h.b16 %v1722
        %v1744 = vunpack.c.l.b16 %v1723
        %v1745 = vunpack.c.h.b16 %v1723
        %v1746 = vunpack.c.l.b16 %v1724
        %v1747 = vunpack.c.h.b16 %v1724
        %v1748 = vunpack.c.l.b16 %v1725
        %v1749 = vunpack.c.h.b16 %v1725
        %v1750 = vunpack.c.l.b16 %v1726
        %v1751 = vunpack.c.h.b16 %v1726
        %v1752 = vunpack.c.l.b16 %v1727
        %v1753 = vunpack.c.h.b16 %v1727
        %v1754 = vunpack.c.l.b16 %v1728
        %v1755 = vunpack.c.h.b16 %v1728
        %v1756 = vunpack.c.l.b16 %v1729
        %v1757 = vunpack.c.h.b16 %v1729
        %v1758 = vunpack.c.l.b16 %v1730
        %v1759 = vunpack.c.h.b16 %v1730
        %v1760 = vunpack.c.l.b16 %v1731
        %v1761 = vunpack.c.h.b16 %v1731
        %v1762 = vpack.c.b16 %v1742, %v1742
        %v1763 = vpack.c.b16 %v1743, %v1743
        %v1764 = vpack.c.b16 %v1744, %v1744
        %v1765 = vpack.c.b16 %v1745, %v1745
        %v1766 = vpack.c.b16 %v1746, %v1746
        %v1767 = vpack.c.b16 %v1747, %v1747
        %v1768 = vpack.c.b16 %v1748, %v1748
        %v1769 = vpack.c.b16 %v1749, %v1749
        %v1770 = vpack.c.b16 %v1750, %v1750
        %v1771 = vpack.c.b16 %v1751, %v1751
        %v1772 = vpack.c.b16 %v1752, %v1752
        %v1773 = vpack.c.b16 %v1753, %v1753
        %v1774 = vpack.c.b16 %v1754, %v1754
        %v1775 = vpack.c.b16 %v1755, %v1755
        %v1776 = vpack.c.b16 %v1756, %v1756
        %v1777 = vpack.c.b16 %v1757, %v1757
        %v1778 = vpack.c.b16 %v1758, %v1758
        %v1779 = vpack.c.b16 %v1759, %v1759
        %v1780 = vpack.c.b16 %v1760, %v1760
        %v1781 = vpack.c.b16 %v1761, %v1761
        %1802 = vst [vmem:[#allocation2] sm:$0xf] %v1762
        %1803 = vst [vmem:[#allocation2 + $0x4] sm:$0xf] %v1763
        %1804 = vst [vmem:[#allocation2 + $0x8] sm:$0xf] %v1764
        %1805 = vst [vmem:[#allocation2 + $0xc] sm:$0xf] %v1765
        %1806 = vst [vmem:[#allocation2 + $0x10] sm:$0xf] %v1766
        %1807 = vst [vmem:[#allocation2 + $0x14] sm:$0xf] %v1767
        %1808 = vst [vmem:[#allocation2 + $0x18] sm:$0xf] %v1768
        %1809 = vst [vmem:[#allocation2 + $0x1c] sm:$0xf] %v1769
        %1810 = vst [vmem:[#allocation2 + $0x20] sm:$0xf] %v1770
        %1811 = vst [vmem:[#allocation2 + $0x24] sm:$0xf] %v1771
        %1812 = vst [vmem:[#allocation2 + $0x28] sm:$0xf] %v1772
        %1813 = vst [vmem:[#allocation2 + $0x2c] sm:$0xf] %v1773
        %1814 = vst [vmem:[#allocation2 + $0x30] sm:$0xf] %v1774
        %1815 = vst [vmem:[#allocation2 + $0x34] sm:$0xf] %v1775
        %1816 = vst [vmem:[#allocation2 + $0x38] sm:$0xf] %v1776
        %1817 = vst [vmem:[#allocation2 + $0x3c] sm:$0xf] %v1777
        %1818 = vst [vmem:[#allocation2 + $0x40] sm:$0xf] %v1778
        %1819 = vst [vmem:[#allocation2 + $0x44] sm:$0xf] %v1779
        %1820 = vst [vmem:[#allocation2 + $0x48] sm:$0xf] %v1780
        %1821 = vst [vmem:[#allocation2 + $0x4c] sm:$0xf] %v1781
        %v1822 = vrot.slane %v1199, 1
        %v1823 = vrot.slane %v1200, 1
        %v1824 = vrot.slane %v1201, 1
        %v1825 = vrot.slane %v1202, 1
        %v1826 = vrot.slane %v1203, 1
        %v1827 = vrot.slane %v1204, 1
        %v1828 = vrot.slane %v1205, 1
        %v1829 = vrot.slane %v1206, 1
        %v1830 = vrot.slane %v1207, 1
        %v1831 = vrot.slane %v1208, 1
        %v1832 = vrot.slane %v1209, 1
        %v1833 = vrot.slane %v1210, 1
        %v1834 = vrot.slane %v1211, 1
        %v1835 = vrot.slane %v1212, 1
        %v1836 = vrot.slane %v1213, 1
        %v1837 = vrot.slane %v1214, 1
        %v1838 = vrot.slane %v1215, 1
        %v1839 = vrot.slane %v1216, 1
        %v1840 = vrot.slane %v1217, 1
        %v1841 = vrot.slane %v1218, 1
        %vm1842 = vcmp.lt.s32.totalorder %v1220, 7
        %v1843 = vsel %vm1842, %v1840, %v1841
        %v1844 = vsel %vm1842, %v1839, %v1840
        %v1845 = vsel %vm1842, %v1838, %v1839
        %v1846 = vsel %vm1842, %v1837, %v1838
        %v1847 = vsel %vm1842, %v1836, %v1837
        %v1848 = vsel %vm1842, %v1835, %v1836
        %v1849 = vsel %vm1842, %v1834, %v1835
        %v1850 = vsel %vm1842, %v1833, %v1834
        %v1851 = vsel %vm1842, %v1832, %v1833
        %v1852 = vsel %vm1842, %v1831, %v1832
        %v1853 = vsel %vm1842, %v1830, %v1831
        %v1854 = vsel %vm1842, %v1829, %v1830
        %v1855 = vsel %vm1842, %v1828, %v1829
        %v1856 = vsel %vm1842, %v1827, %v1828
        %v1857 = vsel %vm1842, %v1826, %v1827
        %v1858 = vsel %vm1842, %v1825, %v1826
        %v1859 = vsel %vm1842, %v1824, %v1825
        %v1860 = vsel %vm1842, %v1823, %v1824
        %v1861 = vsel %vm1842, %v1822, %v1823
        %v1862 = vsel %vm1842, %v1841, %v1822
        %v1863 = vsel %vm1500, 1, 0
        %v1864 = vsel %vm1501, 1, 0
        %v1865 = vsel %vm1502, 1, 0
        %v1866 = vsel %vm1503, 1, 0
        %v1867 = vsel %vm1504, 1, 0
        %v1868 = vsel %vm1505, 1, 0
        %v1869 = vsel %vm1506, 1, 0
        %v1870 = vsel %vm1507, 1, 0
        %v1871 = vsel %vm1508, 1, 0
        %v1872 = vsel %vm1509, 1, 0
        %v1873 = vsel %vm1510, 1, 0
        %v1874 = vsel %vm1511, 1, 0
        %v1875 = vsel %vm1512, 1, 0
        %v1876 = vsel %vm1513, 1, 0
        %v1877 = vsel %vm1514, 1, 0
        %v1878 = vsel %vm1515, 1, 0
        %v1879 = vsel %vm1516, 1, 0
        %v1880 = vsel %vm1517, 1, 0
        %v1881 = vsel %vm1518, 1, 0
        %v1882 = vsel %vm1519, 1, 0
        %vm1883 = vcmp.eq.s32.totalorder %v1863, 1
        %vm1884 = vcmp.eq.s32.totalorder %v1864, 1
        %vm1885 = vcmp.eq.s32.totalorder %v1865, 1
        %vm1886 = vcmp.eq.s32.totalorder %v1866, 1
        %vm1887 = vcmp.eq.s32.totalorder %v1867, 1
        %vm1888 = vcmp.eq.s32.totalorder %v1868, 1
        %vm1889 = vcmp.eq.s32.totalorder %v1869, 1
        %vm1890 = vcmp.eq.s32.totalorder %v1870, 1
        %vm1891 = vcmp.eq.s32.totalorder %v1871, 1
        %vm1892 = vcmp.eq.s32.totalorder %v1872, 1
        %vm1893 = vcmp.eq.s32.totalorder %v1873, 1
        %vm1894 = vcmp.eq.s32.totalorder %v1874, 1
        %vm1895 = vcmp.eq.s32.totalorder %v1875, 1
        %vm1896 = vcmp.eq.s32.totalorder %v1876, 1
        %vm1897 = vcmp.eq.s32.totalorder %v1877, 1
        %vm1898 = vcmp.eq.s32.totalorder %v1878, 1
        %vm1899 = vcmp.eq.s32.totalorder %v1879, 1
        %vm1900 = vcmp.eq.s32.totalorder %v1880, 1
        %vm1901 = vcmp.eq.s32.totalorder %v1881, 1
        %vm1902 = vcmp.eq.s32.totalorder %v1882, 1
        %v1903 = vsel %vm1883, %v1861, 0.0
        %v1904 = vsel %vm1884, %v1860, 0.0
        %v1905 = vsel %vm1885, %v1859, 0.0
        %v1906 = vsel %vm1886, %v1858, 0.0
        %v1907 = vsel %vm1887, %v1857, 0.0
        %v1908 = vsel %vm1888, %v1856, 0.0
        %v1909 = vsel %vm1889, %v1855, 0.0
        %v1910 = vsel %vm1890, %v1854, 0.0
        %v1911 = vsel %vm1891, %v1853, 0.0
        %v1912 = vsel %vm1892, %v1852, 0.0
        %v1913 = vsel %vm1893, %v1851, 0.0
        %v1914 = vsel %vm1894, %v1850, 0.0
        %v1915 = vsel %vm1895, %v1849, 0.0
        %v1916 = vsel %vm1896, %v1848, 0.0
        %v1917 = vsel %vm1897, %v1847, 0.0
        %v1918 = vsel %vm1898, %v1846, 0.0
        %v1919 = vsel %vm1899, %v1845, 0.0
        %v1920 = vsel %vm1900, %v1844, 0.0
        %v1921 = vsel %vm1901, %v1843, 0.0
        %v1922 = vsel %vm1902, %v1862, 0.0
        %v1923 = vpack.c.bf16 %v1904, %v1903
        %v1924 = vpack.c.bf16 %v1906, %v1905
        %v1925 = vpack.c.bf16 %v1908, %v1907
        %v1926 = vpack.c.bf16 %v1910, %v1909
        %v1927 = vpack.c.bf16 %v1912, %v1911
        %v1928 = vpack.c.bf16 %v1914, %v1913
        %v1929 = vpack.c.bf16 %v1916, %v1915
        %v1930 = vpack.c.bf16 %v1918, %v1917
        %v1931 = vpack.c.bf16 %v1920, %v1919
        %v1932 = vpack.c.bf16 %v1922, %v1921
        %v1943 = vunpack.c.l.b16 %v1923
        %v1944 = vunpack.c.h.b16 %v1923
        %v1945 = vunpack.c.l.b16 %v1924
        %v1946 = vunpack.c.h.b16 %v1924
        %v1947 = vunpack.c.l.b16 %v1925
        %v1948 = vunpack.c.h.b16 %v1925
        %v1949 = vunpack.c.l.b16 %v1926
        %v1950 = vunpack.c.h.b16 %v1926
        %v1951 = vunpack.c.l.b16 %v1927
        %v1952 = vunpack.c.h.b16 %v1927
        %v1953 = vunpack.c.l.b16 %v1928
        %v1954 = vunpack.c.h.b16 %v1928
        %v1955 = vunpack.c.l.b16 %v1929
        %v1956 = vunpack.c.h.b16 %v1929
        %v1957 = vunpack.c.l.b16 %v1930
        %v1958 = vunpack.c.h.b16 %v1930
        %v1959 = vunpack.c.l.b16 %v1931
        %v1960 = vunpack.c.h.b16 %v1931
        %v1961 = vunpack.c.l.b16 %v1932
        %v1962 = vunpack.c.h.b16 %v1932
        %v1963 = vpack.c.b16 %v1943, %v1943
        %v1964 = vpack.c.b16 %v1944, %v1944
        %v1965 = vpack.c.b16 %v1945, %v1945
        %v1966 = vpack.c.b16 %v1946, %v1946
        %v1967 = vpack.c.b16 %v1947, %v1947
        %v1968 = vpack.c.b16 %v1948, %v1948
        %v1969 = vpack.c.b16 %v1949, %v1949
        %v1970 = vpack.c.b16 %v1950, %v1950
        %v1971 = vpack.c.b16 %v1951, %v1951
        %v1972 = vpack.c.b16 %v1952, %v1952
        %v1973 = vpack.c.b16 %v1953, %v1953
        %v1974 = vpack.c.b16 %v1954, %v1954
        %v1975 = vpack.c.b16 %v1955, %v1955
        %v1976 = vpack.c.b16 %v1956, %v1956
        %v1977 = vpack.c.b16 %v1957, %v1957
        %v1978 = vpack.c.b16 %v1958, %v1958
        %v1979 = vpack.c.b16 %v1959, %v1959
        %v1980 = vpack.c.b16 %v1960, %v1960
        %v1981 = vpack.c.b16 %v1961, %v1961
        %v1982 = vpack.c.b16 %v1962, %v1962
        %s2003 = scalar_lea.vmem [#allocation2], 160
        %2004 = vst [vmem:[%s2003] sm:$0xf] %v1963
        %2005 = vst [vmem:[%s2003 + $0x4] sm:$0xf] %v1964
        %2006 = vst [vmem:[%s2003 + $0x8] sm:$0xf] %v1965
        %2007 = vst [vmem:[%s2003 + $0xc] sm:$0xf] %v1966
        %2008 = vst [vmem:[%s2003 + $0x10] sm:$0xf] %v1967
        %2009 = vst [vmem:[%s2003 + $0x14] sm:$0xf] %v1968
        %2010 = vst [vmem:[%s2003 + $0x18] sm:$0xf] %v1969
        %2011 = vst [vmem:[%s2003 + $0x1c] sm:$0xf] %v1970
        %2012 = vst [vmem:[%s2003 + $0x20] sm:$0xf] %v1971
        %2013 = vst [vmem:[%s2003 + $0x24] sm:$0xf] %v1972
        %2014 = vst [vmem:[%s2003 + $0x28] sm:$0xf] %v1973
        %2015 = vst [vmem:[%s2003 + $0x2c] sm:$0xf] %v1974
        %2016 = vst [vmem:[%s2003 + $0x30] sm:$0xf] %v1975
        %2017 = vst [vmem:[%s2003 + $0x34] sm:$0xf] %v1976
        %2018 = vst [vmem:[%s2003 + $0x38] sm:$0xf] %v1977
        %2019 = vst [vmem:[%s2003 + $0x3c] sm:$0xf] %v1978
        %2020 = vst [vmem:[%s2003 + $0x40] sm:$0xf] %v1979
        %2021 = vst [vmem:[%s2003 + $0x44] sm:$0xf] %v1980
        %2022 = vst [vmem:[%s2003 + $0x48] sm:$0xf] %v1981
        %2023 = vst [vmem:[%s2003 + $0x4c] sm:$0xf] %v1982
        %p2024 = scmp.eq.s32.totalorder %s37, 0
        // Predicated region
        $region93: #{tpu_custom_call.1} parent=71 // pred_check
          %p2025 = pneg %p2024
        $region94: #{tpu_custom_call.1} parent=71 // pred_check_branch
          %2027 = sbr.rel (%p2025) target = $region96
        $region95: #{tpu_custom_call.1} parent=71 // pred_region
          %2028 = vst [vmem:[#allocation2] sm:$0xf] 0
          %2029 = vst [vmem:[#allocation2 + $0x4] sm:$0xf] 0
          %2030 = vst [vmem:[%s1600] sm:$0xf] 0
          %2031 = vst [vmem:[%s1600 + $0x4] sm:$0xf] 0
          %2032 = vst [vmem:[%s2003] sm:$0xf] 0
          %2033 = vst [vmem:[%s2003 + $0x4] sm:$0xf] 0
        $region96: #{tpu_custom_call.1} parent=71 // pred_fallthru
          _
        %p2034 = scmp.eq.s32.totalorder %s37, 1
        // Predicated region
        $region97: #{tpu_custom_call.1} parent=71 // pred_check
          %p2035 = pneg %p2034
        $region98: #{tpu_custom_call.1} parent=71 // pred_check_branch
          %2037 = sbr.rel (%p2035) target = $region100
        $region99: #{tpu_custom_call.1} parent=71 // pred_region
          %2038 = vst [vmem:[#allocation2 + $0x48] sm:$0xf] 0
          %2039 = vst [vmem:[#allocation2 + $0x4c] sm:$0xf] 0
          %2040 = vst [vmem:[%s1600 + $0x48] sm:$0xf] 0
          %2041 = vst [vmem:[%s1600 + $0x4c] sm:$0xf] 0
          %2042 = vst [vmem:[%s2003 + $0x48] sm:$0xf] 0
          %2043 = vst [vmem:[%s2003 + $0x4c] sm:$0xf] 0
        $region100: #{tpu_custom_call.1} parent=71 // pred_fallthru
          _
        %v2044 = vld [vmem:[#allocation2] sm:$0xf]
        %v2045 = vld [vmem:[#allocation2 + $0x4] sm:$0xf]
        %v2046 = vld [vmem:[#allocation2 + $0x8] sm:$0xf]
        %v2047 = vld [vmem:[#allocation2 + $0xc] sm:$0xf]
        %v2048 = vld [vmem:[#allocation2 + $0x10] sm:$0xf]
        %v2049 = vld [vmem:[#allocation2 + $0x14] sm:$0xf]
        %v2050 = vld [vmem:[#allocation2 + $0x18] sm:$0xf]
        %v2051 = vld [vmem:[#allocation2 + $0x1c] sm:$0xf]
        %v2052 = vld [vmem:[#allocation2 + $0x20] sm:$0xf]
        %v2053 = vld [vmem:[#allocation2 + $0x24] sm:$0xf]
        %v2054 = vld [vmem:[#allocation2 + $0x28] sm:$0xf]
        %v2055 = vld [vmem:[#allocation2 + $0x2c] sm:$0xf]
        %v2056 = vld [vmem:[#allocation2 + $0x30] sm:$0xf]
        %v2057 = vld [vmem:[#allocation2 + $0x34] sm:$0xf]
        %v2058 = vld [vmem:[#allocation2 + $0x38] sm:$0xf]
        %v2059 = vld [vmem:[#allocation2 + $0x3c] sm:$0xf]
        %v2060 = vld [vmem:[#allocation8] sm:$0xf]
        %v2061 = vld [vmem:[#allocation8 + $0x4] sm:$0xf]
        %v2062 = vld [vmem:[#allocation8 + $0x8] sm:$0xf]
        %v2063 = vld [vmem:[#allocation8 + $0xc] sm:$0xf]
        %v2064 = vld [vmem:[#allocation8 + $0x10] sm:$0xf]
        %v2065 = vld [vmem:[#allocation8 + $0x14] sm:$0xf]
        %v2066 = vld [vmem:[#allocation8 + $0x18] sm:$0xf]
        %v2067 = vld [vmem:[#allocation8 + $0x1c] sm:$0xf]
        %v2068 = vld [vmem:[#allocation8 + $0x20] sm:$0xf]
        %v2069 = vld [vmem:[#allocation8 + $0x24] sm:$0xf]
        %v2070 = vld [vmem:[#allocation8 + $0x28] sm:$0xf]
        %v2071 = vld [vmem:[#allocation8 + $0x2c] sm:$0xf]
        %v2072 = vld [vmem:[#allocation8 + $0x30] sm:$0xf]
        %v2073 = vld [vmem:[#allocation8 + $0x34] sm:$0xf]
        %v2074 = vld [vmem:[#allocation8 + $0x38] sm:$0xf]
        %v2075 = vld [vmem:[#allocation8 + $0x3c] sm:$0xf]
        %v2076 = vld [vmem:[%s1600] sm:$0xf]
        %v2077 = vld [vmem:[%s1600 + $0x4] sm:$0xf]
        %v2078 = vld [vmem:[%s1600 + $0x8] sm:$0xf]
        %v2079 = vld [vmem:[%s1600 + $0xc] sm:$0xf]
        %v2080 = vld [vmem:[%s1600 + $0x10] sm:$0xf]
        %v2081 = vld [vmem:[%s1600 + $0x14] sm:$0xf]
        %v2082 = vld [vmem:[%s1600 + $0x18] sm:$0xf]
        %v2083 = vld [vmem:[%s1600 + $0x1c] sm:$0xf]
        %v2084 = vld [vmem:[%s1600 + $0x20] sm:$0xf]
        %v2085 = vld [vmem:[%s1600 + $0x24] sm:$0xf]
        %v2086 = vld [vmem:[%s1600 + $0x28] sm:$0xf]
        %v2087 = vld [vmem:[%s1600 + $0x2c] sm:$0xf]
        %v2088 = vld [vmem:[%s1600 + $0x30] sm:$0xf]
        %v2089 = vld [vmem:[%s1600 + $0x34] sm:$0xf]
        %v2090 = vld [vmem:[%s1600 + $0x38] sm:$0xf]
        %v2091 = vld [vmem:[%s1600 + $0x3c] sm:$0xf]
        %s2092 = scalar_lea.vmem [#allocation8], 64
        %v2093 = vld [vmem:[%s2092] sm:$0xf]
        %v2094 = vld [vmem:[%s2092 + $0x4] sm:$0xf]
        %v2095 = vld [vmem:[%s2092 + $0x8] sm:$0xf]
        %v2096 = vld [vmem:[%s2092 + $0xc] sm:$0xf]
        %v2097 = vld [vmem:[%s2092 + $0x10] sm:$0xf]
        %v2098 = vld [vmem:[%s2092 + $0x14] sm:$0xf]
        %v2099 = vld [vmem:[%s2092 + $0x18] sm:$0xf]
        %v2100 = vld [vmem:[%s2092 + $0x1c] sm:$0xf]
        %v2101 = vld [vmem:[%s2092 + $0x20] sm:$0xf]
        %v2102 = vld [vmem:[%s2092 + $0x24] sm:$0xf]
        %v2103 = vld [vmem:[%s2092 + $0x28] sm:$0xf]
        %v2104 = vld [vmem:[%s2092 + $0x2c] sm:$0xf]
        %v2105 = vld [vmem:[%s2092 + $0x30] sm:$0xf]
        %v2106 = vld [vmem:[%s2092 + $0x34] sm:$0xf]
        %v2107 = vld [vmem:[%s2092 + $0x38] sm:$0xf]
        %v2108 = vld [vmem:[%s2092 + $0x3c] sm:$0xf]
        %v2125 = vunpack.c.l.b16 %v2076
        %v2126 = vunpack.c.l.b16 %v2077
        %v2127 = vunpack.c.l.b16 %v2078
        %v2128 = vunpack.c.l.b16 %v2079
        %v2129 = vunpack.c.l.b16 %v2080
        %v2130 = vunpack.c.l.b16 %v2081
        %v2131 = vunpack.c.l.b16 %v2082
        %v2132 = vunpack.c.l.b16 %v2083
        %v2133 = vunpack.c.l.b16 %v2084
        %v2134 = vunpack.c.l.b16 %v2085
        %v2135 = vunpack.c.l.b16 %v2086
        %v2136 = vunpack.c.l.b16 %v2087
        %v2137 = vunpack.c.l.b16 %v2088
        %v2138 = vunpack.c.l.b16 %v2089
        %v2139 = vunpack.c.l.b16 %v2090
        %v2140 = vunpack.c.l.b16 %v2091
        %v2141 = vpack.c.b16 %v2126, %v2125
        %v2142 = vpack.c.b16 %v2128, %v2127
        %v2143 = vpack.c.b16 %v2130, %v2129
        %v2144 = vpack.c.b16 %v2132, %v2131
        %v2145 = vpack.c.b16 %v2134, %v2133
        %v2146 = vpack.c.b16 %v2136, %v2135
        %v2147 = vpack.c.b16 %v2138, %v2137
        %v2148 = vpack.c.b16 %v2140, %v2139
        %v2173 = vunpack.c.l.b16 %v2093
        %v2174 = vunpack.c.l.b16 %v2094
        %v2175 = vunpack.c.l.b16 %v2095
        %v2176 = vunpack.c.l.b16 %v2096
        %v2177 = vunpack.c.l.b16 %v2097
        %v2178 = vunpack.c.l.b16 %v2098
        %v2179 = vunpack.c.l.b16 %v2099
        %v2180 = vunpack.c.l.b16 %v2100
        %v2181 = vunpack.c.l.b16 %v2101
        %v2182 = vunpack.c.l.b16 %v2102
        %v2183 = vunpack.c.l.b16 %v2103
        %v2184 = vunpack.c.l.b16 %v2104
        %v2185 = vunpack.c.l.b16 %v2105
        %v2186 = vunpack.c.l.b16 %v2106
        %v2187 = vunpack.c.l.b16 %v2107
        %v2188 = vunpack.c.l.b16 %v2108
        %v2189 = vpack.c.b16 %v2174, %v2173
        %v2190 = vpack.c.b16 %v2176, %v2175
        %v2191 = vpack.c.b16 %v2178, %v2177
        %v2192 = vpack.c.b16 %v2180, %v2179
        %v2193 = vpack.c.b16 %v2182, %v2181
        %v2194 = vpack.c.b16 %v2184, %v2183
        %v2195 = vpack.c.b16 %v2186, %v2185
        %v2196 = vpack.c.b16 %v2188, %v2187
        %2205 = vmatprep.subr.bf16.mxu0 0
        %2206 = vmatpush1.bf16.msra.mxu0 %v2196
        %2207 = vmatprep.subr.bf16.mxu0 0
        %2208 = vmatpush1.bf16.msra.mxu0 %v2195
        %2209 = vmatprep.subr.bf16.mxu0 0
        %2210 = vmatpush1.bf16.msra.mxu0 %v2194
        %2211 = vmatprep.subr.bf16.mxu0 0
        %2212 = vmatpush1.bf16.msra.mxu0 %v2193
        %2213 = vmatprep.subr.bf16.mxu0 0
        %2214 = vmatpush1.bf16.msra.mxu0 %v2192
        %2215 = vmatprep.subr.bf16.mxu0 0
        %2216 = vmatpush1.bf16.msra.mxu0 %v2191
        %2217 = vmatprep.subr.bf16.mxu0 0
        %2218 = vmatpush1.bf16.msra.mxu0 %v2190
        %2219 = vmatprep.subr.bf16.mxu0 0
        %2220 = vmatpush1.bf16.msra.mxu0 %v2189
        %2221 = vmatprep.subr.bf16.mxu0 0
        %2222 = vmatpush2.bf16.msra.mxu0 0
        %2223 = vmatprep.subr.bf16.mxu0 0
        %2224 = vmatpush2.bf16.msra.mxu0 0
        %2225 = vmatprep.subr.bf16.mxu0 0
        %2226 = vmatpush2.bf16.msra.mxu0 0
        %2227 = vmatprep.subr.bf16.mxu0 0
        %2228 = vmatpush2.bf16.msra.mxu0 0
        %2229 = vmatprep.subr.bf16.mxu0 0
        %2230 = vmatpush2.bf16.msra.mxu0 0
        %2231 = vmatprep.subr.bf16.mxu0 0
        %2232 = vmatpush2.bf16.msra.mxu0 0
        %2233 = vmatprep.subr.bf16.mxu0 0
        %2234 = vmatpush2.bf16.msra.mxu0 0
        %2235 = vmatprep.subr.bf16.mxu0 0
        %2236 = vmatpush2.bf16.msra.mxu0 0
        %2237 = vmatprep.mubr.bf16.mxu0 0
        %2238 = vmatmul.mubr.bf16.gmra.mxu0 %v2141
        %v2239 = vpop.f32.mrf.mxu0
        %v2240 = vadd.f32 0.0, %v2239
        %v2241 = vpop.f32.mrf.mxu0
        %v2242 = vpop.f32.mrf.mxu0
        %v2243 = vadd.f32 0.0, %v2242
        %v2244 = vpop.f32.mrf.mxu0
        %2245 = vmatprep.mubr.bf16.mxu0 0
        %2246 = vmatmul.mubr.bf16.gmra.mxu0 %v2142
        %v2247 = vpop.f32.mrf.mxu0
        %v2248 = vadd.f32 0.0, %v2247
        %v2249 = vpop.f32.mrf.mxu0
        %v2250 = vpop.f32.mrf.mxu0
        %v2251 = vadd.f32 0.0, %v2250
        %v2252 = vpop.f32.mrf.mxu0
        %2253 = vmatprep.mubr.bf16.mxu0 0
        %2254 = vmatmul.mubr.bf16.gmra.mxu0 %v2143
        %v2255 = vpop.f32.mrf.mxu0
        %v2256 = vadd.f32 0.0, %v2255
        %v2257 = vpop.f32.mrf.mxu0
        %v2258 = vpop.f32.mrf.mxu0
        %v2259 = vadd.f32 0.0, %v2258
        %v2260 = vpop.f32.mrf.mxu0
        %2261 = vmatprep.mubr.bf16.mxu0 0
        %2262 = vmatmul.mubr.bf16.gmra.mxu0 %v2144
        %v2263 = vpop.f32.mrf.mxu0
        %v2264 = vadd.f32 0.0, %v2263
        %v2265 = vpop.f32.mrf.mxu0
        %v2266 = vpop.f32.mrf.mxu0
        %v2267 = vadd.f32 0.0, %v2266
        %v2268 = vpop.f32.mrf.mxu0
        %2269 = vmatprep.mubr.bf16.mxu0 0
        %2270 = vmatmul.mubr.bf16.gmra.mxu0 %v2145
        %v2271 = vpop.f32.mrf.mxu0
        %v2272 = vadd.f32 0.0, %v2271
        %v2273 = vpop.f32.mrf.mxu0
        %v2274 = vpop.f32.mrf.mxu0
        %v2275 = vadd.f32 0.0, %v2274
        %v2276 = vpop.f32.mrf.mxu0
        %2277 = vmatprep.mubr.bf16.mxu0 0
        %2278 = vmatmul.mubr.bf16.gmra.mxu0 %v2146
        %v2279 = vpop.f32.mrf.mxu0
        %v2280 = vadd.f32 0.0, %v2279
        %v2281 = vpop.f32.mrf.mxu0
        %v2282 = vpop.f32.mrf.mxu0
        %v2283 = vadd.f32 0.0, %v2282
        %v2284 = vpop.f32.mrf.mxu0
        %2285 = vmatprep.mubr.bf16.mxu0 0
        %2286 = vmatmul.mubr.bf16.gmra.mxu0 %v2147
        %v2287 = vpop.f32.mrf.mxu0
        %v2288 = vadd.f32 0.0, %v2287
        %v2289 = vpop.f32.mrf.mxu0
        %v2290 = vpop.f32.mrf.mxu0
        %v2291 = vadd.f32 0.0, %v2290
        %v2292 = vpop.f32.mrf.mxu0
        %2293 = vmatprep.mubr.bf16.mxu0 0
        %2294 = vmatmul.mubr.bf16.gmra.mxu0 %v2148
        %v2295 = vpop.f32.mrf.mxu0
        %v2296 = vadd.f32 0.0, %v2295
        %v2297 = vpop.f32.mrf.mxu0
        %v2298 = vpop.f32.mrf.mxu0
        %v2299 = vadd.f32 0.0, %v2298
        %v2300 = vpop.f32.mrf.mxu0
        %2301 = vdwg.mxu0
        %v2318 = vunpack.c.l.b16 %v2044
        %v2319 = vunpack.c.l.b16 %v2045
        %v2320 = vunpack.c.l.b16 %v2046
        %v2321 = vunpack.c.l.b16 %v2047
        %v2322 = vunpack.c.l.b16 %v2048
        %v2323 = vunpack.c.l.b16 %v2049
        %v2324 = vunpack.c.l.b16 %v2050
        %v2325 = vunpack.c.l.b16 %v2051
        %v2326 = vunpack.c.l.b16 %v2052
        %v2327 = vunpack.c.l.b16 %v2053
        %v2328 = vunpack.c.l.b16 %v2054
        %v2329 = vunpack.c.l.b16 %v2055
        %v2330 = vunpack.c.l.b16 %v2056
        %v2331 = vunpack.c.l.b16 %v2057
        %v2332 = vunpack.c.l.b16 %v2058
        %v2333 = vunpack.c.l.b16 %v2059
        %v2334 = vpack.c.b16 %v2319, %v2318
        %v2335 = vpack.c.b16 %v2321, %v2320
        %v2336 = vpack.c.b16 %v2323, %v2322
        %v2337 = vpack.c.b16 %v2325, %v2324
        %v2338 = vpack.c.b16 %v2327, %v2326
        %v2339 = vpack.c.b16 %v2329, %v2328
        %v2340 = vpack.c.b16 %v2331, %v2330
        %v2341 = vpack.c.b16 %v2333, %v2332
        %v2366 = vunpack.c.l.b16 %v2060
        %v2367 = vunpack.c.l.b16 %v2061
        %v2368 = vunpack.c.l.b16 %v2062
        %v2369 = vunpack.c.l.b16 %v2063
        %v2370 = vunpack.c.l.b16 %v2064
        %v2371 = vunpack.c.l.b16 %v2065
        %v2372 = vunpack.c.l.b16 %v2066
        %v2373 = vunpack.c.l.b16 %v2067
        %v2374 = vunpack.c.l.b16 %v2068
        %v2375 = vunpack.c.l.b16 %v2069
        %v2376 = vunpack.c.l.b16 %v2070
        %v2377 = vunpack.c.l.b16 %v2071
        %v2378 = vunpack.c.l.b16 %v2072
        %v2379 = vunpack.c.l.b16 %v2073
        %v2380 = vunpack.c.l.b16 %v2074
        %v2381 = vunpack.c.l.b16 %v2075
        %v2382 = vpack.c.b16 %v2367, %v2366
        %v2383 = vpack.c.b16 %v2369, %v2368
        %v2384 = vpack.c.b16 %v2371, %v2370
        %v2385 = vpack.c.b16 %v2373, %v2372
        %v2386 = vpack.c.b16 %v2375, %v2374
        %v2387 = vpack.c.b16 %v2377, %v2376
        %v2388 = vpack.c.b16 %v2379, %v2378
        %v2389 = vpack.c.b16 %v2381, %v2380
        %2398 = vmatprep.subr.bf16.mxu0 0
        %2399 = vmatpush1.bf16.msra.mxu0 %v2389
        %2400 = vmatprep.subr.bf16.mxu0 0
        %2401 = vmatpush1.bf16.msra.mxu0 %v2388
        %2402 = vmatprep.subr.bf16.mxu0 0
        %2403 = vmatpush1.bf16.msra.mxu0 %v2387
        %2404 = vmatprep.subr.bf16.mxu0 0
        %2405 = vmatpush1.bf16.msra.mxu0 %v2386
        %2406 = vmatprep.subr.bf16.mxu0 0
        %2407 = vmatpush1.bf16.msra.mxu0 %v2385
        %2408 = vmatprep.subr.bf16.mxu0 0
        %2409 = vmatpush1.bf16.msra.mxu0 %v2384
        %2410 = vmatprep.subr.bf16.mxu0 0
        %2411 = vmatpush1.bf16.msra.mxu0 %v2383
        %2412 = vmatprep.subr.bf16.mxu0 0
        %2413 = vmatpush1.bf16.msra.mxu0 %v2382
        %2414 = vmatprep.subr.bf16.mxu0 0
        %2415 = vmatpush2.bf16.msra.mxu0 0
        %2416 = vmatprep.subr.bf16.mxu0 0
        %2417 = vmatpush2.bf16.msra.mxu0 0
        %2418 = vmatprep.subr.bf16.mxu0 0
        %2419 = vmatpush2.bf16.msra.mxu0 0
        %2420 = vmatprep.subr.bf16.mxu0 0
        %2421 = vmatpush2.bf16.msra.mxu0 0
        %2422 = vmatprep.subr.bf16.mxu0 0
        %2423 = vmatpush2.bf16.msra.mxu0 0
        %2424 = vmatprep.subr.bf16.mxu0 0
        %2425 = vmatpush2.bf16.msra.mxu0 0
        %2426 = vmatprep.subr.bf16.mxu0 0
        %2427 = vmatpush2.bf16.msra.mxu0 0
        %2428 = vmatprep.subr.bf16.mxu0 0
        %2429 = vmatpush2.bf16.msra.mxu0 0
        %2430 = vmatprep.mubr.bf16.mxu0 0
        %2431 = vmatmul.mubr.bf16.gmra.mxu0 %v2334
        %v2432 = vpop.f32.mrf.mxu0
        %v2433 = vadd.f32 %v2240, %v2432
        %v2434 = vpop.f32.mrf.mxu0
        %v2435 = vpop.f32.mrf.mxu0
        %v2436 = vadd.f32 %v2243, %v2435
        %v2437 = vpop.f32.mrf.mxu0
        %2438 = vmatprep.mubr.bf16.mxu0 0
        %2439 = vmatmul.mubr.bf16.gmra.mxu0 %v2335
        %v2440 = vpop.f32.mrf.mxu0
        %v2441 = vadd.f32 %v2248, %v2440
        %v2442 = vpop.f32.mrf.mxu0
        %v2443 = vpop.f32.mrf.mxu0
        %v2444 = vadd.f32 %v2251, %v2443
        %v2445 = vpop.f32.mrf.mxu0
        %2446 = vmatprep.mubr.bf16.mxu0 0
        %2447 = vmatmul.mubr.bf16.gmra.mxu0 %v2336
        %v2448 = vpop.f32.mrf.mxu0
        %v2449 = vadd.f32 %v2256, %v2448
        %v2450 = vpop.f32.mrf.mxu0
        %v2451 = vpop.f32.mrf.mxu0
        %v2452 = vadd.f32 %v2259, %v2451
        %v2453 = vpop.f32.mrf.mxu0
        %2454 = vmatprep.mubr.bf16.mxu0 0
        %2455 = vmatmul.mubr.bf16.gmra.mxu0 %v2337
        %v2456 = vpop.f32.mrf.mxu0
        %v2457 = vadd.f32 %v2264, %v2456
        %v2458 = vpop.f32.mrf.mxu0
        %v2459 = vpop.f32.mrf.mxu0
        %v2460 = vadd.f32 %v2267, %v2459
        %v2461 = vpop.f32.mrf.mxu0
        %2462 = vmatprep.mubr.bf16.mxu0 0
        %2463 = vmatmul.mubr.bf16.gmra.mxu0 %v2338
        %v2464 = vpop.f32.mrf.mxu0
        %v2465 = vadd.f32 %v2272, %v2464
        %v2466 = vpop.f32.mrf.mxu0
        %v2467 = vpop.f32.mrf.mxu0
        %v2468 = vadd.f32 %v2275, %v2467
        %v2469 = vpop.f32.mrf.mxu0
        %2470 = vmatprep.mubr.bf16.mxu0 0
        %2471 = vmatmul.mubr.bf16.gmra.mxu0 %v2339
        %v2472 = vpop.f32.mrf.mxu0
        %v2473 = vadd.f32 %v2280, %v2472
        %v2474 = vpop.f32.mrf.mxu0
        %v2475 = vpop.f32.mrf.mxu0
        %v2476 = vadd.f32 %v2283, %v2475
        %v2477 = vpop.f32.mrf.mxu0
        %2478 = vmatprep.mubr.bf16.mxu0 0
        %2479 = vmatmul.mubr.bf16.gmra.mxu0 %v2340
        %v2480 = vpop.f32.mrf.mxu0
        %v2481 = vadd.f32 %v2288, %v2480
        %v2482 = vpop.f32.mrf.mxu0
        %v2483 = vpop.f32.mrf.mxu0
        %v2484 = vadd.f32 %v2291, %v2483
        %v2485 = vpop.f32.mrf.mxu0
        %2486 = vmatprep.mubr.bf16.mxu0 0
        %2487 = vmatmul.mubr.bf16.gmra.mxu0 %v2341
        %v2488 = vpop.f32.mrf.mxu0
        %v2489 = vadd.f32 %v2296, %v2488
        %v2490 = vpop.f32.mrf.mxu0
        %v2491 = vpop.f32.mrf.mxu0
        %v2492 = vadd.f32 %v2299, %v2491
        %v2493 = vpop.f32.mrf.mxu0
        %2494 = vdwg.mxu0
        %v2495 = vld [vmem:[%s2003] sm:$0xf]
        %v2496 = vld [vmem:[%s2003 + $0x4] sm:$0xf]
        %v2497 = vld [vmem:[%s2003 + $0x8] sm:$0xf]
        %v2498 = vld [vmem:[%s2003 + $0xc] sm:$0xf]
        %v2499 = vld [vmem:[%s2003 + $0x10] sm:$0xf]
        %v2500 = vld [vmem:[%s2003 + $0x14] sm:$0xf]
        %v2501 = vld [vmem:[%s2003 + $0x18] sm:$0xf]
        %v2502 = vld [vmem:[%s2003 + $0x1c] sm:$0xf]
        %v2503 = vld [vmem:[%s2003 + $0x20] sm:$0xf]
        %v2504 = vld [vmem:[%s2003 + $0x24] sm:$0xf]
        %v2505 = vld [vmem:[%s2003 + $0x28] sm:$0xf]
        %v2506 = vld [vmem:[%s2003 + $0x2c] sm:$0xf]
        %v2507 = vld [vmem:[%s2003 + $0x30] sm:$0xf]
        %v2508 = vld [vmem:[%s2003 + $0x34] sm:$0xf]
        %v2509 = vld [vmem:[%s2003 + $0x38] sm:$0xf]
        %v2510 = vld [vmem:[%s2003 + $0x3c] sm:$0xf]
        %s2511 = scalar_lea.vmem [#allocation8], 128
        %v2512 = vld [vmem:[%s2511] sm:$0xf]
        %v2513 = vld [vmem:[%s2511 + $0x4] sm:$0xf]
        %v2514 = vld [vmem:[%s2511 + $0x8] sm:$0xf]
        %v2515 = vld [vmem:[%s2511 + $0xc] sm:$0xf]
        %v2516 = vld [vmem:[%s2511 + $0x10] sm:$0xf]
        %v2517 = vld [vmem:[%s2511 + $0x14] sm:$0xf]
        %v2518 = vld [vmem:[%s2511 + $0x18] sm:$0xf]
        %v2519 = vld [vmem:[%s2511 + $0x1c] sm:$0xf]
        %v2520 = vld [vmem:[%s2511 + $0x20] sm:$0xf]
        %v2521 = vld [vmem:[%s2511 + $0x24] sm:$0xf]
        %v2522 = vld [vmem:[%s2511 + $0x28] sm:$0xf]
        %v2523 = vld [vmem:[%s2511 + $0x2c] sm:$0xf]
        %v2524 = vld [vmem:[%s2511 + $0x30] sm:$0xf]
        %v2525 = vld [vmem:[%s2511 + $0x34] sm:$0xf]
        %v2526 = vld [vmem:[%s2511 + $0x38] sm:$0xf]
        %v2527 = vld [vmem:[%s2511 + $0x3c] sm:$0xf]
        %v2544 = vunpack.c.l.b16 %v2495
        %v2545 = vunpack.c.l.b16 %v2496
        %v2546 = vunpack.c.l.b16 %v2497
        %v2547 = vunpack.c.l.b16 %v2498
        %v2548 = vunpack.c.l.b16 %v2499
        %v2549 = vunpack.c.l.b16 %v2500
        %v2550 = vunpack.c.l.b16 %v2501
        %v2551 = vunpack.c.l.b16 %v2502
        %v2552 = vunpack.c.l.b16 %v2503
        %v2553 = vunpack.c.l.b16 %v2504
        %v2554 = vunpack.c.l.b16 %v2505
        %v2555 = vunpack.c.l.b16 %v2506
        %v2556 = vunpack.c.l.b16 %v2507
        %v2557 = vunpack.c.l.b16 %v2508
        %v2558 = vunpack.c.l.b16 %v2509
        %v2559 = vunpack.c.l.b16 %v2510
        %v2560 = vpack.c.b16 %v2545, %v2544
        %v2561 = vpack.c.b16 %v2547, %v2546
        %v2562 = vpack.c.b16 %v2549, %v2548
        %v2563 = vpack.c.b16 %v2551, %v2550
        %v2564 = vpack.c.b16 %v2553, %v2552
        %v2565 = vpack.c.b16 %v2555, %v2554
        %v2566 = vpack.c.b16 %v2557, %v2556
        %v2567 = vpack.c.b16 %v2559, %v2558
        %v2592 = vunpack.c.l.b16 %v2512
        %v2593 = vunpack.c.l.b16 %v2513
        %v2594 = vunpack.c.l.b16 %v2514
        %v2595 = vunpack.c.l.b16 %v2515
        %v2596 = vunpack.c.l.b16 %v2516
        %v2597 = vunpack.c.l.b16 %v2517
        %v2598 = vunpack.c.l.b16 %v2518
        %v2599 = vunpack.c.l.b16 %v2519
        %v2600 = vunpack.c.l.b16 %v2520
        %v2601 = vunpack.c.l.b16 %v2521
        %v2602 = vunpack.c.l.b16 %v2522
        %v2603 = vunpack.c.l.b16 %v2523
        %v2604 = vunpack.c.l.b16 %v2524
        %v2605 = vunpack.c.l.b16 %v2525
        %v2606 = vunpack.c.l.b16 %v2526
        %v2607 = vunpack.c.l.b16 %v2527
        %v2608 = vpack.c.b16 %v2593, %v2592
        %v2609 = vpack.c.b16 %v2595, %v2594
        %v2610 = vpack.c.b16 %v2597, %v2596
        %v2611 = vpack.c.b16 %v2599, %v2598
        %v2612 = vpack.c.b16 %v2601, %v2600
        %v2613 = vpack.c.b16 %v2603, %v2602
        %v2614 = vpack.c.b16 %v2605, %v2604
        %v2615 = vpack.c.b16 %v2607, %v2606
        %2624 = vmatprep.subr.bf16.mxu0 0
        %2625 = vmatpush1.bf16.msra.mxu0 %v2615
        %2626 = vmatprep.subr.bf16.mxu0 0
        %2627 = vmatpush1.bf16.msra.mxu0 %v2614
        %2628 = vmatprep.subr.bf16.mxu0 0
        %2629 = vmatpush1.bf16.msra.mxu0 %v2613
        %2630 = vmatprep.subr.bf16.mxu0 0
        %2631 = vmatpush1.bf16.msra.mxu0 %v2612
        %2632 = vmatprep.subr.bf16.mxu0 0
        %2633 = vmatpush1.bf16.msra.mxu0 %v2611
        %2634 = vmatprep.subr.bf16.mxu0 0
        %2635 = vmatpush1.bf16.msra.mxu0 %v2610
        %2636 = vmatprep.subr.bf16.mxu0 0
        %2637 = vmatpush1.bf16.msra.mxu0 %v2609
        %2638 = vmatprep.subr.bf16.mxu0 0
        %2639 = vmatpush1.bf16.msra.mxu0 %v2608
        %2640 = vmatprep.subr.bf16.mxu0 0
        %2641 = vmatpush2.bf16.msra.mxu0 0
        %2642 = vmatprep.subr.bf16.mxu0 0
        %2643 = vmatpush2.bf16.msra.mxu0 0
        %2644 = vmatprep.subr.bf16.mxu0 0
        %2645 = vmatpush2.bf16.msra.mxu0 0
        %2646 = vmatprep.subr.bf16.mxu0 0
        %2647 = vmatpush2.bf16.msra.mxu0 0
        %2648 = vmatprep.subr.bf16.mxu0 0
        %2649 = vmatpush2.bf16.msra.mxu0 0
        %2650 = vmatprep.subr.bf16.mxu0 0
        %2651 = vmatpush2.bf16.msra.mxu0 0
        %2652 = vmatprep.subr.bf16.mxu0 0
        %2653 = vmatpush2.bf16.msra.mxu0 0
        %2654 = vmatprep.subr.bf16.mxu0 0
        %2655 = vmatpush2.bf16.msra.mxu0 0
        %2656 = vmatprep.mubr.bf16.mxu0 0
        %2657 = vmatmul.mubr.bf16.gmra.mxu0 %v2560
        %v2658 = vpop.f32.mrf.mxu0
        %v2659 = vadd.f32 0.0, %v2658
        %v2660 = vpop.f32.mrf.mxu0
        %v2661 = vpop.f32.mrf.mxu0
        %v2662 = vadd.f32 0.0, %v2661
        %v2663 = vpop.f32.mrf.mxu0
        %2664 = vmatprep.mubr.bf16.mxu0 0
        %2665 = vmatmul.mubr.bf16.gmra.mxu0 %v2561
        %v2666 = vpop.f32.mrf.mxu0
        %v2667 = vadd.f32 0.0, %v2666
        %v2668 = vpop.f32.mrf.mxu0
        %v2669 = vpop.f32.mrf.mxu0
        %v2670 = vadd.f32 0.0, %v2669
        %v2671 = vpop.f32.mrf.mxu0
        %2672 = vmatprep.mubr.bf16.mxu0 0
        %2673 = vmatmul.mubr.bf16.gmra.mxu0 %v2562
        %v2674 = vpop.f32.mrf.mxu0
        %v2675 = vadd.f32 0.0, %v2674
        %v2676 = vpop.f32.mrf.mxu0
        %v2677 = vpop.f32.mrf.mxu0
        %v2678 = vadd.f32 0.0, %v2677
        %v2679 = vpop.f32.mrf.mxu0
        %2680 = vmatprep.mubr.bf16.mxu0 0
        %2681 = vmatmul.mubr.bf16.gmra.mxu0 %v2563
        %v2682 = vpop.f32.mrf.mxu0
        %v2683 = vadd.f32 0.0, %v2682
        %v2684 = vpop.f32.mrf.mxu0
        %v2685 = vpop.f32.mrf.mxu0
        %v2686 = vadd.f32 0.0, %v2685
        %v2687 = vpop.f32.mrf.mxu0
        %2688 = vmatprep.mubr.bf16.mxu0 0
        %2689 = vmatmul.mubr.bf16.gmra.mxu0 %v2564
        %v2690 = vpop.f32.mrf.mxu0
        %v2691 = vadd.f32 0.0, %v2690
        %v2692 = vpop.f32.mrf.mxu0
        %v2693 = vpop.f32.mrf.mxu0
        %v2694 = vadd.f32 0.0, %v2693
        %v2695 = vpop.f32.mrf.mxu0
        %2696 = vmatprep.mubr.bf16.mxu0 0
        %2697 = vmatmul.mubr.bf16.gmra.mxu0 %v2565
        %v2698 = vpop.f32.mrf.mxu0
        %v2699 = vadd.f32 0.0, %v2698
        %v2700 = vpop.f32.mrf.mxu0
        %v2701 = vpop.f32.mrf.mxu0
        %v2702 = vadd.f32 0.0, %v2701
        %v2703 = vpop.f32.mrf.mxu0
        %2704 = vmatprep.mubr.bf16.mxu0 0
        %2705 = vmatmul.mubr.bf16.gmra.mxu0 %v2566
        %v2706 = vpop.f32.mrf.mxu0
        %v2707 = vadd.f32 0.0, %v2706
        %v2708 = vpop.f32.mrf.mxu0
        %v2709 = vpop.f32.mrf.mxu0
        %v2710 = vadd.f32 0.0, %v2709
        %v2711 = vpop.f32.mrf.mxu0
        %2712 = vmatprep.mubr.bf16.mxu0 0
        %2713 = vmatmul.mubr.bf16.gmra.mxu0 %v2567
        %v2714 = vpop.f32.mrf.mxu0
        %v2715 = vadd.f32 0.0, %v2714
        %v2716 = vpop.f32.mrf.mxu0
        %v2717 = vpop.f32.mrf.mxu0
        %v2718 = vadd.f32 0.0, %v2717
        %v2719 = vpop.f32.mrf.mxu0
        %2720 = vdwg.mxu0
        %v2721 = vadd.f32 %v2433, %v2659
        %v2722 = vadd.f32 %v2436, %v2662
        %v2723 = vadd.f32 %v2441, %v2667
        %v2724 = vadd.f32 %v2444, %v2670
        %v2725 = vadd.f32 %v2449, %v2675
        %v2726 = vadd.f32 %v2452, %v2678
        %v2727 = vadd.f32 %v2457, %v2683
        %v2728 = vadd.f32 %v2460, %v2686
        %v2729 = vadd.f32 %v2465, %v2691
        %v2730 = vadd.f32 %v2468, %v2694
        %v2731 = vadd.f32 %v2473, %v2699
        %v2732 = vadd.f32 %v2476, %v2702
        %v2733 = vadd.f32 %v2481, %v2707
        %v2734 = vadd.f32 %v2484, %v2710
        %v2735 = vadd.f32 %v2489, %v2715
        %v2736 = vadd.f32 %v2492, %v2718
        %v2737 = vld [vmem:[#allocation2 + $0x8] sm:$0xf]
        %v2738 = vld [vmem:[#allocation2 + $0xc] sm:$0xf]
        %v2739 = vld [vmem:[#allocation2 + $0x10] sm:$0xf]
        %v2740 = vld [vmem:[#allocation2 + $0x14] sm:$0xf]
        %v2741 = vld [vmem:[#allocation2 + $0x18] sm:$0xf]
        %v2742 = vld [vmem:[#allocation2 + $0x1c] sm:$0xf]
        %v2743 = vld [vmem:[#allocation2 + $0x20] sm:$0xf]
        %v2744 = vld [vmem:[#allocation2 + $0x24] sm:$0xf]
        %v2745 = vld [vmem:[#allocation2 + $0x28] sm:$0xf]
        %v2746 = vld [vmem:[#allocation2 + $0x2c] sm:$0xf]
        %v2747 = vld [vmem:[#allocation2 + $0x30] sm:$0xf]
        %v2748 = vld [vmem:[#allocation2 + $0x34] sm:$0xf]
        %v2749 = vld [vmem:[#allocation2 + $0x38] sm:$0xf]
        %v2750 = vld [vmem:[#allocation2 + $0x3c] sm:$0xf]
        %v2751 = vld [vmem:[#allocation2 + $0x40] sm:$0xf]
        %v2752 = vld [vmem:[#allocation2 + $0x44] sm:$0xf]
        %s2753 = scalar_lea.vmem [#allocation8], 192
        %v2754 = vld [vmem:[%s2753] sm:$0xf]
        %v2755 = vld [vmem:[%s2753 + $0x4] sm:$0xf]
        %v2756 = vld [vmem:[%s2753 + $0x8] sm:$0xf]
        %v2757 = vld [vmem:[%s2753 + $0xc] sm:$0xf]
        %v2758 = vld [vmem:[%s2753 + $0x10] sm:$0xf]
        %v2759 = vld [vmem:[%s2753 + $0x14] sm:$0xf]
        %v2760 = vld [vmem:[%s2753 + $0x18] sm:$0xf]
        %v2761 = vld [vmem:[%s2753 + $0x1c] sm:$0xf]
        %v2762 = vld [vmem:[%s2753 + $0x20] sm:$0xf]
        %v2763 = vld [vmem:[%s2753 + $0x24] sm:$0xf]
        %v2764 = vld [vmem:[%s2753 + $0x28] sm:$0xf]
        %v2765 = vld [vmem:[%s2753 + $0x2c] sm:$0xf]
        %v2766 = vld [vmem:[%s2753 + $0x30] sm:$0xf]
        %v2767 = vld [vmem:[%s2753 + $0x34] sm:$0xf]
        %v2768 = vld [vmem:[%s2753 + $0x38] sm:$0xf]
        %v2769 = vld [vmem:[%s2753 + $0x3c] sm:$0xf]
        %v2786 = vunpack.c.l.b16 %v2737
        %v2787 = vunpack.c.l.b16 %v2738
        %v2788 = vunpack.c.l.b16 %v2739
        %v2789 = vunpack.c.l.b16 %v2740
        %v2790 = vunpack.c.l.b16 %v2741
        %v2791 = vunpack.c.l.b16 %v2742
        %v2792 = vunpack.c.l.b16 %v2743
        %v2793 = vunpack.c.l.b16 %v2744
        %v2794 = vunpack.c.l.b16 %v2745
        %v2795 = vunpack.c.l.b16 %v2746
        %v2796 = vunpack.c.l.b16 %v2747
        %v2797 = vunpack.c.l.b16 %v2748
        %v2798 = vunpack.c.l.b16 %v2749
        %v2799 = vunpack.c.l.b16 %v2750
        %v2800 = vunpack.c.l.b16 %v2751
        %v2801 = vunpack.c.l.b16 %v2752
        %v2802 = vpack.c.b16 %v2787, %v2786
        %v2803 = vpack.c.b16 %v2789, %v2788
        %v2804 = vpack.c.b16 %v2791, %v2790
        %v2805 = vpack.c.b16 %v2793, %v2792
        %v2806 = vpack.c.b16 %v2795, %v2794
        %v2807 = vpack.c.b16 %v2797, %v2796
        %v2808 = vpack.c.b16 %v2799, %v2798
        %v2809 = vpack.c.b16 %v2801, %v2800
        %v2834 = vunpack.c.l.b16 %v2754
        %v2835 = vunpack.c.l.b16 %v2755
        %v2836 = vunpack.c.l.b16 %v2756
        %v2837 = vunpack.c.l.b16 %v2757
        %v2838 = vunpack.c.l.b16 %v2758
        %v2839 = vunpack.c.l.b16 %v2759
        %v2840 = vunpack.c.l.b16 %v2760
        %v2841 = vunpack.c.l.b16 %v2761
        %v2842 = vunpack.c.l.b16 %v2762
        %v2843 = vunpack.c.l.b16 %v2763
        %v2844 = vunpack.c.l.b16 %v2764
        %v2845 = vunpack.c.l.b16 %v2765
        %v2846 = vunpack.c.l.b16 %v2766
        %v2847 = vunpack.c.l.b16 %v2767
        %v2848 = vunpack.c.l.b16 %v2768
        %v2849 = vunpack.c.l.b16 %v2769
        %v2850 = vpack.c.b16 %v2835, %v2834
        %v2851 = vpack.c.b16 %v2837, %v2836
        %v2852 = vpack.c.b16 %v2839, %v2838
        %v2853 = vpack.c.b16 %v2841, %v2840
        %v2854 = vpack.c.b16 %v2843, %v2842
        %v2855 = vpack.c.b16 %v2845, %v2844
        %v2856 = vpack.c.b16 %v2847, %v2846
        %v2857 = vpack.c.b16 %v2849, %v2848
        %2866 = vmatprep.subr.bf16.mxu0 0
        %2867 = vmatpush1.bf16.msra.mxu0 %v2857
        %2868 = vmatprep.subr.bf16.mxu0 0
        %2869 = vmatpush1.bf16.msra.mxu0 %v2856
        %2870 = vmatprep.subr.bf16.mxu0 0
        %2871 = vmatpush1.bf16.msra.mxu0 %v2855
        %2872 = vmatprep.subr.bf16.mxu0 0
        %2873 = vmatpush1.bf16.msra.mxu0 %v2854
        %2874 = vmatprep.subr.bf16.mxu0 0
        %2875 = vmatpush1.bf16.msra.mxu0 %v2853
        %2876 = vmatprep.subr.bf16.mxu0 0
        %2877 = vmatpush1.bf16.msra.mxu0 %v2852
        %2878 = vmatprep.subr.bf16.mxu0 0
        %2879 = vmatpush1.bf16.msra.mxu0 %v2851
        %2880 = vmatprep.subr.bf16.mxu0 0
        %2881 = vmatpush1.bf16.msra.mxu0 %v2850
        %2882 = vmatprep.subr.bf16.mxu0 0
        %2883 = vmatpush2.bf16.msra.mxu0 0
        %2884 = vmatprep.subr.bf16.mxu0 0
        %2885 = vmatpush2.bf16.msra.mxu0 0
        %2886 = vmatprep.subr.bf16.mxu0 0
        %2887 = vmatpush2.bf16.msra.mxu0 0
        %2888 = vmatprep.subr.bf16.mxu0 0
        %2889 = vmatpush2.bf16.msra.mxu0 0
        %2890 = vmatprep.subr.bf16.mxu0 0
        %2891 = vmatpush2.bf16.msra.mxu0 0
        %2892 = vmatprep.subr.bf16.mxu0 0
        %2893 = vmatpush2.bf16.msra.mxu0 0
        %2894 = vmatprep.subr.bf16.mxu0 0
        %2895 = vmatpush2.bf16.msra.mxu0 0
        %2896 = vmatprep.subr.bf16.mxu0 0
        %2897 = vmatpush2.bf16.msra.mxu0 0
        %2898 = vmatprep.mubr.bf16.mxu0 0
        %2899 = vmatmul.mubr.bf16.gmra.mxu0 %v2802
        %v2900 = vpop.f32.mrf.mxu0
        %v2901 = vadd.f32 0.0, %v2900
        %v2902 = vpop.f32.mrf.mxu0
        %v2903 = vpop.f32.mrf.mxu0
        %v2904 = vadd.f32 0.0, %v2903
        %v2905 = vpop.f32.mrf.mxu0
        %2906 = vmatprep.mubr.bf16.mxu0 0
        %2907 = vmatmul.mubr.bf16.gmra.mxu0 %v2803
        %v2908 = vpop.f32.mrf.mxu0
        %v2909 = vadd.f32 0.0, %v2908
        %v2910 = vpop.f32.mrf.mxu0
        %v2911 = vpop.f32.mrf.mxu0
        %v2912 = vadd.f32 0.0, %v2911
        %v2913 = vpop.f32.mrf.mxu0
        %2914 = vmatprep.mubr.bf16.mxu0 0
        %2915 = vmatmul.mubr.bf16.gmra.mxu0 %v2804
        %v2916 = vpop.f32.mrf.mxu0
        %v2917 = vadd.f32 0.0, %v2916
        %v2918 = vpop.f32.mrf.mxu0
        %v2919 = vpop.f32.mrf.mxu0
        %v2920 = vadd.f32 0.0, %v2919
        %v2921 = vpop.f32.mrf.mxu0
        %2922 = vmatprep.mubr.bf16.mxu0 0
        %2923 = vmatmul.mubr.bf16.gmra.mxu0 %v2805
        %v2924 = vpop.f32.mrf.mxu0
        %v2925 = vadd.f32 0.0, %v2924
        %v2926 = vpop.f32.mrf.mxu0
        %v2927 = vpop.f32.mrf.mxu0
        %v2928 = vadd.f32 0.0, %v2927
        %v2929 = vpop.f32.mrf.mxu0
        %2930 = vmatprep.mubr.bf16.mxu0 0
        %2931 = vmatmul.mubr.bf16.gmra.mxu0 %v2806
        %v2932 = vpop.f32.mrf.mxu0
        %v2933 = vadd.f32 0.0, %v2932
        %v2934 = vpop.f32.mrf.mxu0
        %v2935 = vpop.f32.mrf.mxu0
        %v2936 = vadd.f32 0.0, %v2935
        %v2937 = vpop.f32.mrf.mxu0
        %2938 = vmatprep.mubr.bf16.mxu0 0
        %2939 = vmatmul.mubr.bf16.gmra.mxu0 %v2807
        %v2940 = vpop.f32.mrf.mxu0
        %v2941 = vadd.f32 0.0, %v2940
        %v2942 = vpop.f32.mrf.mxu0
        %v2943 = vpop.f32.mrf.mxu0
        %v2944 = vadd.f32 0.0, %v2943
        %v2945 = vpop.f32.mrf.mxu0
        %2946 = vmatprep.mubr.bf16.mxu0 0
        %2947 = vmatmul.mubr.bf16.gmra.mxu0 %v2808
        %v2948 = vpop.f32.mrf.mxu0
        %v2949 = vadd.f32 0.0, %v2948
        %v2950 = vpop.f32.mrf.mxu0
        %v2951 = vpop.f32.mrf.mxu0
        %v2952 = vadd.f32 0.0, %v2951
        %v2953 = vpop.f32.mrf.mxu0
        %2954 = vmatprep.mubr.bf16.mxu0 0
        %2955 = vmatmul.mubr.bf16.gmra.mxu0 %v2809
        %v2956 = vpop.f32.mrf.mxu0
        %v2957 = vadd.f32 0.0, %v2956
        %v2958 = vpop.f32.mrf.mxu0
        %v2959 = vpop.f32.mrf.mxu0
        %v2960 = vadd.f32 0.0, %v2959
        %v2961 = vpop.f32.mrf.mxu0
        %2962 = vdwg.mxu0
        %v2963 = vadd.f32 %v2721, %v2901
        %v2964 = vadd.f32 %v2722, %v2904
        %v2965 = vadd.f32 %v2723, %v2909
        %v2966 = vadd.f32 %v2724, %v2912
        %v2967 = vadd.f32 %v2725, %v2917
        %v2968 = vadd.f32 %v2726, %v2920
        %v2969 = vadd.f32 %v2727, %v2925
        %v2970 = vadd.f32 %v2728, %v2928
        %v2971 = vadd.f32 %v2729, %v2933
        %v2972 = vadd.f32 %v2730, %v2936
        %v2973 = vadd.f32 %v2731, %v2941
        %v2974 = vadd.f32 %v2732, %v2944
        %v2975 = vadd.f32 %v2733, %v2949
        %v2976 = vadd.f32 %v2734, %v2952
        %v2977 = vadd.f32 %v2735, %v2957
        %v2978 = vadd.f32 %v2736, %v2960
        %v2979 = vld [vmem:[%s1600 + $0x8] sm:$0xf]
        %v2980 = vld [vmem:[%s1600 + $0xc] sm:$0xf]
        %v2981 = vld [vmem:[%s1600 + $0x10] sm:$0xf]
        %v2982 = vld [vmem:[%s1600 + $0x14] sm:$0xf]
        %v2983 = vld [vmem:[%s1600 + $0x18] sm:$0xf]
        %v2984 = vld [vmem:[%s1600 + $0x1c] sm:$0xf]
        %v2985 = vld [vmem:[%s1600 + $0x20] sm:$0xf]
        %v2986 = vld [vmem:[%s1600 + $0x24] sm:$0xf]
        %v2987 = vld [vmem:[%s1600 + $0x28] sm:$0xf]
        %v2988 = vld [vmem:[%s1600 + $0x2c] sm:$0xf]
        %v2989 = vld [vmem:[%s1600 + $0x30] sm:$0xf]
        %v2990 = vld [vmem:[%s1600 + $0x34] sm:$0xf]
        %v2991 = vld [vmem:[%s1600 + $0x38] sm:$0xf]
        %v2992 = vld [vmem:[%s1600 + $0x3c] sm:$0xf]
        %v2993 = vld [vmem:[%s1600 + $0x40] sm:$0xf]
        %v2994 = vld [vmem:[%s1600 + $0x44] sm:$0xf]
        %s2995 = scalar_lea.vmem [#allocation8], 256
        %v2996 = vld [vmem:[%s2995] sm:$0xf]
        %v2997 = vld [vmem:[%s2995 + $0x4] sm:$0xf]
        %v2998 = vld [vmem:[%s2995 + $0x8] sm:$0xf]
        %v2999 = vld [vmem:[%s2995 + $0xc] sm:$0xf]
        %v3000 = vld [vmem:[%s2995 + $0x10] sm:$0xf]
        %v3001 = vld [vmem:[%s2995 + $0x14] sm:$0xf]
        %v3002 = vld [vmem:[%s2995 + $0x18] sm:$0xf]
        %v3003 = vld [vmem:[%s2995 + $0x1c] sm:$0xf]
        %v3004 = vld [vmem:[%s2995 + $0x20] sm:$0xf]
        %v3005 = vld [vmem:[%s2995 + $0x24] sm:$0xf]
        %v3006 = vld [vmem:[%s2995 + $0x28] sm:$0xf]
        %v3007 = vld [vmem:[%s2995 + $0x2c] sm:$0xf]
        %v3008 = vld [vmem:[%s2995 + $0x30] sm:$0xf]
        %v3009 = vld [vmem:[%s2995 + $0x34] sm:$0xf]
        %v3010 = vld [vmem:[%s2995 + $0x38] sm:$0xf]
        %v3011 = vld [vmem:[%s2995 + $0x3c] sm:$0xf]
        %v3028 = vunpack.c.l.b16 %v2979
        %v3029 = vunpack.c.l.b16 %v2980
        %v3030 = vunpack.c.l.b16 %v2981
        %v3031 = vunpack.c.l.b16 %v2982
        %v3032 = vunpack.c.l.b16 %v2983
        %v3033 = vunpack.c.l.b16 %v2984
        %v3034 = vunpack.c.l.b16 %v2985
        %v3035 = vunpack.c.l.b16 %v2986
        %v3036 = vunpack.c.l.b16 %v2987
        %v3037 = vunpack.c.l.b16 %v2988
        %v3038 = vunpack.c.l.b16 %v2989
        %v3039 = vunpack.c.l.b16 %v2990
        %v3040 = vunpack.c.l.b16 %v2991
        %v3041 = vunpack.c.l.b16 %v2992
        %v3042 = vunpack.c.l.b16 %v2993
        %v3043 = vunpack.c.l.b16 %v2994
        %v3044 = vpack.c.b16 %v3029, %v3028
        %v3045 = vpack.c.b16 %v3031, %v3030
        %v3046 = vpack.c.b16 %v3033, %v3032
        %v3047 = vpack.c.b16 %v3035, %v3034
        %v3048 = vpack.c.b16 %v3037, %v3036
        %v3049 = vpack.c.b16 %v3039, %v3038
        %v3050 = vpack.c.b16 %v3041, %v3040
        %v3051 = vpack.c.b16 %v3043, %v3042
        %v3076 = vunpack.c.l.b16 %v2996
        %v3077 = vunpack.c.l.b16 %v2997
        %v3078 = vunpack.c.l.b16 %v2998
        %v3079 = vunpack.c.l.b16 %v2999
        %v3080 = vunpack.c.l.b16 %v3000
        %v3081 = vunpack.c.l.b16 %v3001
        %v3082 = vunpack.c.l.b16 %v3002
        %v3083 = vunpack.c.l.b16 %v3003
        %v3084 = vunpack.c.l.b16 %v3004
        %v3085 = vunpack.c.l.b16 %v3005
        %v3086 = vunpack.c.l.b16 %v3006
        %v3087 = vunpack.c.l.b16 %v3007
        %v3088 = vunpack.c.l.b16 %v3008
        %v3089 = vunpack.c.l.b16 %v3009
        %v3090 = vunpack.c.l.b16 %v3010
        %v3091 = vunpack.c.l.b16 %v3011
        %v3092 = vpack.c.b16 %v3077, %v3076
        %v3093 = vpack.c.b16 %v3079, %v3078
        %v3094 = vpack.c.b16 %v3081, %v3080
        %v3095 = vpack.c.b16 %v3083, %v3082
        %v3096 = vpack.c.b16 %v3085, %v3084
        %v3097 = vpack.c.b16 %v3087, %v3086
        %v3098 = vpack.c.b16 %v3089, %v3088
        %v3099 = vpack.c.b16 %v3091, %v3090
        %3108 = vmatprep.subr.bf16.mxu0 0
        %3109 = vmatpush1.bf16.msra.mxu0 %v3099
        %3110 = vmatprep.subr.bf16.mxu0 0
        %3111 = vmatpush1.bf16.msra.mxu0 %v3098
        %3112 = vmatprep.subr.bf16.mxu0 0
        %3113 = vmatpush1.bf16.msra.mxu0 %v3097
        %3114 = vmatprep.subr.bf16.mxu0 0
        %3115 = vmatpush1.bf16.msra.mxu0 %v3096
        %3116 = vmatprep.subr.bf16.mxu0 0
        %3117 = vmatpush1.bf16.msra.mxu0 %v3095
        %3118 = vmatprep.subr.bf16.mxu0 0
        %3119 = vmatpush1.bf16.msra.mxu0 %v3094
        %3120 = vmatprep.subr.bf16.mxu0 0
        %3121 = vmatpush1.bf16.msra.mxu0 %v3093
        %3122 = vmatprep.subr.bf16.mxu0 0
        %3123 = vmatpush1.bf16.msra.mxu0 %v3092
        %3124 = vmatprep.subr.bf16.mxu0 0
        %3125 = vmatpush2.bf16.msra.mxu0 0
        %3126 = vmatprep.subr.bf16.mxu0 0
        %3127 = vmatpush2.bf16.msra.mxu0 0
        %3128 = vmatprep.subr.bf16.mxu0 0
        %3129 = vmatpush2.bf16.msra.mxu0 0
        %3130 = vmatprep.subr.bf16.mxu0 0
        %3131 = vmatpush2.bf16.msra.mxu0 0
        %3132 = vmatprep.subr.bf16.mxu0 0
        %3133 = vmatpush2.bf16.msra.mxu0 0
        %3134 = vmatprep.subr.bf16.mxu0 0
        %3135 = vmatpush2.bf16.msra.mxu0 0
        %3136 = vmatprep.subr.bf16.mxu0 0
        %3137 = vmatpush2.bf16.msra.mxu0 0
        %3138 = vmatprep.subr.bf16.mxu0 0
        %3139 = vmatpush2.bf16.msra.mxu0 0
        %3140 = vmatprep.mubr.bf16.mxu0 0
        %3141 = vmatmul.mubr.bf16.gmra.mxu0 %v3044
        %v3142 = vpop.f32.mrf.mxu0
        %v3143 = vadd.f32 0.0, %v3142
        %v3144 = vpop.f32.mrf.mxu0
        %v3145 = vpop.f32.mrf.mxu0
        %v3146 = vadd.f32 0.0, %v3145
        %v3147 = vpop.f32.mrf.mxu0
        %3148 = vmatprep.mubr.bf16.mxu0 0
        %3149 = vmatmul.mubr.bf16.gmra.mxu0 %v3045
        %v3150 = vpop.f32.mrf.mxu0
        %v3151 = vadd.f32 0.0, %v3150
        %v3152 = vpop.f32.mrf.mxu0
        %v3153 = vpop.f32.mrf.mxu0
        %v3154 = vadd.f32 0.0, %v3153
        %v3155 = vpop.f32.mrf.mxu0
        %3156 = vmatprep.mubr.bf16.mxu0 0
        %3157 = vmatmul.mubr.bf16.gmra.mxu0 %v3046
        %v3158 = vpop.f32.mrf.mxu0
        %v3159 = vadd.f32 0.0, %v3158
        %v3160 = vpop.f32.mrf.mxu0
        %v3161 = vpop.f32.mrf.mxu0
        %v3162 = vadd.f32 0.0, %v3161
        %v3163 = vpop.f32.mrf.mxu0
        %3164 = vmatprep.mubr.bf16.mxu0 0
        %3165 = vmatmul.mubr.bf16.gmra.mxu0 %v3047
        %v3166 = vpop.f32.mrf.mxu0
        %v3167 = vadd.f32 0.0, %v3166
        %v3168 = vpop.f32.mrf.mxu0
        %v3169 = vpop.f32.mrf.mxu0
        %v3170 = vadd.f32 0.0, %v3169
        %v3171 = vpop.f32.mrf.mxu0
        %3172 = vmatprep.mubr.bf16.mxu0 0
        %3173 = vmatmul.mubr.bf16.gmra.mxu0 %v3048
        %v3174 = vpop.f32.mrf.mxu0
        %v3175 = vadd.f32 0.0, %v3174
        %v3176 = vpop.f32.mrf.mxu0
        %v3177 = vpop.f32.mrf.mxu0
        %v3178 = vadd.f32 0.0, %v3177
        %v3179 = vpop.f32.mrf.mxu0
        %3180 = vmatprep.mubr.bf16.mxu0 0
        %3181 = vmatmul.mubr.bf16.gmra.mxu0 %v3049
        %v3182 = vpop.f32.mrf.mxu0
        %v3183 = vadd.f32 0.0, %v3182
        %v3184 = vpop.f32.mrf.mxu0
        %v3185 = vpop.f32.mrf.mxu0
        %v3186 = vadd.f32 0.0, %v3185
        %v3187 = vpop.f32.mrf.mxu0
        %3188 = vmatprep.mubr.bf16.mxu0 0
        %3189 = vmatmul.mubr.bf16.gmra.mxu0 %v3050
        %v3190 = vpop.f32.mrf.mxu0
        %v3191 = vadd.f32 0.0, %v3190
        %v3192 = vpop.f32.mrf.mxu0
        %v3193 = vpop.f32.mrf.mxu0
        %v3194 = vadd.f32 0.0, %v3193
        %v3195 = vpop.f32.mrf.mxu0
        %3196 = vmatprep.mubr.bf16.mxu0 0
        %3197 = vmatmul.mubr.bf16.gmra.mxu0 %v3051
        %v3198 = vpop.f32.mrf.mxu0
        %v3199 = vadd.f32 0.0, %v3198
        %v3200 = vpop.f32.mrf.mxu0
        %v3201 = vpop.f32.mrf.mxu0
        %v3202 = vadd.f32 0.0, %v3201
        %v3203 = vpop.f32.mrf.mxu0
        %3204 = vdwg.mxu0
        %v3205 = vadd.f32 %v2963, %v3143
        %v3206 = vadd.f32 %v2964, %v3146
        %v3207 = vadd.f32 %v2965, %v3151
        %v3208 = vadd.f32 %v2966, %v3154
        %v3209 = vadd.f32 %v2967, %v3159
        %v3210 = vadd.f32 %v2968, %v3162
        %v3211 = vadd.f32 %v2969, %v3167
        %v3212 = vadd.f32 %v2970, %v3170
        %v3213 = vadd.f32 %v2971, %v3175
        %v3214 = vadd.f32 %v2972, %v3178
        %v3215 = vadd.f32 %v2973, %v3183
        %v3216 = vadd.f32 %v2974, %v3186
        %v3217 = vadd.f32 %v2975, %v3191
        %v3218 = vadd.f32 %v2976, %v3194
        %v3219 = vadd.f32 %v2977, %v3199
        %v3220 = vadd.f32 %v2978, %v3202
        %v3221 = vld [vmem:[%s2003 + $0x8] sm:$0xf]
        %v3222 = vld [vmem:[%s2003 + $0xc] sm:$0xf]
        %v3223 = vld [vmem:[%s2003 + $0x10] sm:$0xf]
        %v3224 = vld [vmem:[%s2003 + $0x14] sm:$0xf]
        %v3225 = vld [vmem:[%s2003 + $0x18] sm:$0xf]
        %v3226 = vld [vmem:[%s2003 + $0x1c] sm:$0xf]
        %v3227 = vld [vmem:[%s2003 + $0x20] sm:$0xf]
        %v3228 = vld [vmem:[%s2003 + $0x24] sm:$0xf]
        %v3229 = vld [vmem:[%s2003 + $0x28] sm:$0xf]
        %v3230 = vld [vmem:[%s2003 + $0x2c] sm:$0xf]
        %v3231 = vld [vmem:[%s2003 + $0x30] sm:$0xf]
        %v3232 = vld [vmem:[%s2003 + $0x34] sm:$0xf]
        %v3233 = vld [vmem:[%s2003 + $0x38] sm:$0xf]
        %v3234 = vld [vmem:[%s2003 + $0x3c] sm:$0xf]
        %v3235 = vld [vmem:[%s2003 + $0x40] sm:$0xf]
        %v3236 = vld [vmem:[%s2003 + $0x44] sm:$0xf]
        %s3237 = scalar_lea.vmem [#allocation8], 320
        %v3238 = vld [vmem:[%s3237] sm:$0xf]
        %v3239 = vld [vmem:[%s3237 + $0x4] sm:$0xf]
        %v3240 = vld [vmem:[%s3237 + $0x8] sm:$0xf]
        %v3241 = vld [vmem:[%s3237 + $0xc] sm:$0xf]
        %v3242 = vld [vmem:[%s3237 + $0x10] sm:$0xf]
        %v3243 = vld [vmem:[%s3237 + $0x14] sm:$0xf]
        %v3244 = vld [vmem:[%s3237 + $0x18] sm:$0xf]
        %v3245 = vld [vmem:[%s3237 + $0x1c] sm:$0xf]
        %v3246 = vld [vmem:[%s3237 + $0x20] sm:$0xf]
        %v3247 = vld [vmem:[%s3237 + $0x24] sm:$0xf]
        %v3248 = vld [vmem:[%s3237 + $0x28] sm:$0xf]
        %v3249 = vld [vmem:[%s3237 + $0x2c] sm:$0xf]
        %v3250 = vld [vmem:[%s3237 + $0x30] sm:$0xf]
        %v3251 = vld [vmem:[%s3237 + $0x34] sm:$0xf]
        %v3252 = vld [vmem:[%s3237 + $0x38] sm:$0xf]
        %v3253 = vld [vmem:[%s3237 + $0x3c] sm:$0xf]
        %v3270 = vunpack.c.l.b16 %v3221
        %v3271 = vunpack.c.l.b16 %v3222
        %v3272 = vunpack.c.l.b16 %v3223
        %v3273 = vunpack.c.l.b16 %v3224
        %v3274 = vunpack.c.l.b16 %v3225
        %v3275 = vunpack.c.l.b16 %v3226
        %v3276 = vunpack.c.l.b16 %v3227
        %v3277 = vunpack.c.l.b16 %v3228
        %v3278 = vunpack.c.l.b16 %v3229
        %v3279 = vunpack.c.l.b16 %v3230
        %v3280 = vunpack.c.l.b16 %v3231
        %v3281 = vunpack.c.l.b16 %v3232
        %v3282 = vunpack.c.l.b16 %v3233
        %v3283 = vunpack.c.l.b16 %v3234
        %v3284 = vunpack.c.l.b16 %v3235
        %v3285 = vunpack.c.l.b16 %v3236
        %v3286 = vpack.c.b16 %v3271, %v3270
        %v3287 = vpack.c.b16 %v3273, %v3272
        %v3288 = vpack.c.b16 %v3275, %v3274
        %v3289 = vpack.c.b16 %v3277, %v3276
        %v3290 = vpack.c.b16 %v3279, %v3278
        %v3291 = vpack.c.b16 %v3281, %v3280
        %v3292 = vpack.c.b16 %v3283, %v3282
        %v3293 = vpack.c.b16 %v3285, %v3284
        %v3318 = vunpack.c.l.b16 %v3238
        %v3319 = vunpack.c.l.b16 %v3239
        %v3320 = vunpack.c.l.b16 %v3240
        %v3321 = vunpack.c.l.b16 %v3241
        %v3322 = vunpack.c.l.b16 %v3242
        %v3323 = vunpack.c.l.b16 %v3243
        %v3324 = vunpack.c.l.b16 %v3244
        %v3325 = vunpack.c.l.b16 %v3245
        %v3326 = vunpack.c.l.b16 %v3246
        %v3327 = vunpack.c.l.b16 %v3247
        %v3328 = vunpack.c.l.b16 %v3248
        %v3329 = vunpack.c.l.b16 %v3249
        %v3330 = vunpack.c.l.b16 %v3250
        %v3331 = vunpack.c.l.b16 %v3251
        %v3332 = vunpack.c.l.b16 %v3252
        %v3333 = vunpack.c.l.b16 %v3253
        %v3334 = vpack.c.b16 %v3319, %v3318
        %v3335 = vpack.c.b16 %v3321, %v3320
        %v3336 = vpack.c.b16 %v3323, %v3322
        %v3337 = vpack.c.b16 %v3325, %v3324
        %v3338 = vpack.c.b16 %v3327, %v3326
        %v3339 = vpack.c.b16 %v3329, %v3328
        %v3340 = vpack.c.b16 %v3331, %v3330
        %v3341 = vpack.c.b16 %v3333, %v3332
        %3350 = vmatprep.subr.bf16.mxu0 0
        %3351 = vmatpush1.bf16.msra.mxu0 %v3341
        %3352 = vmatprep.subr.bf16.mxu0 0
        %3353 = vmatpush1.bf16.msra.mxu0 %v3340
        %3354 = vmatprep.subr.bf16.mxu0 0
        %3355 = vmatpush1.bf16.msra.mxu0 %v3339
        %3356 = vmatprep.subr.bf16.mxu0 0
        %3357 = vmatpush1.bf16.msra.mxu0 %v3338
        %3358 = vmatprep.subr.bf16.mxu0 0
        %3359 = vmatpush1.bf16.msra.mxu0 %v3337
        %3360 = vmatprep.subr.bf16.mxu0 0
        %3361 = vmatpush1.bf16.msra.mxu0 %v3336
        %3362 = vmatprep.subr.bf16.mxu0 0
        %3363 = vmatpush1.bf16.msra.mxu0 %v3335
        %3364 = vmatprep.subr.bf16.mxu0 0
        %3365 = vmatpush1.bf16.msra.mxu0 %v3334
        %3366 = vmatprep.subr.bf16.mxu0 0
        %3367 = vmatpush2.bf16.msra.mxu0 0
        %3368 = vmatprep.subr.bf16.mxu0 0
        %3369 = vmatpush2.bf16.msra.mxu0 0
        %3370 = vmatprep.subr.bf16.mxu0 0
        %3371 = vmatpush2.bf16.msra.mxu0 0
        %3372 = vmatprep.subr.bf16.mxu0 0
        %3373 = vmatpush2.bf16.msra.mxu0 0
        %3374 = vmatprep.subr.bf16.mxu0 0
        %3375 = vmatpush2.bf16.msra.mxu0 0
        %3376 = vmatprep.subr.bf16.mxu0 0
        %3377 = vmatpush2.bf16.msra.mxu0 0
        %3378 = vmatprep.subr.bf16.mxu0 0
        %3379 = vmatpush2.bf16.msra.mxu0 0
        %3380 = vmatprep.subr.bf16.mxu0 0
        %3381 = vmatpush2.bf16.msra.mxu0 0
        %3382 = vmatprep.mubr.bf16.mxu0 0
        %3383 = vmatmul.mubr.bf16.gmra.mxu0 %v3286
        %v3384 = vpop.f32.mrf.mxu0
        %v3385 = vadd.f32 0.0, %v3384
        %v3386 = vpop.f32.mrf.mxu0
        %v3387 = vpop.f32.mrf.mxu0
        %v3388 = vadd.f32 0.0, %v3387
        %v3389 = vpop.f32.mrf.mxu0
        %3390 = vmatprep.mubr.bf16.mxu0 0
        %3391 = vmatmul.mubr.bf16.gmra.mxu0 %v3287
        %v3392 = vpop.f32.mrf.mxu0
        %v3393 = vadd.f32 0.0, %v3392
        %v3394 = vpop.f32.mrf.mxu0
        %v3395 = vpop.f32.mrf.mxu0
        %v3396 = vadd.f32 0.0, %v3395
        %v3397 = vpop.f32.mrf.mxu0
        %3398 = vmatprep.mubr.bf16.mxu0 0
        %3399 = vmatmul.mubr.bf16.gmra.mxu0 %v3288
        %v3400 = vpop.f32.mrf.mxu0
        %v3401 = vadd.f32 0.0, %v3400
        %v3402 = vpop.f32.mrf.mxu0
        %v3403 = vpop.f32.mrf.mxu0
        %v3404 = vadd.f32 0.0, %v3403
        %v3405 = vpop.f32.mrf.mxu0
        %3406 = vmatprep.mubr.bf16.mxu0 0
        %3407 = vmatmul.mubr.bf16.gmra.mxu0 %v3289
        %v3408 = vpop.f32.mrf.mxu0
        %v3409 = vadd.f32 0.0, %v3408
        %v3410 = vpop.f32.mrf.mxu0
        %v3411 = vpop.f32.mrf.mxu0
        %v3412 = vadd.f32 0.0, %v3411
        %v3413 = vpop.f32.mrf.mxu0
        %3414 = vmatprep.mubr.bf16.mxu0 0
        %3415 = vmatmul.mubr.bf16.gmra.mxu0 %v3290
        %v3416 = vpop.f32.mrf.mxu0
        %v3417 = vadd.f32 0.0, %v3416
        %v3418 = vpop.f32.mrf.mxu0
        %v3419 = vpop.f32.mrf.mxu0
        %v3420 = vadd.f32 0.0, %v3419
        %v3421 = vpop.f32.mrf.mxu0
        %3422 = vmatprep.mubr.bf16.mxu0 0
        %3423 = vmatmul.mubr.bf16.gmra.mxu0 %v3291
        %v3424 = vpop.f32.mrf.mxu0
        %v3425 = vadd.f32 0.0, %v3424
        %v3426 = vpop.f32.mrf.mxu0
        %v3427 = vpop.f32.mrf.mxu0
        %v3428 = vadd.f32 0.0, %v3427
        %v3429 = vpop.f32.mrf.mxu0
        %3430 = vmatprep.mubr.bf16.mxu0 0
        %3431 = vmatmul.mubr.bf16.gmra.mxu0 %v3292
        %v3432 = vpop.f32.mrf.mxu0
        %v3433 = vadd.f32 0.0, %v3432
        %v3434 = vpop.f32.mrf.mxu0
        %v3435 = vpop.f32.mrf.mxu0
        %v3436 = vadd.f32 0.0, %v3435
        %v3437 = vpop.f32.mrf.mxu0
        %3438 = vmatprep.mubr.bf16.mxu0 0
        %3439 = vmatmul.mubr.bf16.gmra.mxu0 %v3293
        %v3440 = vpop.f32.mrf.mxu0
        %v3441 = vadd.f32 0.0, %v3440
        %v3442 = vpop.f32.mrf.mxu0
        %v3443 = vpop.f32.mrf.mxu0
        %v3444 = vadd.f32 0.0, %v3443
        %v3445 = vpop.f32.mrf.mxu0
        %3446 = vdwg.mxu0
        %v3447 = vadd.f32 %v3205, %v3385
        %v3448 = vadd.f32 %v3206, %v3388
        %v3449 = vadd.f32 %v3207, %v3393
        %v3450 = vadd.f32 %v3208, %v3396
        %v3451 = vadd.f32 %v3209, %v3401
        %v3452 = vadd.f32 %v3210, %v3404
        %v3453 = vadd.f32 %v3211, %v3409
        %v3454 = vadd.f32 %v3212, %v3412
        %v3455 = vadd.f32 %v3213, %v3417
        %v3456 = vadd.f32 %v3214, %v3420
        %v3457 = vadd.f32 %v3215, %v3425
        %v3458 = vadd.f32 %v3216, %v3428
        %v3459 = vadd.f32 %v3217, %v3433
        %v3460 = vadd.f32 %v3218, %v3436
        %v3461 = vadd.f32 %v3219, %v3441
        %v3462 = vadd.f32 %v3220, %v3444
        %v3463 = vld [vmem:[#allocation2 + $0x10] sm:$0xf]
        %v3464 = vld [vmem:[#allocation2 + $0x14] sm:$0xf]
        %v3465 = vld [vmem:[#allocation2 + $0x18] sm:$0xf]
        %v3466 = vld [vmem:[#allocation2 + $0x1c] sm:$0xf]
        %v3467 = vld [vmem:[#allocation2 + $0x20] sm:$0xf]
        %v3468 = vld [vmem:[#allocation2 + $0x24] sm:$0xf]
        %v3469 = vld [vmem:[#allocation2 + $0x28] sm:$0xf]
        %v3470 = vld [vmem:[#allocation2 + $0x2c] sm:$0xf]
        %v3471 = vld [vmem:[#allocation2 + $0x30] sm:$0xf]
        %v3472 = vld [vmem:[#allocation2 + $0x34] sm:$0xf]
        %v3473 = vld [vmem:[#allocation2 + $0x38] sm:$0xf]
        %v3474 = vld [vmem:[#allocation2 + $0x3c] sm:$0xf]
        %v3475 = vld [vmem:[#allocation2 + $0x40] sm:$0xf]
        %v3476 = vld [vmem:[#allocation2 + $0x44] sm:$0xf]
        %v3477 = vld [vmem:[#allocation2 + $0x48] sm:$0xf]
        %v3478 = vld [vmem:[#allocation2 + $0x4c] sm:$0xf]
        %s3479 = scalar_lea.vmem [#allocation8], 384
        %v3480 = vld [vmem:[%s3479] sm:$0xf]
        %v3481 = vld [vmem:[%s3479 + $0x4] sm:$0xf]
        %v3482 = vld [vmem:[%s3479 + $0x8] sm:$0xf]
        %v3483 = vld [vmem:[%s3479 + $0xc] sm:$0xf]
        %v3484 = vld [vmem:[%s3479 + $0x10] sm:$0xf]
        %v3485 = vld [vmem:[%s3479 + $0x14] sm:$0xf]
        %v3486 = vld [vmem:[%s3479 + $0x18] sm:$0xf]
        %v3487 = vld [vmem:[%s3479 + $0x1c] sm:$0xf]
        %v3488 = vld [vmem:[%s3479 + $0x20] sm:$0xf]
        %v3489 = vld [vmem:[%s3479 + $0x24] sm:$0xf]
        %v3490 = vld [vmem:[%s3479 + $0x28] sm:$0xf]
        %v3491 = vld [vmem:[%s3479 + $0x2c] sm:$0xf]
        %v3492 = vld [vmem:[%s3479 + $0x30] sm:$0xf]
        %v3493 = vld [vmem:[%s3479 + $0x34] sm:$0xf]
        %v3494 = vld [vmem:[%s3479 + $0x38] sm:$0xf]
        %v3495 = vld [vmem:[%s3479 + $0x3c] sm:$0xf]
        %v3512 = vunpack.c.l.b16 %v3463
        %v3513 = vunpack.c.l.b16 %v3464
        %v3514 = vunpack.c.l.b16 %v3465
        %v3515 = vunpack.c.l.b16 %v3466
        %v3516 = vunpack.c.l.b16 %v3467
        %v3517 = vunpack.c.l.b16 %v3468
        %v3518 = vunpack.c.l.b16 %v3469
        %v3519 = vunpack.c.l.b16 %v3470
        %v3520 = vunpack.c.l.b16 %v3471
        %v3521 = vunpack.c.l.b16 %v3472
        %v3522 = vunpack.c.l.b16 %v3473
        %v3523 = vunpack.c.l.b16 %v3474
        %v3524 = vunpack.c.l.b16 %v3475
        %v3525 = vunpack.c.l.b16 %v3476
        %v3526 = vunpack.c.l.b16 %v3477
        %v3527 = vunpack.c.l.b16 %v3478
        %v3528 = vpack.c.b16 %v3513, %v3512
        %v3529 = vpack.c.b16 %v3515, %v3514
        %v3530 = vpack.c.b16 %v3517, %v3516
        %v3531 = vpack.c.b16 %v3519, %v3518
        %v3532 = vpack.c.b16 %v3521, %v3520
        %v3533 = vpack.c.b16 %v3523, %v3522
        %v3534 = vpack.c.b16 %v3525, %v3524
        %v3535 = vpack.c.b16 %v3527, %v3526
        %v3560 = vunpack.c.l.b16 %v3480
        %v3561 = vunpack.c.l.b16 %v3481
        %v3562 = vunpack.c.l.b16 %v3482
        %v3563 = vunpack.c.l.b16 %v3483
        %v3564 = vunpack.c.l.b16 %v3484
        %v3565 = vunpack.c.l.b16 %v3485
        %v3566 = vunpack.c.l.b16 %v3486
        %v3567 = vunpack.c.l.b16 %v3487
        %v3568 = vunpack.c.l.b16 %v3488
        %v3569 = vunpack.c.l.b16 %v3489
        %v3570 = vunpack.c.l.b16 %v3490
        %v3571 = vunpack.c.l.b16 %v3491
        %v3572 = vunpack.c.l.b16 %v3492
        %v3573 = vunpack.c.l.b16 %v3493
        %v3574 = vunpack.c.l.b16 %v3494
        %v3575 = vunpack.c.l.b16 %v3495
        %v3576 = vpack.c.b16 %v3561, %v3560
        %v3577 = vpack.c.b16 %v3563, %v3562
        %v3578 = vpack.c.b16 %v3565, %v3564
        %v3579 = vpack.c.b16 %v3567, %v3566
        %v3580 = vpack.c.b16 %v3569, %v3568
        %v3581 = vpack.c.b16 %v3571, %v3570
        %v3582 = vpack.c.b16 %v3573, %v3572
        %v3583 = vpack.c.b16 %v3575, %v3574
        %3592 = vmatprep.subr.bf16.mxu0 0
        %3593 = vmatpush1.bf16.msra.mxu0 %v3583
        %3594 = vmatprep.subr.bf16.mxu0 0
        %3595 = vmatpush1.bf16.msra.mxu0 %v3582
        %3596 = vmatprep.subr.bf16.mxu0 0
        %3597 = vmatpush1.bf16.msra.mxu0 %v3581
        %3598 = vmatprep.subr.bf16.mxu0 0
        %3599 = vmatpush1.bf16.msra.mxu0 %v3580
        %3600 = vmatprep.subr.bf16.mxu0 0
        %3601 = vmatpush1.bf16.msra.mxu0 %v3579
        %3602 = vmatprep.subr.bf16.mxu0 0
        %3603 = vmatpush1.bf16.msra.mxu0 %v3578
        %3604 = vmatprep.subr.bf16.mxu0 0
        %3605 = vmatpush1.bf16.msra.mxu0 %v3577
        %3606 = vmatprep.subr.bf16.mxu0 0
        %3607 = vmatpush1.bf16.msra.mxu0 %v3576
        %3608 = vmatprep.subr.bf16.mxu0 0
        %3609 = vmatpush2.bf16.msra.mxu0 0
        %3610 = vmatprep.subr.bf16.mxu0 0
        %3611 = vmatpush2.bf16.msra.mxu0 0
        %3612 = vmatprep.subr.bf16.mxu0 0
        %3613 = vmatpush2.bf16.msra.mxu0 0
        %3614 = vmatprep.subr.bf16.mxu0 0
        %3615 = vmatpush2.bf16.msra.mxu0 0
        %3616 = vmatprep.subr.bf16.mxu0 0
        %3617 = vmatpush2.bf16.msra.mxu0 0
        %3618 = vmatprep.subr.bf16.mxu0 0
        %3619 = vmatpush2.bf16.msra.mxu0 0
        %3620 = vmatprep.subr.bf16.mxu0 0
        %3621 = vmatpush2.bf16.msra.mxu0 0
        %3622 = vmatprep.subr.bf16.mxu0 0
        %3623 = vmatpush2.bf16.msra.mxu0 0
        %3624 = vmatprep.mubr.bf16.mxu0 0
        %3625 = vmatmul.mubr.bf16.gmra.mxu0 %v3528
        %v3626 = vpop.f32.mrf.mxu0
        %v3627 = vadd.f32 0.0, %v3626
        %v3628 = vpop.f32.mrf.mxu0
        %v3629 = vpop.f32.mrf.mxu0
        %v3630 = vadd.f32 0.0, %v3629
        %v3631 = vpop.f32.mrf.mxu0
        %3632 = vmatprep.mubr.bf16.mxu0 0
        %3633 = vmatmul.mubr.bf16.gmra.mxu0 %v3529
        %v3634 = vpop.f32.mrf.mxu0
        %v3635 = vadd.f32 0.0, %v3634
        %v3636 = vpop.f32.mrf.mxu0
        %v3637 = vpop.f32.mrf.mxu0
        %v3638 = vadd.f32 0.0, %v3637
        %v3639 = vpop.f32.mrf.mxu0
        %3640 = vmatprep.mubr.bf16.mxu0 0
        %3641 = vmatmul.mubr.bf16.gmra.mxu0 %v3530
        %v3642 = vpop.f32.mrf.mxu0
        %v3643 = vadd.f32 0.0, %v3642
        %v3644 = vpop.f32.mrf.mxu0
        %v3645 = vpop.f32.mrf.mxu0
        %v3646 = vadd.f32 0.0, %v3645
        %v3647 = vpop.f32.mrf.mxu0
        %3648 = vmatprep.mubr.bf16.mxu0 0
        %3649 = vmatmul.mubr.bf16.gmra.mxu0 %v3531
        %v3650 = vpop.f32.mrf.mxu0
        %v3651 = vadd.f32 0.0, %v3650
        %v3652 = vpop.f32.mrf.mxu0
        %v3653 = vpop.f32.mrf.mxu0
        %v3654 = vadd.f32 0.0, %v3653
        %v3655 = vpop.f32.mrf.mxu0
        %3656 = vmatprep.mubr.bf16.mxu0 0
        %3657 = vmatmul.mubr.bf16.gmra.mxu0 %v3532
        %v3658 = vpop.f32.mrf.mxu0
        %v3659 = vadd.f32 0.0, %v3658
        %v3660 = vpop.f32.mrf.mxu0
        %v3661 = vpop.f32.mrf.mxu0
        %v3662 = vadd.f32 0.0, %v3661
        %v3663 = vpop.f32.mrf.mxu0
        %3664 = vmatprep.mubr.bf16.mxu0 0
        %3665 = vmatmul.mubr.bf16.gmra.mxu0 %v3533
        %v3666 = vpop.f32.mrf.mxu0
        %v3667 = vadd.f32 0.0, %v3666
        %v3668 = vpop.f32.mrf.mxu0
        %v3669 = vpop.f32.mrf.mxu0
        %v3670 = vadd.f32 0.0, %v3669
        %v3671 = vpop.f32.mrf.mxu0
        %3672 = vmatprep.mubr.bf16.mxu0 0
        %3673 = vmatmul.mubr.bf16.gmra.mxu0 %v3534
        %v3674 = vpop.f32.mrf.mxu0
        %v3675 = vadd.f32 0.0, %v3674
        %v3676 = vpop.f32.mrf.mxu0
        %v3677 = vpop.f32.mrf.mxu0
        %v3678 = vadd.f32 0.0, %v3677
        %v3679 = vpop.f32.mrf.mxu0
        %3680 = vmatprep.mubr.bf16.mxu0 0
        %3681 = vmatmul.mubr.bf16.gmra.mxu0 %v3535
        %v3682 = vpop.f32.mrf.mxu0
        %v3683 = vadd.f32 0.0, %v3682
        %v3684 = vpop.f32.mrf.mxu0
        %v3685 = vpop.f32.mrf.mxu0
        %v3686 = vadd.f32 0.0, %v3685
        %v3687 = vpop.f32.mrf.mxu0
        %3688 = vdwg.mxu0
        %v3689 = vadd.f32 %v3447, %v3627
        %v3690 = vadd.f32 %v3448, %v3630
        %v3691 = vadd.f32 %v3449, %v3635
        %v3692 = vadd.f32 %v3450, %v3638
        %v3693 = vadd.f32 %v3451, %v3643
        %v3694 = vadd.f32 %v3452, %v3646
        %v3695 = vadd.f32 %v3453, %v3651
        %v3696 = vadd.f32 %v3454, %v3654
        %v3697 = vadd.f32 %v3455, %v3659
        %v3698 = vadd.f32 %v3456, %v3662
        %v3699 = vadd.f32 %v3457, %v3667
        %v3700 = vadd.f32 %v3458, %v3670
        %v3701 = vadd.f32 %v3459, %v3675
        %v3702 = vadd.f32 %v3460, %v3678
        %v3703 = vadd.f32 %v3461, %v3683
        %v3704 = vadd.f32 %v3462, %v3686
        %v3705 = vld [vmem:[%s1600 + $0x10] sm:$0xf]
        %v3706 = vld [vmem:[%s1600 + $0x14] sm:$0xf]
        %v3707 = vld [vmem:[%s1600 + $0x18] sm:$0xf]
        %v3708 = vld [vmem:[%s1600 + $0x1c] sm:$0xf]
        %v3709 = vld [vmem:[%s1600 + $0x20] sm:$0xf]
        %v3710 = vld [vmem:[%s1600 + $0x24] sm:$0xf]
        %v3711 = vld [vmem:[%s1600 + $0x28] sm:$0xf]
        %v3712 = vld [vmem:[%s1600 + $0x2c] sm:$0xf]
        %v3713 = vld [vmem:[%s1600 + $0x30] sm:$0xf]
        %v3714 = vld [vmem:[%s1600 + $0x34] sm:$0xf]
        %v3715 = vld [vmem:[%s1600 + $0x38] sm:$0xf]
        %v3716 = vld [vmem:[%s1600 + $0x3c] sm:$0xf]
        %v3717 = vld [vmem:[%s1600 + $0x40] sm:$0xf]
        %v3718 = vld [vmem:[%s1600 + $0x44] sm:$0xf]
        %v3719 = vld [vmem:[%s1600 + $0x48] sm:$0xf]
        %v3720 = vld [vmem:[%s1600 + $0x4c] sm:$0xf]
        %s3721 = scalar_lea.vmem [#allocation8], 448
        %v3722 = vld [vmem:[%s3721] sm:$0xf]
        %v3723 = vld [vmem:[%s3721 + $0x4] sm:$0xf]
        %v3724 = vld [vmem:[%s3721 + $0x8] sm:$0xf]
        %v3725 = vld [vmem:[%s3721 + $0xc] sm:$0xf]
        %v3726 = vld [vmem:[%s3721 + $0x10] sm:$0xf]
        %v3727 = vld [vmem:[%s3721 + $0x14] sm:$0xf]
        %v3728 = vld [vmem:[%s3721 + $0x18] sm:$0xf]
        %v3729 = vld [vmem:[%s3721 + $0x1c] sm:$0xf]
        %v3730 = vld [vmem:[%s3721 + $0x20] sm:$0xf]
        %v3731 = vld [vmem:[%s3721 + $0x24] sm:$0xf]
        %v3732 = vld [vmem:[%s3721 + $0x28] sm:$0xf]
        %v3733 = vld [vmem:[%s3721 + $0x2c] sm:$0xf]
        %v3734 = vld [vmem:[%s3721 + $0x30] sm:$0xf]
        %v3735 = vld [vmem:[%s3721 + $0x34] sm:$0xf]
        %v3736 = vld [vmem:[%s3721 + $0x38] sm:$0xf]
        %v3737 = vld [vmem:[%s3721 + $0x3c] sm:$0xf]
        %v3754 = vunpack.c.l.b16 %v3705
        %v3755 = vunpack.c.l.b16 %v3706
        %v3756 = vunpack.c.l.b16 %v3707
        %v3757 = vunpack.c.l.b16 %v3708
        %v3758 = vunpack.c.l.b16 %v3709
        %v3759 = vunpack.c.l.b16 %v3710
        %v3760 = vunpack.c.l.b16 %v3711
        %v3761 = vunpack.c.l.b16 %v3712
        %v3762 = vunpack.c.l.b16 %v3713
        %v3763 = vunpack.c.l.b16 %v3714
        %v3764 = vunpack.c.l.b16 %v3715
        %v3765 = vunpack.c.l.b16 %v3716
        %v3766 = vunpack.c.l.b16 %v3717
        %v3767 = vunpack.c.l.b16 %v3718
        %v3768 = vunpack.c.l.b16 %v3719
        %v3769 = vunpack.c.l.b16 %v3720
        %v3770 = vpack.c.b16 %v3755, %v3754
        %v3771 = vpack.c.b16 %v3757, %v3756
        %v3772 = vpack.c.b16 %v3759, %v3758
        %v3773 = vpack.c.b16 %v3761, %v3760
        %v3774 = vpack.c.b16 %v3763, %v3762
        %v3775 = vpack.c.b16 %v3765, %v3764
        %v3776 = vpack.c.b16 %v3767, %v3766
        %v3777 = vpack.c.b16 %v3769, %v3768
        %v3802 = vunpack.c.l.b16 %v3722
        %v3803 = vunpack.c.l.b16 %v3723
        %v3804 = vunpack.c.l.b16 %v3724
        %v3805 = vunpack.c.l.b16 %v3725
        %v3806 = vunpack.c.l.b16 %v3726
        %v3807 = vunpack.c.l.b16 %v3727
        %v3808 = vunpack.c.l.b16 %v3728
        %v3809 = vunpack.c.l.b16 %v3729
        %v3810 = vunpack.c.l.b16 %v3730
        %v3811 = vunpack.c.l.b16 %v3731
        %v3812 = vunpack.c.l.b16 %v3732
        %v3813 = vunpack.c.l.b16 %v3733
        %v3814 = vunpack.c.l.b16 %v3734
        %v3815 = vunpack.c.l.b16 %v3735
        %v3816 = vunpack.c.l.b16 %v3736
        %v3817 = vunpack.c.l.b16 %v3737
        %v3818 = vpack.c.b16 %v3803, %v3802
        %v3819 = vpack.c.b16 %v3805, %v3804
        %v3820 = vpack.c.b16 %v3807, %v3806
        %v3821 = vpack.c.b16 %v3809, %v3808
        %v3822 = vpack.c.b16 %v3811, %v3810
        %v3823 = vpack.c.b16 %v3813, %v3812
        %v3824 = vpack.c.b16 %v3815, %v3814
        %v3825 = vpack.c.b16 %v3817, %v3816
        %3834 = vmatprep.subr.bf16.mxu0 0
        %3835 = vmatpush1.bf16.msra.mxu0 %v3825
        %3836 = vmatprep.subr.bf16.mxu0 0
        %3837 = vmatpush1.bf16.msra.mxu0 %v3824
        %3838 = vmatprep.subr.bf16.mxu0 0
        %3839 = vmatpush1.bf16.msra.mxu0 %v3823
        %3840 = vmatprep.subr.bf16.mxu0 0
        %3841 = vmatpush1.bf16.msra.mxu0 %v3822
        %3842 = vmatprep.subr.bf16.mxu0 0
        %3843 = vmatpush1.bf16.msra.mxu0 %v3821
        %3844 = vmatprep.subr.bf16.mxu0 0
        %3845 = vmatpush1.bf16.msra.mxu0 %v3820
        %3846 = vmatprep.subr.bf16.mxu0 0
        %3847 = vmatpush1.bf16.msra.mxu0 %v3819
        %3848 = vmatprep.subr.bf16.mxu0 0
        %3849 = vmatpush1.bf16.msra.mxu0 %v3818
        %3850 = vmatprep.subr.bf16.mxu0 0
        %3851 = vmatpush2.bf16.msra.mxu0 0
        %3852 = vmatprep.subr.bf16.mxu0 0
        %3853 = vmatpush2.bf16.msra.mxu0 0
        %3854 = vmatprep.subr.bf16.mxu0 0
        %3855 = vmatpush2.bf16.msra.mxu0 0
        %3856 = vmatprep.subr.bf16.mxu0 0
        %3857 = vmatpush2.bf16.msra.mxu0 0
        %3858 = vmatprep.subr.bf16.mxu0 0
        %3859 = vmatpush2.bf16.msra.mxu0 0
        %3860 = vmatprep.subr.bf16.mxu0 0
        %3861 = vmatpush2.bf16.msra.mxu0 0
        %3862 = vmatprep.subr.bf16.mxu0 0
        %3863 = vmatpush2.bf16.msra.mxu0 0
        %3864 = vmatprep.subr.bf16.mxu0 0
        %3865 = vmatpush2.bf16.msra.mxu0 0
        %3866 = vmatprep.mubr.bf16.mxu0 0
        %3867 = vmatmul.mubr.bf16.gmra.mxu0 %v3770
        %v3868 = vpop.f32.mrf.mxu0
        %v3869 = vadd.f32 0.0, %v3868
        %v3870 = vpop.f32.mrf.mxu0
        %v3871 = vpop.f32.mrf.mxu0
        %v3872 = vadd.f32 0.0, %v3871
        %v3873 = vpop.f32.mrf.mxu0
        %3874 = vmatprep.mubr.bf16.mxu0 0
        %3875 = vmatmul.mubr.bf16.gmra.mxu0 %v3771
        %v3876 = vpop.f32.mrf.mxu0
        %v3877 = vadd.f32 0.0, %v3876
        %v3878 = vpop.f32.mrf.mxu0
        %v3879 = vpop.f32.mrf.mxu0
        %v3880 = vadd.f32 0.0, %v3879
        %v3881 = vpop.f32.mrf.mxu0
        %3882 = vmatprep.mubr.bf16.mxu0 0
        %3883 = vmatmul.mubr.bf16.gmra.mxu0 %v3772
        %v3884 = vpop.f32.mrf.mxu0
        %v3885 = vadd.f32 0.0, %v3884
        %v3886 = vpop.f32.mrf.mxu0
        %v3887 = vpop.f32.mrf.mxu0
        %v3888 = vadd.f32 0.0, %v3887
        %v3889 = vpop.f32.mrf.mxu0
        %3890 = vmatprep.mubr.bf16.mxu0 0
        %3891 = vmatmul.mubr.bf16.gmra.mxu0 %v3773
        %v3892 = vpop.f32.mrf.mxu0
        %v3893 = vadd.f32 0.0, %v3892
        %v3894 = vpop.f32.mrf.mxu0
        %v3895 = vpop.f32.mrf.mxu0
        %v3896 = vadd.f32 0.0, %v3895
        %v3897 = vpop.f32.mrf.mxu0
        %3898 = vmatprep.mubr.bf16.mxu0 0
        %3899 = vmatmul.mubr.bf16.gmra.mxu0 %v3774
        %v3900 = vpop.f32.mrf.mxu0
        %v3901 = vadd.f32 0.0, %v3900
        %v3902 = vpop.f32.mrf.mxu0
        %v3903 = vpop.f32.mrf.mxu0
        %v3904 = vadd.f32 0.0, %v3903
        %v3905 = vpop.f32.mrf.mxu0
        %3906 = vmatprep.mubr.bf16.mxu0 0
        %3907 = vmatmul.mubr.bf16.gmra.mxu0 %v3775
        %v3908 = vpop.f32.mrf.mxu0
        %v3909 = vadd.f32 0.0, %v3908
        %v3910 = vpop.f32.mrf.mxu0
        %v3911 = vpop.f32.mrf.mxu0
        %v3912 = vadd.f32 0.0, %v3911
        %v3913 = vpop.f32.mrf.mxu0
        %3914 = vmatprep.mubr.bf16.mxu0 0
        %3915 = vmatmul.mubr.bf16.gmra.mxu0 %v3776
        %v3916 = vpop.f32.mrf.mxu0
        %v3917 = vadd.f32 0.0, %v3916
        %v3918 = vpop.f32.mrf.mxu0
        %v3919 = vpop.f32.mrf.mxu0
        %v3920 = vadd.f32 0.0, %v3919
        %v3921 = vpop.f32.mrf.mxu0
        %3922 = vmatprep.mubr.bf16.mxu0 0
        %3923 = vmatmul.mubr.bf16.gmra.mxu0 %v3777
        %v3924 = vpop.f32.mrf.mxu0
        %v3925 = vadd.f32 0.0, %v3924
        %v3926 = vpop.f32.mrf.mxu0
        %v3927 = vpop.f32.mrf.mxu0
        %v3928 = vadd.f32 0.0, %v3927
        %v3929 = vpop.f32.mrf.mxu0
        %3930 = vdwg.mxu0
        %v3931 = vadd.f32 %v3689, %v3869
        %v3932 = vadd.f32 %v3690, %v3872
        %v3933 = vadd.f32 %v3691, %v3877
        %v3934 = vadd.f32 %v3692, %v3880
        %v3935 = vadd.f32 %v3693, %v3885
        %v3936 = vadd.f32 %v3694, %v3888
        %v3937 = vadd.f32 %v3695, %v3893
        %v3938 = vadd.f32 %v3696, %v3896
        %v3939 = vadd.f32 %v3697, %v3901
        %v3940 = vadd.f32 %v3698, %v3904
        %v3941 = vadd.f32 %v3699, %v3909
        %v3942 = vadd.f32 %v3700, %v3912
        %v3943 = vadd.f32 %v3701, %v3917
        %v3944 = vadd.f32 %v3702, %v3920
        %v3945 = vadd.f32 %v3703, %v3925
        %v3946 = vadd.f32 %v3704, %v3928
        %v3947 = vld [vmem:[%s2003 + $0x10] sm:$0xf]
        %v3948 = vld [vmem:[%s2003 + $0x14] sm:$0xf]
        %v3949 = vld [vmem:[%s2003 + $0x18] sm:$0xf]
        %v3950 = vld [vmem:[%s2003 + $0x1c] sm:$0xf]
        %v3951 = vld [vmem:[%s2003 + $0x20] sm:$0xf]
        %v3952 = vld [vmem:[%s2003 + $0x24] sm:$0xf]
        %v3953 = vld [vmem:[%s2003 + $0x28] sm:$0xf]
        %v3954 = vld [vmem:[%s2003 + $0x2c] sm:$0xf]
        %v3955 = vld [vmem:[%s2003 + $0x30] sm:$0xf]
        %v3956 = vld [vmem:[%s2003 + $0x34] sm:$0xf]
        %v3957 = vld [vmem:[%s2003 + $0x38] sm:$0xf]
        %v3958 = vld [vmem:[%s2003 + $0x3c] sm:$0xf]
        %v3959 = vld [vmem:[%s2003 + $0x40] sm:$0xf]
        %v3960 = vld [vmem:[%s2003 + $0x44] sm:$0xf]
        %v3961 = vld [vmem:[%s2003 + $0x48] sm:$0xf]
        %v3962 = vld [vmem:[%s2003 + $0x4c] sm:$0xf]
        %s3963 = scalar_lea.vmem [#allocation8], 512
        %v3964 = vld [vmem:[%s3963] sm:$0xf]
        %v3965 = vld [vmem:[%s3963 + $0x4] sm:$0xf]
        %v3966 = vld [vmem:[%s3963 + $0x8] sm:$0xf]
        %v3967 = vld [vmem:[%s3963 + $0xc] sm:$0xf]
        %v3968 = vld [vmem:[%s3963 + $0x10] sm:$0xf]
        %v3969 = vld [vmem:[%s3963 + $0x14] sm:$0xf]
        %v3970 = vld [vmem:[%s3963 + $0x18] sm:$0xf]
        %v3971 = vld [vmem:[%s3963 + $0x1c] sm:$0xf]
        %v3972 = vld [vmem:[%s3963 + $0x20] sm:$0xf]
        %v3973 = vld [vmem:[%s3963 + $0x24] sm:$0xf]
        %v3974 = vld [vmem:[%s3963 + $0x28] sm:$0xf]
        %v3975 = vld [vmem:[%s3963 + $0x2c] sm:$0xf]
        %v3976 = vld [vmem:[%s3963 + $0x30] sm:$0xf]
        %v3977 = vld [vmem:[%s3963 + $0x34] sm:$0xf]
        %v3978 = vld [vmem:[%s3963 + $0x38] sm:$0xf]
        %v3979 = vld [vmem:[%s3963 + $0x3c] sm:$0xf]
        %v3996 = vunpack.c.l.b16 %v3947
        %v3997 = vunpack.c.l.b16 %v3948
        %v3998 = vunpack.c.l.b16 %v3949
        %v3999 = vunpack.c.l.b16 %v3950
        %v4000 = vunpack.c.l.b16 %v3951
        %v4001 = vunpack.c.l.b16 %v3952
        %v4002 = vunpack.c.l.b16 %v3953
        %v4003 = vunpack.c.l.b16 %v3954
        %v4004 = vunpack.c.l.b16 %v3955
        %v4005 = vunpack.c.l.b16 %v3956
        %v4006 = vunpack.c.l.b16 %v3957
        %v4007 = vunpack.c.l.b16 %v3958
        %v4008 = vunpack.c.l.b16 %v3959
        %v4009 = vunpack.c.l.b16 %v3960
        %v4010 = vunpack.c.l.b16 %v3961
        %v4011 = vunpack.c.l.b16 %v3962
        %v4012 = vpack.c.b16 %v3997, %v3996
        %v4013 = vpack.c.b16 %v3999, %v3998
        %v4014 = vpack.c.b16 %v4001, %v4000
        %v4015 = vpack.c.b16 %v4003, %v4002
        %v4016 = vpack.c.b16 %v4005, %v4004
        %v4017 = vpack.c.b16 %v4007, %v4006
        %v4018 = vpack.c.b16 %v4009, %v4008
        %v4019 = vpack.c.b16 %v4011, %v4010
        %v4044 = vunpack.c.l.b16 %v3964
        %v4045 = vunpack.c.l.b16 %v3965
        %v4046 = vunpack.c.l.b16 %v3966
        %v4047 = vunpack.c.l.b16 %v3967
        %v4048 = vunpack.c.l.b16 %v3968
        %v4049 = vunpack.c.l.b16 %v3969
        %v4050 = vunpack.c.l.b16 %v3970
        %v4051 = vunpack.c.l.b16 %v3971
        %v4052 = vunpack.c.l.b16 %v3972
        %v4053 = vunpack.c.l.b16 %v3973
        %v4054 = vunpack.c.l.b16 %v3974
        %v4055 = vunpack.c.l.b16 %v3975
        %v4056 = vunpack.c.l.b16 %v3976
        %v4057 = vunpack.c.l.b16 %v3977
        %v4058 = vunpack.c.l.b16 %v3978
        %v4059 = vunpack.c.l.b16 %v3979
        %v4060 = vpack.c.b16 %v4045, %v4044
        %v4061 = vpack.c.b16 %v4047, %v4046
        %v4062 = vpack.c.b16 %v4049, %v4048
        %v4063 = vpack.c.b16 %v4051, %v4050
        %v4064 = vpack.c.b16 %v4053, %v4052
        %v4065 = vpack.c.b16 %v4055, %v4054
        %v4066 = vpack.c.b16 %v4057, %v4056
        %v4067 = vpack.c.b16 %v4059, %v4058
        %4076 = vmatprep.subr.bf16.mxu0 0
        %4077 = vmatpush1.bf16.msra.mxu0 %v4067
        %4078 = vmatprep.subr.bf16.mxu0 0
        %4079 = vmatpush1.bf16.msra.mxu0 %v4066
        %4080 = vmatprep.subr.bf16.mxu0 0
        %4081 = vmatpush1.bf16.msra.mxu0 %v4065
        %4082 = vmatprep.subr.bf16.mxu0 0
        %4083 = vmatpush1.bf16.msra.mxu0 %v4064
        %4084 = vmatprep.subr.bf16.mxu0 0
        %4085 = vmatpush1.bf16.msra.mxu0 %v4063
        %4086 = vmatprep.subr.bf16.mxu0 0
        %4087 = vmatpush1.bf16.msra.mxu0 %v4062
        %4088 = vmatprep.subr.bf16.mxu0 0
        %4089 = vmatpush1.bf16.msra.mxu0 %v4061
        %4090 = vmatprep.subr.bf16.mxu0 0
        %4091 = vmatpush1.bf16.msra.mxu0 %v4060
        %4092 = vmatprep.subr.bf16.mxu0 0
        %4093 = vmatpush2.bf16.msra.mxu0 0
        %4094 = vmatprep.subr.bf16.mxu0 0
        %4095 = vmatpush2.bf16.msra.mxu0 0
        %4096 = vmatprep.subr.bf16.mxu0 0
        %4097 = vmatpush2.bf16.msra.mxu0 0
        %4098 = vmatprep.subr.bf16.mxu0 0
        %4099 = vmatpush2.bf16.msra.mxu0 0
        %4100 = vmatprep.subr.bf16.mxu0 0
        %4101 = vmatpush2.bf16.msra.mxu0 0
        %4102 = vmatprep.subr.bf16.mxu0 0
        %4103 = vmatpush2.bf16.msra.mxu0 0
        %4104 = vmatprep.subr.bf16.mxu0 0
        %4105 = vmatpush2.bf16.msra.mxu0 0
        %4106 = vmatprep.subr.bf16.mxu0 0
        %4107 = vmatpush2.bf16.msra.mxu0 0
        %4108 = vmatprep.mubr.bf16.mxu0 0
        %4109 = vmatmul.mubr.bf16.gmra.mxu0 %v4012
        %v4110 = vpop.f32.mrf.mxu0
        %v4111 = vadd.f32 0.0, %v4110
        %v4112 = vpop.f32.mrf.mxu0
        %v4113 = vpop.f32.mrf.mxu0
        %v4114 = vadd.f32 0.0, %v4113
        %v4115 = vpop.f32.mrf.mxu0
        %4116 = vmatprep.mubr.bf16.mxu0 0
        %4117 = vmatmul.mubr.bf16.gmra.mxu0 %v4013
        %v4118 = vpop.f32.mrf.mxu0
        %v4119 = vadd.f32 0.0, %v4118
        %v4120 = vpop.f32.mrf.mxu0
        %v4121 = vpop.f32.mrf.mxu0
        %v4122 = vadd.f32 0.0, %v4121
        %v4123 = vpop.f32.mrf.mxu0
        %4124 = vmatprep.mubr.bf16.mxu0 0
        %4125 = vmatmul.mubr.bf16.gmra.mxu0 %v4014
        %v4126 = vpop.f32.mrf.mxu0
        %v4127 = vadd.f32 0.0, %v4126
        %v4128 = vpop.f32.mrf.mxu0
        %v4129 = vpop.f32.mrf.mxu0
        %v4130 = vadd.f32 0.0, %v4129
        %v4131 = vpop.f32.mrf.mxu0
        %4132 = vmatprep.mubr.bf16.mxu0 0
        %4133 = vmatmul.mubr.bf16.gmra.mxu0 %v4015
        %v4134 = vpop.f32.mrf.mxu0
        %v4135 = vadd.f32 0.0, %v4134
        %v4136 = vpop.f32.mrf.mxu0
        %v4137 = vpop.f32.mrf.mxu0
        %v4138 = vadd.f32 0.0, %v4137
        %v4139 = vpop.f32.mrf.mxu0
        %4140 = vmatprep.mubr.bf16.mxu0 0
        %4141 = vmatmul.mubr.bf16.gmra.mxu0 %v4016
        %v4142 = vpop.f32.mrf.mxu0
        %v4143 = vadd.f32 0.0, %v4142
        %v4144 = vpop.f32.mrf.mxu0
        %v4145 = vpop.f32.mrf.mxu0
        %v4146 = vadd.f32 0.0, %v4145
        %v4147 = vpop.f32.mrf.mxu0
        %4148 = vmatprep.mubr.bf16.mxu0 0
        %4149 = vmatmul.mubr.bf16.gmra.mxu0 %v4017
        %v4150 = vpop.f32.mrf.mxu0
        %v4151 = vadd.f32 0.0, %v4150
        %v4152 = vpop.f32.mrf.mxu0
        %v4153 = vpop.f32.mrf.mxu0
        %v4154 = vadd.f32 0.0, %v4153
        %v4155 = vpop.f32.mrf.mxu0
        %4156 = vmatprep.mubr.bf16.mxu0 0
        %4157 = vmatmul.mubr.bf16.gmra.mxu0 %v4018
        %v4158 = vpop.f32.mrf.mxu0
        %v4159 = vadd.f32 0.0, %v4158
        %v4160 = vpop.f32.mrf.mxu0
        %v4161 = vpop.f32.mrf.mxu0
        %v4162 = vadd.f32 0.0, %v4161
        %v4163 = vpop.f32.mrf.mxu0
        %4164 = vmatprep.mubr.bf16.mxu0 0
        %4165 = vmatmul.mubr.bf16.gmra.mxu0 %v4019
        %v4166 = vpop.f32.mrf.mxu0
        %v4167 = vadd.f32 0.0, %v4166
        %v4168 = vpop.f32.mrf.mxu0
        %v4169 = vpop.f32.mrf.mxu0
        %v4170 = vadd.f32 0.0, %v4169
        %v4171 = vpop.f32.mrf.mxu0
        %4172 = vdwg.mxu0
        %v4173 = vadd.f32 %v3931, %v4111
        %v4174 = vadd.f32 %v3932, %v4114
        %v4175 = vadd.f32 %v3933, %v4119
        %v4176 = vadd.f32 %v3934, %v4122
        %v4177 = vadd.f32 %v3935, %v4127
        %v4178 = vadd.f32 %v3936, %v4130
        %v4179 = vadd.f32 %v3937, %v4135
        %v4180 = vadd.f32 %v3938, %v4138
        %v4181 = vadd.f32 %v3939, %v4143
        %v4182 = vadd.f32 %v3940, %v4146
        %v4183 = vadd.f32 %v3941, %v4151
        %v4184 = vadd.f32 %v3942, %v4154
        %v4185 = vadd.f32 %v3943, %v4159
        %v4186 = vadd.f32 %v3944, %v4162
        %v4187 = vadd.f32 %v3945, %v4167
        %v4188 = vadd.f32 %v3946, %v4170
        %v4189 = vld [vmem:[%s7] sm:$0x1]
        %v4191 = vlaneseq
        %v4192 = vshrl.u32 %v4191, 7
        %v4193 = vsub.s32 0, %v4192
        %v4194 = vrot.slane %v4189, %v4193
        %v4196 = vmul.f32 %v4173, %v4194
        %v4197 = vmul.f32 %v4174, %v4194
        %v4198 = vmul.f32 %v4175, %v4194
        %v4199 = vmul.f32 %v4176, %v4194
        %v4200 = vmul.f32 %v4177, %v4194
        %v4201 = vmul.f32 %v4178, %v4194
        %v4202 = vmul.f32 %v4179, %v4194
        %v4203 = vmul.f32 %v4180, %v4194
        %v4204 = vmul.f32 %v4181, %v4194
        %v4205 = vmul.f32 %v4182, %v4194
        %v4206 = vmul.f32 %v4183, %v4194
        %v4207 = vmul.f32 %v4184, %v4194
        %v4208 = vmul.f32 %v4185, %v4194
        %v4209 = vmul.f32 %v4186, %v4194
        %v4210 = vmul.f32 %v4187, %v4194
        %v4211 = vmul.f32 %v4188, %v4194
        %v4212 = vld [vmem:[%s8] sm:$0x1]
        %v4214 = vlaneseq
        %v4215 = vshrl.u32 %v4214, 7
        %v4216 = vsub.s32 0, %v4215
        %v4217 = vrot.slane %v4212, %v4216
        %v4219 = vadd.f32 %v4196, %v4217
        %v4220 = vadd.f32 %v4197, %v4217
        %v4221 = vadd.f32 %v4198, %v4217
        %v4222 = vadd.f32 %v4199, %v4217
        %v4223 = vadd.f32 %v4200, %v4217
        %v4224 = vadd.f32 %v4201, %v4217
        %v4225 = vadd.f32 %v4202, %v4217
        %v4226 = vadd.f32 %v4203, %v4217
        %v4227 = vadd.f32 %v4204, %v4217
        %v4228 = vadd.f32 %v4205, %v4217
        %v4229 = vadd.f32 %v4206, %v4217
        %v4230 = vadd.f32 %v4207, %v4217
        %v4231 = vadd.f32 %v4208, %v4217
        %v4232 = vadd.f32 %v4209, %v4217
        %v4233 = vadd.f32 %v4210, %v4217
        %v4234 = vadd.f32 %v4211, %v4217
        %v4235 = vmax.f32 %v4219, 0.0
        %v4236 = vmax.f32 %v4220, 0.0
        %v4237 = vmax.f32 %v4221, 0.0
        %v4238 = vmax.f32 %v4222, 0.0
        %v4239 = vmax.f32 %v4223, 0.0
        %v4240 = vmax.f32 %v4224, 0.0
        %v4241 = vmax.f32 %v4225, 0.0
        %v4242 = vmax.f32 %v4226, 0.0
        %v4243 = vmax.f32 %v4227, 0.0
        %v4244 = vmax.f32 %v4228, 0.0
        %v4245 = vmax.f32 %v4229, 0.0
        %v4246 = vmax.f32 %v4230, 0.0
        %v4247 = vmax.f32 %v4231, 0.0
        %v4248 = vmax.f32 %v4232, 0.0
        %v4249 = vmax.f32 %v4233, 0.0
        %v4250 = vmax.f32 %v4234, 0.0
        %v4251 = vpack.c.bf16 %v4236, %v4235
        %v4252 = vpack.c.bf16 %v4238, %v4237
        %v4253 = vpack.c.bf16 %v4240, %v4239
        %v4254 = vpack.c.bf16 %v4242, %v4241
        %v4255 = vpack.c.bf16 %v4244, %v4243
        %v4256 = vpack.c.bf16 %v4246, %v4245
        %v4257 = vpack.c.bf16 %v4248, %v4247
        %v4258 = vpack.c.bf16 %v4250, %v4249
        %v4259 = vld [vmem:[#allocation9] sm:$0xf]
        %v4260 = vld [vmem:[#allocation9 + $0x4] sm:$0xf]
        %v4261 = vld [vmem:[#allocation9 + $0x8] sm:$0xf]
        %v4262 = vld [vmem:[#allocation9 + $0xc] sm:$0xf]
        %v4263 = vld [vmem:[#allocation9 + $0x10] sm:$0xf]
        %v4264 = vld [vmem:[#allocation9 + $0x14] sm:$0xf]
        %v4265 = vld [vmem:[#allocation9 + $0x18] sm:$0xf]
        %v4266 = vld [vmem:[#allocation9 + $0x1c] sm:$0xf]
        %v4267 = vld [vmem:[#allocation9 + $0x20] sm:$0xf]
        %v4268 = vld [vmem:[#allocation9 + $0x24] sm:$0xf]
        %v4269 = vld [vmem:[#allocation9 + $0x28] sm:$0xf]
        %v4270 = vld [vmem:[#allocation9 + $0x2c] sm:$0xf]
        %v4271 = vld [vmem:[#allocation9 + $0x30] sm:$0xf]
        %v4272 = vld [vmem:[#allocation9 + $0x34] sm:$0xf]
        %v4273 = vld [vmem:[#allocation9 + $0x38] sm:$0xf]
        %v4274 = vld [vmem:[#allocation9 + $0x3c] sm:$0xf]
        %v4291 = vunpack.c.l.b16 %v4259
        %v4292 = vunpack.c.l.b16 %v4260
        %v4293 = vunpack.c.l.b16 %v4261
        %v4294 = vunpack.c.l.b16 %v4262
        %v4295 = vunpack.c.l.b16 %v4263
        %v4296 = vunpack.c.l.b16 %v4264
        %v4297 = vunpack.c.l.b16 %v4265
        %v4298 = vunpack.c.l.b16 %v4266
        %v4299 = vunpack.c.l.b16 %v4267
        %v4300 = vunpack.c.l.b16 %v4268
        %v4301 = vunpack.c.l.b16 %v4269
        %v4302 = vunpack.c.l.b16 %v4270
        %v4303 = vunpack.c.l.b16 %v4271
        %v4304 = vunpack.c.l.b16 %v4272
        %v4305 = vunpack.c.l.b16 %v4273
        %v4306 = vunpack.c.l.b16 %v4274
        %v4307 = vpack.c.b16 %v4292, %v4291
        %v4308 = vpack.c.b16 %v4294, %v4293
        %v4309 = vpack.c.b16 %v4296, %v4295
        %v4310 = vpack.c.b16 %v4298, %v4297
        %v4311 = vpack.c.b16 %v4300, %v4299
        %v4312 = vpack.c.b16 %v4302, %v4301
        %v4313 = vpack.c.b16 %v4304, %v4303
        %v4314 = vpack.c.b16 %v4306, %v4305
        %4323 = vmatprep.subr.bf16.mxu0 0
        %4324 = vmatpush1.bf16.msra.mxu0 %v4314
        %4325 = vmatprep.subr.bf16.mxu0 0
        %4326 = vmatpush1.bf16.msra.mxu0 %v4313
        %4327 = vmatprep.subr.bf16.mxu0 0
        %4328 = vmatpush1.bf16.msra.mxu0 %v4312
        %4329 = vmatprep.subr.bf16.mxu0 0
        %4330 = vmatpush1.bf16.msra.mxu0 %v4311
        %4331 = vmatprep.subr.bf16.mxu0 0
        %4332 = vmatpush1.bf16.msra.mxu0 %v4310
        %4333 = vmatprep.subr.bf16.mxu0 0
        %4334 = vmatpush1.bf16.msra.mxu0 %v4309
        %4335 = vmatprep.subr.bf16.mxu0 0
        %4336 = vmatpush1.bf16.msra.mxu0 %v4308
        %4337 = vmatprep.subr.bf16.mxu0 0
        %4338 = vmatpush1.bf16.msra.mxu0 %v4307
        %4339 = vmatprep.subr.bf16.mxu0 0
        %4340 = vmatpush2.bf16.msra.mxu0 0
        %4341 = vmatprep.subr.bf16.mxu0 0
        %4342 = vmatpush2.bf16.msra.mxu0 0
        %4343 = vmatprep.subr.bf16.mxu0 0
        %4344 = vmatpush2.bf16.msra.mxu0 0
        %4345 = vmatprep.subr.bf16.mxu0 0
        %4346 = vmatpush2.bf16.msra.mxu0 0
        %4347 = vmatprep.subr.bf16.mxu0 0
        %4348 = vmatpush2.bf16.msra.mxu0 0
        %4349 = vmatprep.subr.bf16.mxu0 0
        %4350 = vmatpush2.bf16.msra.mxu0 0
        %4351 = vmatprep.subr.bf16.mxu0 0
        %4352 = vmatpush2.bf16.msra.mxu0 0
        %4353 = vmatprep.subr.bf16.mxu0 0
        %4354 = vmatpush2.bf16.msra.mxu0 0
        %4355 = vmatprep.mubr.bf16.mxu0 0
        %4356 = vmatmul.mubr.bf16.gmra.mxu0 %v4251
        %v4357 = vpop.f32.mrf.mxu0
        %v4358 = vadd.f32 0.0, %v4357
        %v4359 = vpop.f32.mrf.mxu0
        %v4360 = vpop.f32.mrf.mxu0
        %v4361 = vadd.f32 0.0, %v4360
        %v4362 = vpop.f32.mrf.mxu0
        %4363 = vmatprep.mubr.bf16.mxu0 0
        %4364 = vmatmul.mubr.bf16.gmra.mxu0 %v4252
        %v4365 = vpop.f32.mrf.mxu0
        %v4366 = vadd.f32 0.0, %v4365
        %v4367 = vpop.f32.mrf.mxu0
        %v4368 = vpop.f32.mrf.mxu0
        %v4369 = vadd.f32 0.0, %v4368
        %v4370 = vpop.f32.mrf.mxu0
        %4371 = vmatprep.mubr.bf16.mxu0 0
        %4372 = vmatmul.mubr.bf16.gmra.mxu0 %v4253
        %v4373 = vpop.f32.mrf.mxu0
        %v4374 = vadd.f32 0.0, %v4373
        %v4375 = vpop.f32.mrf.mxu0
        %v4376 = vpop.f32.mrf.mxu0
        %v4377 = vadd.f32 0.0, %v4376
        %v4378 = vpop.f32.mrf.mxu0
        %4379 = vmatprep.mubr.bf16.mxu0 0
        %4380 = vmatmul.mubr.bf16.gmra.mxu0 %v4254
        %v4381 = vpop.f32.mrf.mxu0
        %v4382 = vadd.f32 0.0, %v4381
        %v4383 = vpop.f32.mrf.mxu0
        %v4384 = vpop.f32.mrf.mxu0
        %v4385 = vadd.f32 0.0, %v4384
        %v4386 = vpop.f32.mrf.mxu0
        %4387 = vmatprep.mubr.bf16.mxu0 0
        %4388 = vmatmul.mubr.bf16.gmra.mxu0 %v4255
        %v4389 = vpop.f32.mrf.mxu0
        %v4390 = vadd.f32 0.0, %v4389
        %v4391 = vpop.f32.mrf.mxu0
        %v4392 = vpop.f32.mrf.mxu0
        %v4393 = vadd.f32 0.0, %v4392
        %v4394 = vpop.f32.mrf.mxu0
        %4395 = vmatprep.mubr.bf16.mxu0 0
        %4396 = vmatmul.mubr.bf16.gmra.mxu0 %v4256
        %v4397 = vpop.f32.mrf.mxu0
        %v4398 = vadd.f32 0.0, %v4397
        %v4399 = vpop.f32.mrf.mxu0
        %v4400 = vpop.f32.mrf.mxu0
        %v4401 = vadd.f32 0.0, %v4400
        %v4402 = vpop.f32.mrf.mxu0
        %4403 = vmatprep.mubr.bf16.mxu0 0
        %4404 = vmatmul.mubr.bf16.gmra.mxu0 %v4257
        %v4405 = vpop.f32.mrf.mxu0
        %v4406 = vadd.f32 0.0, %v4405
        %v4407 = vpop.f32.mrf.mxu0
        %v4408 = vpop.f32.mrf.mxu0
        %v4409 = vadd.f32 0.0, %v4408
        %v4410 = vpop.f32.mrf.mxu0
        %4411 = vmatprep.mubr.bf16.mxu0 0
        %4412 = vmatmul.mubr.bf16.gmra.mxu0 %v4258
        %v4413 = vpop.f32.mrf.mxu0
        %v4414 = vadd.f32 0.0, %v4413
        %v4415 = vpop.f32.mrf.mxu0
        %v4416 = vpop.f32.mrf.mxu0
        %v4417 = vadd.f32 0.0, %v4416
        %v4418 = vpop.f32.mrf.mxu0
        %4419 = vdwg.mxu0
        %v4420 = vld [vmem:[%s9] sm:$0x1]
        %v4422 = vlaneseq
        %v4423 = vshrl.u32 %v4422, 7
        %v4424 = vsub.s32 0, %v4423
        %v4425 = vrot.slane %v4420, %v4424
        %v4427 = vmul.f32 %v4358, %v4425
        %v4428 = vmul.f32 %v4361, %v4425
        %v4429 = vmul.f32 %v4366, %v4425
        %v4430 = vmul.f32 %v4369, %v4425
        %v4431 = vmul.f32 %v4374, %v4425
        %v4432 = vmul.f32 %v4377, %v4425
        %v4433 = vmul.f32 %v4382, %v4425
        %v4434 = vmul.f32 %v4385, %v4425
        %v4435 = vmul.f32 %v4390, %v4425
        %v4436 = vmul.f32 %v4393, %v4425
        %v4437 = vmul.f32 %v4398, %v4425
        %v4438 = vmul.f32 %v4401, %v4425
        %v4439 = vmul.f32 %v4406, %v4425
        %v4440 = vmul.f32 %v4409, %v4425
        %v4441 = vmul.f32 %v4414, %v4425
        %v4442 = vmul.f32 %v4417, %v4425
        %v4443 = vld [vmem:[%s10] sm:$0x1]
        %v4445 = vlaneseq
        %v4446 = vshrl.u32 %v4445, 7
        %v4447 = vsub.s32 0, %v4446
        %v4448 = vrot.slane %v4443, %v4447
        %v4450 = vadd.f32 %v4427, %v4448
        %v4451 = vadd.f32 %v4428, %v4448
        %v4452 = vadd.f32 %v4429, %v4448
        %v4453 = vadd.f32 %v4430, %v4448
        %v4454 = vadd.f32 %v4431, %v4448
        %v4455 = vadd.f32 %v4432, %v4448
        %v4456 = vadd.f32 %v4433, %v4448
        %v4457 = vadd.f32 %v4434, %v4448
        %v4458 = vadd.f32 %v4435, %v4448
        %v4459 = vadd.f32 %v4436, %v4448
        %v4460 = vadd.f32 %v4437, %v4448
        %v4461 = vadd.f32 %v4438, %v4448
        %v4462 = vadd.f32 %v4439, %v4448
        %v4463 = vadd.f32 %v4440, %v4448
        %v4464 = vadd.f32 %v4441, %v4448
        %v4465 = vadd.f32 %v4442, %v4448
        %v4466 = vld [vmem:[%s534] sm:$0xf]
        %v4467 = vld [vmem:[%s534 + $0x4] sm:$0xf]
        %v4468 = vld [vmem:[%s534 + $0x8] sm:$0xf]
        %v4469 = vld [vmem:[%s534 + $0xc] sm:$0xf]
        %v4470 = vld [vmem:[%s534 + $0x10] sm:$0xf]
        %v4471 = vld [vmem:[%s534 + $0x14] sm:$0xf]
        %v4472 = vld [vmem:[%s534 + $0x18] sm:$0xf]
        %v4473 = vld [vmem:[%s534 + $0x1c] sm:$0xf]
        %v4474 = vld [vmem:[%s534 + $0x20] sm:$0xf]
        %v4475 = vld [vmem:[%s534 + $0x24] sm:$0xf]
        %v4476 = vld [vmem:[%s534 + $0x28] sm:$0xf]
        %v4477 = vld [vmem:[%s534 + $0x2c] sm:$0xf]
        %v4478 = vld [vmem:[%s534 + $0x30] sm:$0xf]
        %v4479 = vld [vmem:[%s534 + $0x34] sm:$0xf]
        %v4480 = vld [vmem:[%s534 + $0x38] sm:$0xf]
        %v4481 = vld [vmem:[%s534 + $0x3c] sm:$0xf]
        %v4482 = vunpack.c.l.bf16 %v4466
        %v4483 = vunpack.c.l.bf16 %v4467
        %v4484 = vunpack.c.l.bf16 %v4468
        %v4485 = vunpack.c.l.bf16 %v4469
        %v4486 = vunpack.c.l.bf16 %v4470
        %v4487 = vunpack.c.l.bf16 %v4471
        %v4488 = vunpack.c.l.bf16 %v4472
        %v4489 = vunpack.c.l.bf16 %v4473
        %v4490 = vunpack.c.l.bf16 %v4474
        %v4491 = vunpack.c.l.bf16 %v4475
        %v4492 = vunpack.c.l.bf16 %v4476
        %v4493 = vunpack.c.l.bf16 %v4477
        %v4494 = vunpack.c.l.bf16 %v4478
        %v4495 = vunpack.c.l.bf16 %v4479
        %v4496 = vunpack.c.l.bf16 %v4480
        %v4497 = vunpack.c.l.bf16 %v4481
        %v4498 = vadd.f32 %v4450, %v4482
        %v4499 = vadd.f32 %v4451, %v4483
        %v4500 = vadd.f32 %v4452, %v4484
        %v4501 = vadd.f32 %v4453, %v4485
        %v4502 = vadd.f32 %v4454, %v4486
        %v4503 = vadd.f32 %v4455, %v4487
        %v4504 = vadd.f32 %v4456, %v4488
        %v4505 = vadd.f32 %v4457, %v4489
        %v4506 = vadd.f32 %v4458, %v4490
        %v4507 = vadd.f32 %v4459, %v4491
        %v4508 = vadd.f32 %v4460, %v4492
        %v4509 = vadd.f32 %v4461, %v4493
        %v4510 = vadd.f32 %v4462, %v4494
        %v4511 = vadd.f32 %v4463, %v4495
        %v4512 = vadd.f32 %v4464, %v4496
        %v4513 = vadd.f32 %v4465, %v4497
        %v4514 = vmax.f32 %v4498, 0.0
        %v4515 = vmax.f32 %v4499, 0.0
        %v4516 = vmax.f32 %v4500, 0.0
        %v4517 = vmax.f32 %v4501, 0.0
        %v4518 = vmax.f32 %v4502, 0.0
        %v4519 = vmax.f32 %v4503, 0.0
        %v4520 = vmax.f32 %v4504, 0.0
        %v4521 = vmax.f32 %v4505, 0.0
        %v4522 = vmax.f32 %v4506, 0.0
        %v4523 = vmax.f32 %v4507, 0.0
        %v4524 = vmax.f32 %v4508, 0.0
        %v4525 = vmax.f32 %v4509, 0.0
        %v4526 = vmax.f32 %v4510, 0.0
        %v4527 = vmax.f32 %v4511, 0.0
        %v4528 = vmax.f32 %v4512, 0.0
        %v4529 = vmax.f32 %v4513, 0.0
        %v4530 = vpack.c.bf16 %v4515, %v4514
        %v4531 = vpack.c.bf16 %v4517, %v4516
        %v4532 = vpack.c.bf16 %v4519, %v4518
        %v4533 = vpack.c.bf16 %v4521, %v4520
        %v4534 = vpack.c.bf16 %v4523, %v4522
        %v4535 = vpack.c.bf16 %v4525, %v4524
        %v4536 = vpack.c.bf16 %v4527, %v4526
        %v4537 = vpack.c.bf16 %v4529, %v4528
        %v4546 = vunpack.c.l.b16 %v4530
        %v4547 = vunpack.c.h.b16 %v4530
        %v4548 = vunpack.c.l.b16 %v4531
        %v4549 = vunpack.c.h.b16 %v4531
        %v4550 = vunpack.c.l.b16 %v4532
        %v4551 = vunpack.c.h.b16 %v4532
        %v4552 = vunpack.c.l.b16 %v4533
        %v4553 = vunpack.c.h.b16 %v4533
        %v4554 = vunpack.c.l.b16 %v4534
        %v4555 = vunpack.c.h.b16 %v4534
        %v4556 = vunpack.c.l.b16 %v4535
        %v4557 = vunpack.c.h.b16 %v4535
        %v4558 = vunpack.c.l.b16 %v4536
        %v4559 = vunpack.c.h.b16 %v4536
        %v4560 = vunpack.c.l.b16 %v4537
        %v4561 = vunpack.c.h.b16 %v4537
        %v4562 = vpack.c.b16 %v4546, %v4546
        %v4563 = vpack.c.b16 %v4547, %v4547
        %v4564 = vpack.c.b16 %v4548, %v4548
        %v4565 = vpack.c.b16 %v4549, %v4549
        %v4566 = vpack.c.b16 %v4550, %v4550
        %v4567 = vpack.c.b16 %v4551, %v4551
        %v4568 = vpack.c.b16 %v4552, %v4552
        %v4569 = vpack.c.b16 %v4553, %v4553
        %v4570 = vpack.c.b16 %v4554, %v4554
        %v4571 = vpack.c.b16 %v4555, %v4555
        %v4572 = vpack.c.b16 %v4556, %v4556
        %v4573 = vpack.c.b16 %v4557, %v4557
        %v4574 = vpack.c.b16 %v4558, %v4558
        %v4575 = vpack.c.b16 %v4559, %v4559
        %v4576 = vpack.c.b16 %v4560, %v4560
        %v4577 = vpack.c.b16 %v4561, %v4561
        %4594 = vst [vmem:[%s534] sm:$0xf] %v4562
        %4595 = vst [vmem:[%s534 + $0x4] sm:$0xf] %v4563
        %4596 = vst [vmem:[%s534 + $0x8] sm:$0xf] %v4564
        %4597 = vst [vmem:[%s534 + $0xc] sm:$0xf] %v4565
        %4598 = vst [vmem:[%s534 + $0x10] sm:$0xf] %v4566
        %4599 = vst [vmem:[%s534 + $0x14] sm:$0xf] %v4567
        %4600 = vst [vmem:[%s534 + $0x18] sm:$0xf] %v4568
        %4601 = vst [vmem:[%s534 + $0x1c] sm:$0xf] %v4569
        %4602 = vst [vmem:[%s534 + $0x20] sm:$0xf] %v4570
        %4603 = vst [vmem:[%s534 + $0x24] sm:$0xf] %v4571
        %4604 = vst [vmem:[%s534 + $0x28] sm:$0xf] %v4572
        %4605 = vst [vmem:[%s534 + $0x2c] sm:$0xf] %v4573
        %4606 = vst [vmem:[%s534 + $0x30] sm:$0xf] %v4574
        %4607 = vst [vmem:[%s534 + $0x34] sm:$0xf] %v4575
        %4608 = vst [vmem:[%s534 + $0x38] sm:$0xf] %v4576
        %4609 = vst [vmem:[%s534 + $0x3c] sm:$0xf] %v4577
        %s4610 = sand.u32 %s334, 1
        %s4611 = scalar_lea.sflag [#allocation5], %s4610
        %s4612 = sand.u32 %s334, 1
        %s4613 = smul.addr %s4612, 64
        %s4614 = scalar_lea.vmem [#allocation12], %s4613
        // Predicated region
        $region101: #{tpu_custom_call.1} parent=71 // pred_check
          %p4615 = pneg %p344
        $region102: #{tpu_custom_call.1} parent=71 // pred_check_branch
          %4617 = sbr.rel (%p4615) target = $region104
        $region103: #{tpu_custom_call.1} parent=71 // pred_region
          %s4618 = smul.u32 16, %s37
          %s4620 = ssub.s32 1024, 1024
          %4621 = vsyncadd %s4611, %s4620
          %s4622 = smul.addr %s36, 32
          %s4623 = sadd.s32 %s4618, %s4622
          %s4624 = smul.addr %s4623, 64
          %s4625 = scalar_lea.hbm %s13, %s4624
          %s4626 = sshll.u32 %s4614, 4
          %s4627 = int_to_ptr.vmem [resolvable:$true] %s4626
          %4632 = dma.vmem_to_hbm [thread:$0]  %s4627, 1024, %s4625, %s4611, 64, 64, 4
        $region104: #{tpu_custom_call.1} parent=71 // pred_fallthru
          _
      $region72: #{tpu_custom_call.1} parent=5 // pred_fallthru
        _
      %p4633 = scmp.le.s32.totalorder 2, %s27
      // Predicated region
      $region105: #{tpu_custom_call.1} parent=5 // pred_check
        %p4634 = pneg %p4633
      $region106: #{tpu_custom_call.1} parent=5 // pred_check_branch
        %4636 = sbr.rel (%p4634) target = $region108
      $region107: #{tpu_custom_call.1} parent=5 // pred_region
        %s4637 = ssub.s32 %s27, 2
        // Predicated region
        $region109: #{tpu_custom_call.1} parent=107 // pred_check
          %p4638 = pneg %p350
        $region110: #{tpu_custom_call.1} parent=107 // pred_check_branch
          %4640 = sbr.rel (%p4638) target = $region112
        $region111: #{tpu_custom_call.1} parent=107 // pred_region
          %s4641 = sand.u32 %s335, 1
          %s4642 = scalar_lea.sflag [#allocation5], %s4641
          %s4643 = sand.u32 %s335, 1
          %s4644 = smul.addr %s4643, 64
          %s4645 = scalar_lea.vmem [#allocation12], %s4644
          %4646 = dma.done %s4642, 1024
        $region112: #{tpu_custom_call.1} parent=107 // pred_fallthru
          _
      $region108: #{tpu_custom_call.1} parent=5 // pred_fallthru
        _
    $region6: #{tpu_custom_call.1} parent=1 // loop_footer
      %s31 = sadd.s32 1, %s27
    $region7: #{tpu_custom_call.1} parent=1 // loop_footer_branch
      %26 = sbr.rel target = $region3
    $region8: #{tpu_custom_call.1} parent=1 // loop_exit
      _
    %4647 = vsyncpa [#allocation4], 1
    %s4648 = scalar_lea.sflag [#allocation4], 1
    %4649 = vsyncpa %s4648, 1
    %4650 = vsyncpa [#allocation7], 1
    %4651 = vsyncpa [#allocation10], 1
    %4652 = vsyncpa [#allocation5], 1
    %s4653 = scalar_lea.sflag [#allocation5], 1
    %4654 = vsyncpa %s4653, 1

</llo_original>
